<compile_context>
chip_gen: v6e
topology: v6e:2x2x1
jax: 0.10.0
libtpu: 0.0.40
codegen_flags: <defaults>
</compile_context>

<pallas_src>
import functools

import jax
import jax.numpy as jnp
from jax.experimental import pallas as pl
from jax.experimental.pallas import tpu as pltpu

LANE = 128


def _round_up(x, m):
    return ((x + m - 1) // m) * m


# ----------------------------------------------------------------------------
# Fused DigitCaps kernel: one batch *block* (BB elements) per grid step
# ----------------------------------------------------------------------------
def _digitcaps_kernel(x_ref, w_ref, o_ref, u_ref, *, num_routing):
    """
    x_ref: [BB, in_dim, in_caps_p]                  input capsules (lanes = in_caps)
    w_ref: [num_caps, in_dim, dim_caps, in_caps_p]  transformation matrices (resident)
    o_ref: [BB, num_caps*dim_caps]                  output poses, lane-dense slab
    u_ref: VMEM scratch [BB, num_caps, dim_caps, in_caps_p]   (u_hat)
    """
    bb, num_caps, dim_caps, in_caps_p = u_ref.shape
    in_dim = x_ref.shape[1]
    inv_nc = 1.0 / num_caps

    # ---- u_hat[b,n,d,i] = sum_k W[n,k,d,i] * x[b,k,i]  (VPU tap-sum) -------
    # The in_dim (=8) contraction is far too small to feed the MXU; keep it an
    # unrolled elementwise accumulate.  W is sliced from the ref per tap so at
    # most one [num_caps, dim_caps, in_caps_p] slice is live per step.
    x = x_ref[...]                                            # [bb, in_dim, icp]
    acc = w_ref[:, 0, :, :][None] * x[:, 0, :][:, None, None, :]
    for k in range(1, in_dim):
        acc = acc + w_ref[:, k, :, :][None] * x[:, k, :][:, None, None, :]
    u_ref[...] = acc

    # ---- helpers (small [bb, num_caps, *] tensors, all f32) -----------------
    def squash(s):                                            # s: [bb, nc, dc]
        sq = jnp.sum(s * s, axis=-1, keepdims=True)           # [bb, nc, 1]
        # scale * s / (sqrt + eps) folded into one multiply; matches torch squash
        # (and yields 0, not NaN, for the zero rows of a padded batch block).
        return s * (sq / ((1.0 + sq) * (jnp.sqrt(sq) + 1e-8)))

    def softmax_over_caps(logits):                            # [bb, nc, icp]
        # softmax over the output-capsule axis == torch softmax(dim=1)
        m = jnp.max(logits, axis=1, keepdims=True)
        e = jnp.exp(logits - m)
        return e / jnp.sum(e, axis=1, keepdims=True)

    def weighted_sum(c, u):                                   # -> [bb, nc, dc]
        return jnp.sum(c[:, :, None, :] * u, axis=-1)

    def agreement(u, v):                                      # -> [bb, nc, icp]
        return jnp.sum(u * v[:, :, :, None], axis=2)

    # ---- dynamic routing: everything stays in VMEM / vregs ------------------
    # Iteration 0: logits are all zero, so the softmax is uniform (1/num_caps);
    # skip the exp / max / normalize entirely.
    u = acc                                                   # value still in hand
    v = squash(jnp.sum(u, axis=-1) * inv_nc)                  # [bb, nc, dc]

    if num_routing >= 2:
        b_log = agreement(u, v)                               # [bb, nc, icp]
        for _ in range(num_routing - 2):
            u = u_ref[...]            # one load per iteration, reused for s & uv
            c = softmax_over_caps(b_log)
            v = squash(weighted_sum(c, u))
            b_log = b_log + agreement(u, v)
        c = softmax_over_caps(b_log)
        v = squash(weighted_sum(c, u_ref[...]))

    # ---- lane-dense store: one [bb, num_caps*dim_caps] slab -----------------
    for n in range(num_caps):
        o_ref[:, n * dim_caps:(n + 1) * dim_caps] = v[:, n, :].astype(o_ref.dtype)


# ----------------------------------------------------------------------------
# One-time weight relayout (hoisted out of the per-call forward)
# ----------------------------------------------------------------------------
def prepare_digitcaps_weights(W):
    """PyTorch-layout weights [1, num_caps, in_caps, dim_caps, in_dim] -> kernel
    layout [num_caps, in_dim, dim_caps, in_caps_padded] (f32, in_caps on lanes).

    In a real model this runs once at parameter-load time, so the per-step
    forward never pays the transpose / pad / extra HBM round trip of W."""
    _, num_caps, in_caps, dim_caps, in_dim = W.shape
    icp = _round_up(in_caps, LANE)
    wt = jnp.transpose(W[0].astype(jnp.float32), (0, 3, 2, 1))  # [n, k, d, i]
    if icp != in_caps:
        # Zero padding is exact: padded capsules give u_hat == 0, so they add
        # nothing to s or to the routing-logit updates.
        wt = jnp.pad(wt, ((0, 0), (0, 0), (0, 0), (0, icp - in_caps)))
    return wt


# ----------------------------------------------------------------------------
# Forward wrapper: activation relayout + batch blocking + pallas_call
# ----------------------------------------------------------------------------
def digitcaps_forward(w_kernel, x, num_routing, block_batch=8):
    """w_kernel: output of prepare_digitcaps_weights; x: [B, in_caps, in_dim].
    Returns v: [B, num_caps, dim_caps] (float32)."""
    num_caps, in_dim, dim_caps, icp = w_kernel.shape
    B, in_caps, _ = x.shape

    # Lane-dense relayout of the activations (tiny next to W / u_hat).
    xt = jnp.transpose(x.astype(jnp.float32), (0, 2, 1))        # [B, k, i]
    if icp != in_caps:
        xt = jnp.pad(xt, ((0, 0), (0, 0), (0, icp - in_caps)))

    # Batch blocking: BB elements per grid step.  BB is a multiple of 8 (so the
    # lane-dense output block satisfies the sublane rule) or the full batch;
    # keep >= 2 grid steps when possible so both v7x TensorCores get work.
    bb = block_batch if B >= 2 * block_batch else B
    n_blocks = pl.cdiv(B, bb)
    b_pad = n_blocks * bb
    if b_pad != B:
        xt = jnp.pad(xt, ((0, b_pad - B), (0, 0), (0, 0)))      # zero rows: benign

    out_lanes = num_caps * dim_caps

    # VMEM budget: double-buffered pipeline blocks + u_hat scratch + headroom
    # for Mosaic temporaries (routing intermediates are ~u_hat sized).
    x_bytes = bb * in_dim * icp * 4
    w_bytes = num_caps * in_dim * dim_caps * icp * 4
    o_bytes = bb * out_lanes * 4
    u_bytes = bb * num_caps * dim_caps * icp * 4
    est = 2 * (x_bytes + w_bytes + o_bytes) + 4 * u_bytes
    vmem_limit = int(min(max(est + (4 << 20), 32 << 20), 64 << 20))

    out_flat = pl.pallas_call(
        functools.partial(_digitcaps_kernel, num_routing=num_routing),
        out_shape=jax.ShapeDtypeStruct((b_pad, out_lanes), jnp.float32),
        grid=(n_blocks,),
        in_specs=[
            pl.BlockSpec((bb, in_dim, icp), lambda i: (i, 0, 0)),
            # Weights: constant index map -> fetched once, resident across steps.
            pl.BlockSpec((num_caps, in_dim, dim_caps, icp), lambda i: (0, 0, 0, 0)),
        ],
        out_specs=pl.BlockSpec((bb, out_lanes), lambda i: (i, 0)),
        scratch_shapes=[pltpu.VMEM((bb, num_caps, dim_caps, icp), jnp.float32)],
        compiler_params=pltpu.CompilerParams(
            dimension_semantics=("parallel",),
            vmem_limit_bytes=vmem_limit),
    )(xt, w_kernel)

    return out_flat[:B].reshape(B, num_caps, dim_caps)


# ----------------------------------------------------------------------------
# Pure-JAX reference (mirrors the PyTorch module exactly)
# ----------------------------------------------------------------------------
def _squash_ref(s, axis=-1):
    sq = jnp.sum(s * s, axis=axis, keepdims=True)
    return (sq / (1.0 + sq)) * s / (jnp.sqrt(sq) + 1e-8)


def digitcaps_reference(W, x, num_routing):
    u_hat = jnp.einsum('nidk,bik->bnid', W[0], x)               # [B, n, i, d]
    b = jnp.zeros(u_hat.shape[:3], jnp.float32)                 # [B, n, i]
    for _ in range(num_routing - 1):
        c = jax.nn.softmax(b, axis=1)
        s = jnp.sum(c[..., None] * u_hat, axis=2)               # [B, n, d]
        v = _squash_ref(s)
        uv = jnp.einsum('bnid,bnd->bni', u_hat, v)
        b = b + uv
    c = jax.nn.softmax(b, axis=1)
    s = jnp.sum(c[..., None] * u_hat, axis=2)
    return _squash_ref(s)


if __name__ == "__main__":
    key = jax.random.PRNGKey(0)
    wkey, xkey = jax.random.split(key)

    # Small capsule-layer shapes consistent with the module.
    B, in_dim, in_caps, num_caps, dim_caps, num_routing = 2, 8, 128, 8, 16, 3

    W = 0.01 * jax.random.normal(
        wkey, (1, num_caps, in_caps, dim_caps, in_dim), jnp.float32)
    x = jax.random.normal(xkey, (B, in_caps, in_dim), jnp.float32)

    # One-time weight relayout (init-time in a real model); the jitted forward
    # then reuses the kernel-layout weights on every call.
    w_kernel = jax.block_until_ready(prepare_digitcaps_weights(W))
    fwd = jax.jit(functools.partial(digitcaps_forward, num_routing=num_routing))
    v = jax.block_until_ready(fwd(w_kernel, x))

    v_ref = jax.block_until_ready(digitcaps_reference(W, x, num_routing))

    assert v.shape == (B, num_caps, dim_caps) and v.dtype == jnp.float32
    assert bool(jnp.all(jnp.isfinite(v)))
    max_err = float(jnp.max(jnp.abs(v - v_ref)))
    assert max_err < 1e-4, f"mismatch vs reference: max abs err {max_err}"
    print("KERNEL_OK")
</pallas_src>

<mosaic_0001>
module attributes {stable_mosaic.version = 11 : i64} {
  func.func @_digitcaps_kernel(%arg0: i32, %arg1: memref<2x8x128xf32, #tpu.memory_space<vmem>>, %arg2: memref<8x8x16x128xf32, #tpu.memory_space<vmem>>, %arg3: memref<2x128xf32, #tpu.memory_space<vmem>>, %arg4: memref<2x8x16x128xf32, #tpu.memory_space<vmem>>) attributes {dimension_semantics = [#tpu.dimension_semantics<parallel>], iteration_bounds = array<i64: 1>, scalar_prefetch = 0 : i64, scratch_operands = 1 : i64, tpu.core_type = #tpu.core_type<tc>, window_params = [{transform_indices = @transform_0, window_bounds = array<i64: 2, 8, 128>}, {pipeline_mode = #tpu.pipeline_mode<synchronous>, transform_indices = @transform_1, window_bounds = array<i64: 8, 8, 16, 128>}, {transform_indices = @transform_2, window_bounds = array<i64: 2, 128>}]} {
    %c0 = arith.constant 0 : index
    %c0_0 = arith.constant 0 : index
    %c0_1 = arith.constant 0 : index
    %0 = vector.load %arg1[%c0, %c0_0, %c0_1] : memref<2x8x128xf32, #tpu.memory_space<vmem>>, vector<2x8x128xf32>
    %c0_2 = arith.constant 0 : index
    %c0_3 = arith.constant 0 : index
    %c0_4 = arith.constant 0 : index
    %c0_5 = arith.constant 0 : index
    %1 = vector.load %arg2[%c0_2, %c0_3, %c0_4, %c0_5] : memref<8x8x16x128xf32, #tpu.memory_space<vmem>>, vector<8x1x16x128xf32>
    %2 = vector.shape_cast %1 : vector<8x1x16x128xf32> to vector<8x16x128xf32>
    %3 = vector.shape_cast %2 : vector<8x16x128xf32> to vector<1x8x16x128xf32>
    %4 = vector.extract_strided_slice %0 {offsets = [0, 0, 0], sizes = [2, 1, 128], strides = [1, 1, 1]} : vector<2x8x128xf32> to vector<2x1x128xf32>
    %5 = vector.shape_cast %4 : vector<2x1x128xf32> to vector<2x128xf32>
    %6 = vector.shape_cast %5 : vector<2x128xf32> to vector<2x1x1x128xf32>
    %7 = vector.broadcast %3 : vector<1x8x16x128xf32> to vector<2x8x16x128xf32>
    %8 = vector.broadcast %6 : vector<2x1x1x128xf32> to vector<2x8x16x128xf32>
    %9 = arith.mulf %7, %8 : vector<2x8x16x128xf32>
    %c0_6 = arith.constant 0 : index
    %c1 = arith.constant 1 : index
    %c0_7 = arith.constant 0 : index
    %c0_8 = arith.constant 0 : index
    %10 = vector.load %arg2[%c0_6, %c1, %c0_7, %c0_8] : memref<8x8x16x128xf32, #tpu.memory_space<vmem>>, vector<8x1x16x128xf32>
    %11 = vector.shape_cast %10 : vector<8x1x16x128xf32> to vector<8x16x128xf32>
    %12 = vector.shape_cast %11 : vector<8x16x128xf32> to vector<1x8x16x128xf32>
    %13 = vector.extract_strided_slice %0 {offsets = [0, 1, 0], sizes = [2, 1, 128], strides = [1, 1, 1]} : vector<2x8x128xf32> to vector<2x1x128xf32>
    %14 = vector.shape_cast %13 : vector<2x1x128xf32> to vector<2x128xf32>
    %15 = vector.shape_cast %14 : vector<2x128xf32> to vector<2x1x1x128xf32>
    %16 = vector.broadcast %12 : vector<1x8x16x128xf32> to vector<2x8x16x128xf32>
    %17 = vector.broadcast %15 : vector<2x1x1x128xf32> to vector<2x8x16x128xf32>
    %18 = arith.mulf %16, %17 : vector<2x8x16x128xf32>
    %19 = arith.addf %9, %18 : vector<2x8x16x128xf32>
    %c0_9 = arith.constant 0 : index
    %c2 = arith.constant 2 : index
    %c0_10 = arith.constant 0 : index
    %c0_11 = arith.constant 0 : index
    %20 = vector.load %arg2[%c0_9, %c2, %c0_10, %c0_11] : memref<8x8x16x128xf32, #tpu.memory_space<vmem>>, vector<8x1x16x128xf32>
    %21 = vector.shape_cast %20 : vector<8x1x16x128xf32> to vector<8x16x128xf32>
    %22 = vector.shape_cast %21 : vector<8x16x128xf32> to vector<1x8x16x128xf32>
    %23 = vector.extract_strided_slice %0 {offsets = [0, 2, 0], sizes = [2, 1, 128], strides = [1, 1, 1]} : vector<2x8x128xf32> to vector<2x1x128xf32>
    %24 = vector.shape_cast %23 : vector<2x1x128xf32> to vector<2x128xf32>
    %25 = vector.shape_cast %24 : vector<2x128xf32> to vector<2x1x1x128xf32>
    %26 = vector.broadcast %22 : vector<1x8x16x128xf32> to vector<2x8x16x128xf32>
    %27 = vector.broadcast %25 : vector<2x1x1x128xf32> to vector<2x8x16x128xf32>
    %28 = arith.mulf %26, %27 : vector<2x8x16x128xf32>
    %29 = arith.addf %19, %28 : vector<2x8x16x128xf32>
    %c0_12 = arith.constant 0 : index
    %c3 = arith.constant 3 : index
    %c0_13 = arith.constant 0 : index
    %c0_14 = arith.constant 0 : index
    %30 = vector.load %arg2[%c0_12, %c3, %c0_13, %c0_14] : memref<8x8x16x128xf32, #tpu.memory_space<vmem>>, vector<8x1x16x128xf32>
    %31 = vector.shape_cast %30 : vector<8x1x16x128xf32> to vector<8x16x128xf32>
    %32 = vector.shape_cast %31 : vector<8x16x128xf32> to vector<1x8x16x128xf32>
    %33 = vector.extract_strided_slice %0 {offsets = [0, 3, 0], sizes = [2, 1, 128], strides = [1, 1, 1]} : vector<2x8x128xf32> to vector<2x1x128xf32>
    %34 = vector.shape_cast %33 : vector<2x1x128xf32> to vector<2x128xf32>
    %35 = vector.shape_cast %34 : vector<2x128xf32> to vector<2x1x1x128xf32>
    %36 = vector.broadcast %32 : vector<1x8x16x128xf32> to vector<2x8x16x128xf32>
    %37 = vector.broadcast %35 : vector<2x1x1x128xf32> to vector<2x8x16x128xf32>
    %38 = arith.mulf %36, %37 : vector<2x8x16x128xf32>
    %39 = arith.addf %29, %38 : vector<2x8x16x128xf32>
    %c0_15 = arith.constant 0 : index
    %c4 = arith.constant 4 : index
    %c0_16 = arith.constant 0 : index
    %c0_17 = arith.constant 0 : index
    %40 = vector.load %arg2[%c0_15, %c4, %c0_16, %c0_17] : memref<8x8x16x128xf32, #tpu.memory_space<vmem>>, vector<8x1x16x128xf32>
    %41 = vector.shape_cast %40 : vector<8x1x16x128xf32> to vector<8x16x128xf32>
    %42 = vector.shape_cast %41 : vector<8x16x128xf32> to vector<1x8x16x128xf32>
    %43 = vector.extract_strided_slice %0 {offsets = [0, 4, 0], sizes = [2, 1, 128], strides = [1, 1, 1]} : vector<2x8x128xf32> to vector<2x1x128xf32>
    %44 = vector.shape_cast %43 : vector<2x1x128xf32> to vector<2x128xf32>
    %45 = vector.shape_cast %44 : vector<2x128xf32> to vector<2x1x1x128xf32>
    %46 = vector.broadcast %42 : vector<1x8x16x128xf32> to vector<2x8x16x128xf32>
    %47 = vector.broadcast %45 : vector<2x1x1x128xf32> to vector<2x8x16x128xf32>
    %48 = arith.mulf %46, %47 : vector<2x8x16x128xf32>
    %49 = arith.addf %39, %48 : vector<2x8x16x128xf32>
    %c0_18 = arith.constant 0 : index
    %c5 = arith.constant 5 : index
    %c0_19 = arith.constant 0 : index
    %c0_20 = arith.constant 0 : index
    %50 = vector.load %arg2[%c0_18, %c5, %c0_19, %c0_20] : memref<8x8x16x128xf32, #tpu.memory_space<vmem>>, vector<8x1x16x128xf32>
    %51 = vector.shape_cast %50 : vector<8x1x16x128xf32> to vector<8x16x128xf32>
    %52 = vector.shape_cast %51 : vector<8x16x128xf32> to vector<1x8x16x128xf32>
    %53 = vector.extract_strided_slice %0 {offsets = [0, 5, 0], sizes = [2, 1, 128], strides = [1, 1, 1]} : vector<2x8x128xf32> to vector<2x1x128xf32>
    %54 = vector.shape_cast %53 : vector<2x1x128xf32> to vector<2x128xf32>
    %55 = vector.shape_cast %54 : vector<2x128xf32> to vector<2x1x1x128xf32>
    %56 = vector.broadcast %52 : vector<1x8x16x128xf32> to vector<2x8x16x128xf32>
    %57 = vector.broadcast %55 : vector<2x1x1x128xf32> to vector<2x8x16x128xf32>
    %58 = arith.mulf %56, %57 : vector<2x8x16x128xf32>
    %59 = arith.addf %49, %58 : vector<2x8x16x128xf32>
    %c0_21 = arith.constant 0 : index
    %c6 = arith.constant 6 : index
    %c0_22 = arith.constant 0 : index
    %c0_23 = arith.constant 0 : index
    %60 = vector.load %arg2[%c0_21, %c6, %c0_22, %c0_23] : memref<8x8x16x128xf32, #tpu.memory_space<vmem>>, vector<8x1x16x128xf32>
    %61 = vector.shape_cast %60 : vector<8x1x16x128xf32> to vector<8x16x128xf32>
    %62 = vector.shape_cast %61 : vector<8x16x128xf32> to vector<1x8x16x128xf32>
    %63 = vector.extract_strided_slice %0 {offsets = [0, 6, 0], sizes = [2, 1, 128], strides = [1, 1, 1]} : vector<2x8x128xf32> to vector<2x1x128xf32>
    %64 = vector.shape_cast %63 : vector<2x1x128xf32> to vector<2x128xf32>
    %65 = vector.shape_cast %64 : vector<2x128xf32> to vector<2x1x1x128xf32>
    %66 = vector.broadcast %62 : vector<1x8x16x128xf32> to vector<2x8x16x128xf32>
    %67 = vector.broadcast %65 : vector<2x1x1x128xf32> to vector<2x8x16x128xf32>
    %68 = arith.mulf %66, %67 : vector<2x8x16x128xf32>
    %69 = arith.addf %59, %68 : vector<2x8x16x128xf32>
    %c0_24 = arith.constant 0 : index
    %c7 = arith.constant 7 : index
    %c0_25 = arith.constant 0 : index
    %c0_26 = arith.constant 0 : index
    %70 = vector.load %arg2[%c0_24, %c7, %c0_25, %c0_26] : memref<8x8x16x128xf32, #tpu.memory_space<vmem>>, vector<8x1x16x128xf32>
    %71 = vector.shape_cast %70 : vector<8x1x16x128xf32> to vector<8x16x128xf32>
    %72 = vector.shape_cast %71 : vector<8x16x128xf32> to vector<1x8x16x128xf32>
    %73 = vector.extract_strided_slice %0 {offsets = [0, 7, 0], sizes = [2, 1, 128], strides = [1, 1, 1]} : vector<2x8x128xf32> to vector<2x1x128xf32>
    %74 = vector.shape_cast %73 : vector<2x1x128xf32> to vector<2x128xf32>
    %75 = vector.shape_cast %74 : vector<2x128xf32> to vector<2x1x1x128xf32>
    %76 = vector.broadcast %72 : vector<1x8x16x128xf32> to vector<2x8x16x128xf32>
    %77 = vector.broadcast %75 : vector<2x1x1x128xf32> to vector<2x8x16x128xf32>
    %78 = arith.mulf %76, %77 : vector<2x8x16x128xf32>
    %79 = arith.addf %69, %78 : vector<2x8x16x128xf32>
    %c0_27 = arith.constant 0 : index
    %c0_28 = arith.constant 0 : index
    %c0_29 = arith.constant 0 : index
    %c0_30 = arith.constant 0 : index
    %80 = vector.load %arg4[%c0_27, %c0_28, %c0_29, %c0_30] : memref<2x8x16x128xf32, #tpu.memory_space<vmem>>, vector<2x8x16x128xf32>
    tpu.vector_store %arg4[%c0_27, %c0_28, %c0_29, %c0_30], %79 {strides = array<i32>} : memref<2x8x16x128xf32, #tpu.memory_space<vmem>>, vector<2x8x16x128xf32>,
    %cst = arith.constant dense<0.000000e+00> : vector<2x8x16xf32>
    %81 = vector.multi_reduction <add>, %79, %cst [3] : vector<2x8x16x128xf32> to vector<2x8x16xf32>
    %cst_31 = arith.constant 1.250000e-01 : f32
    %82 = vector.broadcast %cst_31 : f32 to vector<2x8x16xf32>
    %83 = arith.mulf %81, %82 : vector<2x8x16xf32>
    %84 = arith.mulf %83, %83 : vector<2x8x16xf32>
    %cst_32 = arith.constant dense<0.000000e+00> : vector<2x8xf32>
    %85 = vector.multi_reduction <add>, %84, %cst_32 [2] : vector<2x8x16xf32> to vector<2x8xf32>
    %86 = vector.shape_cast %85 : vector<2x8xf32> to vector<2x8x1xf32>
    %cst_33 = arith.constant 1.000000e+00 : f32
    %87 = vector.broadcast %cst_33 : f32 to vector<2x8x1xf32>
    %88 = arith.addf %87, %86 : vector<2x8x1xf32>
    %89 = math.sqrt %86 : vector<2x8x1xf32>
    %cst_34 = arith.constant 9.99999993E-9 : f32
    %90 = vector.broadcast %cst_34 : f32 to vector<2x8x1xf32>
    %91 = arith.addf %89, %90 : vector<2x8x1xf32>
    %92 = arith.mulf %88, %91 : vector<2x8x1xf32>
    %93 = arith.divf %86, %92 : vector<2x8x1xf32>
    %94 = vector.broadcast %93 : vector<2x8x1xf32> to vector<2x8x16xf32>
    %95 = arith.mulf %83, %94 : vector<2x8x16xf32>
    %96 = vector.shape_cast %95 : vector<2x8x16xf32> to vector<2x8x16x1xf32>
    %97 = vector.broadcast %96 : vector<2x8x16x1xf32> to vector<2x8x16x128xf32>
    %98 = arith.mulf %79, %97 : vector<2x8x16x128xf32>
    %cst_35 = arith.constant dense<0.000000e+00> : vector<2x8x128xf32>
    %99 = vector.multi_reduction <add>, %98, %cst_35 [2] : vector<2x8x16x128xf32> to vector<2x8x128xf32>
    %c0_36 = arith.constant 0 : index
    %c0_37 = arith.constant 0 : index
    %c0_38 = arith.constant 0 : index
    %c0_39 = arith.constant 0 : index
    %100 = vector.load %arg4[%c0_36, %c0_37, %c0_38, %c0_39] : memref<2x8x16x128xf32, #tpu.memory_space<vmem>>, vector<2x8x16x128xf32>
    %cst_40 = arith.constant dense<0xFF800000> : vector<2x128xf32>
    %101 = vector.multi_reduction <maximumf>, %99, %cst_40 [1] : vector<2x8x128xf32> to vector<2x128xf32>
    %102 = vector.shape_cast %101 : vector<2x128xf32> to vector<2x1x128xf32>
    %103 = vector.broadcast %102 : vector<2x1x128xf32> to vector<2x8x128xf32>
    %104 = arith.subf %99, %103 : vector<2x8x128xf32>
    %105 = math.exp %104 : vector<2x8x128xf32>
    %cst_41 = arith.constant dense<0.000000e+00> : vector<2x128xf32>
    %106 = vector.multi_reduction <add>, %105, %cst_41 [1] : vector<2x8x128xf32> to vector<2x128xf32>
    %107 = vector.shape_cast %106 : vector<2x128xf32> to vector<2x1x128xf32>
    %108 = vector.broadcast %107 : vector<2x1x128xf32> to vector<2x8x128xf32>
    %109 = arith.divf %105, %108 : vector<2x8x128xf32>
    %110 = vector.shape_cast %109 : vector<2x8x128xf32> to vector<2x8x1x128xf32>
    %111 = vector.broadcast %110 : vector<2x8x1x128xf32> to vector<2x8x16x128xf32>
    %112 = arith.mulf %111, %100 : vector<2x8x16x128xf32>
    %cst_42 = arith.constant dense<0.000000e+00> : vector<2x8x16xf32>
    %113 = vector.multi_reduction <add>, %112, %cst_42 [3] : vector<2x8x16x128xf32> to vector<2x8x16xf32>
    %114 = arith.mulf %113, %113 : vector<2x8x16xf32>
    %cst_43 = arith.constant dense<0.000000e+00> : vector<2x8xf32>
    %115 = vector.multi_reduction <add>, %114, %cst_43 [2] : vector<2x8x16xf32> to vector<2x8xf32>
    %116 = vector.shape_cast %115 : vector<2x8xf32> to vector<2x8x1xf32>
    %cst_44 = arith.constant 1.000000e+00 : f32
    %117 = vector.broadcast %cst_44 : f32 to vector<2x8x1xf32>
    %118 = arith.addf %117, %116 : vector<2x8x1xf32>
    %119 = math.sqrt %116 : vector<2x8x1xf32>
    %cst_45 = arith.constant 9.99999993E-9 : f32
    %120 = vector.broadcast %cst_45 : f32 to vector<2x8x1xf32>
    %121 = arith.addf %119, %120 : vector<2x8x1xf32>
    %122 = arith.mulf %118, %121 : vector<2x8x1xf32>
    %123 = arith.divf %116, %122 : vector<2x8x1xf32>
    %124 = vector.broadcast %123 : vector<2x8x1xf32> to vector<2x8x16xf32>
    %125 = arith.mulf %113, %124 : vector<2x8x16xf32>
    %126 = vector.shape_cast %125 : vector<2x8x16xf32> to vector<2x8x16x1xf32>
    %127 = vector.broadcast %126 : vector<2x8x16x1xf32> to vector<2x8x16x128xf32>
    %128 = arith.mulf %100, %127 : vector<2x8x16x128xf32>
    %cst_46 = arith.constant dense<0.000000e+00> : vector<2x8x128xf32>
    %129 = vector.multi_reduction <add>, %128, %cst_46 [2] : vector<2x8x16x128xf32> to vector<2x8x128xf32>
    %130 = arith.addf %99, %129 : vector<2x8x128xf32>
    %cst_47 = arith.constant dense<0xFF800000> : vector<2x128xf32>
    %131 = vector.multi_reduction <maximumf>, %130, %cst_47 [1] : vector<2x8x128xf32> to vector<2x128xf32>
    %132 = vector.shape_cast %131 : vector<2x128xf32> to vector<2x1x128xf32>
    %133 = vector.broadcast %132 : vector<2x1x128xf32> to vector<2x8x128xf32>
    %134 = arith.subf %130, %133 : vector<2x8x128xf32>
    %135 = math.exp %134 : vector<2x8x128xf32>
    %cst_48 = arith.constant dense<0.000000e+00> : vector<2x128xf32>
    %136 = vector.multi_reduction <add>, %135, %cst_48 [1] : vector<2x8x128xf32> to vector<2x128xf32>
    %137 = vector.shape_cast %136 : vector<2x128xf32> to vector<2x1x128xf32>
    %138 = vector.broadcast %137 : vector<2x1x128xf32> to vector<2x8x128xf32>
    %139 = arith.divf %135, %138 : vector<2x8x128xf32>
    %c0_49 = arith.constant 0 : index
    %c0_50 = arith.constant 0 : index
    %c0_51 = arith.constant 0 : index
    %c0_52 = arith.constant 0 : index
    %140 = vector.load %arg4[%c0_49, %c0_50, %c0_51, %c0_52] : memref<2x8x16x128xf32, #tpu.memory_space<vmem>>, vector<2x8x16x128xf32>
    %141 = vector.shape_cast %139 : vector<2x8x128xf32> to vector<2x8x1x128xf32>
    %142 = vector.broadcast %141 : vector<2x8x1x128xf32> to vector<2x8x16x128xf32>
    %143 = arith.mulf %142, %140 : vector<2x8x16x128xf32>
    %cst_53 = arith.constant dense<0.000000e+00> : vector<2x8x16xf32>
    %144 = vector.multi_reduction <add>, %143, %cst_53 [3] : vector<2x8x16x128xf32> to vector<2x8x16xf32>
    %145 = arith.mulf %144, %144 : vector<2x8x16xf32>
    %cst_54 = arith.constant dense<0.000000e+00> : vector<2x8xf32>
    %146 = vector.multi_reduction <add>, %145, %cst_54 [2] : vector<2x8x16xf32> to vector<2x8xf32>
    %147 = vector.shape_cast %146 : vector<2x8xf32> to vector<2x8x1xf32>
    %cst_55 = arith.constant 1.000000e+00 : f32
    %148 = vector.broadcast %cst_55 : f32 to vector<2x8x1xf32>
    %149 = arith.addf %148, %147 : vector<2x8x1xf32>
    %150 = math.sqrt %147 : vector<2x8x1xf32>
    %cst_56 = arith.constant 9.99999993E-9 : f32
    %151 = vector.broadcast %cst_56 : f32 to vector<2x8x1xf32>
    %152 = arith.addf %150, %151 : vector<2x8x1xf32>
    %153 = arith.mulf %149, %152 : vector<2x8x1xf32>
    %154 = arith.divf %147, %153 : vector<2x8x1xf32>
    %155 = vector.broadcast %154 : vector<2x8x1xf32> to vector<2x8x16xf32>
    %156 = arith.mulf %144, %155 : vector<2x8x16xf32>
    %157 = vector.extract_strided_slice %156 {offsets = [0, 0, 0], sizes = [2, 1, 16], strides = [1, 1, 1]} : vector<2x8x16xf32> to vector<2x1x16xf32>
    %158 = vector.shape_cast %157 : vector<2x1x16xf32> to vector<2x16xf32>
    %c0_57 = arith.constant 0 : index
    %c0_58 = arith.constant 0 : index
    %159 = vector.load %arg3[%c0_57, %c0_58] : memref<2x128xf32, #tpu.memory_space<vmem>>, vector<2x16xf32>
    tpu.vector_store %arg3[%c0_57, %c0_58], %158 {strides = array<i32>} : memref<2x128xf32, #tpu.memory_space<vmem>>, vector<2x16xf32>,
    %160 = vector.extract_strided_slice %156 {offsets = [0, 1, 0], sizes = [2, 1, 16], strides = [1, 1, 1]} : vector<2x8x16xf32> to vector<2x1x16xf32>
    %161 = vector.shape_cast %160 : vector<2x1x16xf32> to vector<2x16xf32>
    %c0_59 = arith.constant 0 : index
    %c16 = arith.constant 16 : index
    %162 = vector.load %arg3[%c0_59, %c16] : memref<2x128xf32, #tpu.memory_space<vmem>>, vector<2x16xf32>
    tpu.vector_store %arg3[%c0_59, %c16], %161 {strides = array<i32>} : memref<2x128xf32, #tpu.memory_space<vmem>>, vector<2x16xf32>,
    %163 = vector.extract_strided_slice %156 {offsets = [0, 2, 0], sizes = [2, 1, 16], strides = [1, 1, 1]} : vector<2x8x16xf32> to vector<2x1x16xf32>
    %164 = vector.shape_cast %163 : vector<2x1x16xf32> to vector<2x16xf32>
    %c0_60 = arith.constant 0 : index
    %c32 = arith.constant 32 : index
    %165 = vector.load %arg3[%c0_60, %c32] : memref<2x128xf32, #tpu.memory_space<vmem>>, vector<2x16xf32>
    tpu.vector_store %arg3[%c0_60, %c32], %164 {strides = array<i32>} : memref<2x128xf32, #tpu.memory_space<vmem>>, vector<2x16xf32>,
    %166 = vector.extract_strided_slice %156 {offsets = [0, 3, 0], sizes = [2, 1, 16], strides = [1, 1, 1]} : vector<2x8x16xf32> to vector<2x1x16xf32>
    %167 = vector.shape_cast %166 : vector<2x1x16xf32> to vector<2x16xf32>
    %c0_61 = arith.constant 0 : index
    %c48 = arith.constant 48 : index
    %168 = vector.load %arg3[%c0_61, %c48] : memref<2x128xf32, #tpu.memory_space<vmem>>, vector<2x16xf32>
    tpu.vector_store %arg3[%c0_61, %c48], %167 {strides = array<i32>} : memref<2x128xf32, #tpu.memory_space<vmem>>, vector<2x16xf32>,
    %169 = vector.extract_strided_slice %156 {offsets = [0, 4, 0], sizes = [2, 1, 16], strides = [1, 1, 1]} : vector<2x8x16xf32> to vector<2x1x16xf32>
    %170 = vector.shape_cast %169 : vector<2x1x16xf32> to vector<2x16xf32>
    %c0_62 = arith.constant 0 : index
    %c64 = arith.constant 64 : index
    %171 = vector.load %arg3[%c0_62, %c64] : memref<2x128xf32, #tpu.memory_space<vmem>>, vector<2x16xf32>
    tpu.vector_store %arg3[%c0_62, %c64], %170 {strides = array<i32>} : memref<2x128xf32, #tpu.memory_space<vmem>>, vector<2x16xf32>,
    %172 = vector.extract_strided_slice %156 {offsets = [0, 5, 0], sizes = [2, 1, 16], strides = [1, 1, 1]} : vector<2x8x16xf32> to vector<2x1x16xf32>
    %173 = vector.shape_cast %172 : vector<2x1x16xf32> to vector<2x16xf32>
    %c0_63 = arith.constant 0 : index
    %c80 = arith.constant 80 : index
    %174 = vector.load %arg3[%c0_63, %c80] : memref<2x128xf32, #tpu.memory_space<vmem>>, vector<2x16xf32>
    tpu.vector_store %arg3[%c0_63, %c80], %173 {strides = array<i32>} : memref<2x128xf32, #tpu.memory_space<vmem>>, vector<2x16xf32>,
    %175 = vector.extract_strided_slice %156 {offsets = [0, 6, 0], sizes = [2, 1, 16], strides = [1, 1, 1]} : vector<2x8x16xf32> to vector<2x1x16xf32>
    %176 = vector.shape_cast %175 : vector<2x1x16xf32> to vector<2x16xf32>
    %c0_64 = arith.constant 0 : index
    %c96 = arith.constant 96 : index
    %177 = vector.load %arg3[%c0_64, %c96] : memref<2x128xf32, #tpu.memory_space<vmem>>, vector<2x16xf32>
    tpu.vector_store %arg3[%c0_64, %c96], %176 {strides = array<i32>} : memref<2x128xf32, #tpu.memory_space<vmem>>, vector<2x16xf32>,
    %178 = vector.extract_strided_slice %156 {offsets = [0, 7, 0], sizes = [2, 1, 16], strides = [1, 1, 1]} : vector<2x8x16xf32> to vector<2x1x16xf32>
    %179 = vector.shape_cast %178 : vector<2x1x16xf32> to vector<2x16xf32>
    %c0_65 = arith.constant 0 : index
    %c112 = arith.constant 112 : index
    %180 = vector.load %arg3[%c0_65, %c112] : memref<2x128xf32, #tpu.memory_space<vmem>>, vector<2x16xf32>
    tpu.vector_store %arg3[%c0_65, %c112], %179 {strides = array<i32>} : memref<2x128xf32, #tpu.memory_space<vmem>>, vector<2x16xf32>,
    return
  }
  func.func @transform_0(%arg0: i32) -> (i32, i32, i32) {
    %c0_i32 = arith.constant 0 : i32
    %c0_i32_0 = arith.constant 0 : i32
    %c0_i32_1 = arith.constant 0 : i32
    return %arg0, %c0_i32, %c0_i32_0 : i32, i32, i32
  }
  func.func @transform_1(%arg0: i32) -> (i32, i32, i32, i32) {
    %c0_i32 = arith.constant 0 : i32
    %c0_i32_0 = arith.constant 0 : i32
    %c0_i32_1 = arith.constant 0 : i32
    %c0_i32_2 = arith.constant 0 : i32
    %c0_i32_3 = arith.constant 0 : i32
    return %c0_i32, %c0_i32_0, %c0_i32_1, %c0_i32_2 : i32, i32, i32, i32
  }
  func.func @transform_2(%arg0: i32) -> (i32, i32) {
    %c0_i32 = arith.constant 0 : i32
    %c0_i32_0 = arith.constant 0 : i32
    return %arg0, %c0_i32 : i32, i32
  }
}

</mosaic_0001>

<llo_original>
// kernel: digitcaps_forward.1
$region0: #{digitcaps_forward.1}
  #allocation0 [shape = 'u32[]', space=smem, size = 0x4, offset = 0x4, fixed_abs, tag = 'smem constant byte address 0x4 - core index']
  #allocation1 [shape = 'u32[144,128]{1,0:T(1,128)}', space=vmem, size = 0x12000, scoped, tag = 'internal scratch']
  #allocation2 [shape = 'f32[2,8,16,128]{3,2,1,0:T(8,128)}', space=vmem, size = 0x20000, scoped, tag = 'scratch operand']
  %s0 = inlined_call_operand.hbm [shape: f32[2,8,128], index: 0, kind: input, shape index: {}]
  %s1 = inlined_call_operand.hbm [shape: f32[8,8,16,128], index: 1, kind: input, shape index: {}]
  %s2 = inlined_call_operand.vmem [shape: f32[2,128], index: 2, kind: output, shape index: {}]
  %s3 = sld [smem:[#allocation0]]
  $region26: #{digitcaps_forward.1} parent=0
    _
  %s5 = ssub.s32 1, %s3
  %s6 = scalar_select 0, %s5, %s3
  $region1: #{digitcaps_forward.1} parent=0
    #allocation3 [shape = 'u8[8192]{0}', space=vmem, size = 0x2000, scoped, tag = 'input window, operand 0, single buffered']
    #allocation4 [shape = 's32[1]{0}', space=sflag, size = 0x4, scoped, tag = 'scoped memory for digitcaps_forward.1']
    #allocation5 [shape = 'u8[524288]{0}', space=vmem, size = 0x80000, scoped, tag = 'input window, operand 1, single buffered']
    #allocation6 [shape = 's32[1]{0}', space=sflag, size = 0x4, scoped, tag = 'scoped memory for digitcaps_forward.1']
    %7 = vsyncpa [#allocation4], 0
    %8 = vsyncpa [#allocation6], 0
    // Predicated region
    $region2: #{digitcaps_forward.1} parent=1 // pred_check
      _
    $region3: #{digitcaps_forward.1} parent=1 // pred_check_branch
      %10 = sbr.rel (0) target = $region5
    $region4: #{digitcaps_forward.1} parent=1 // pred_region
      %s12 = ssub.s32 256, 256
      %13 = vsyncadd [#allocation4], %s12
      %s14 = sshll.u32 [#allocation3], 4
      %s15 = int_to_ptr.vmem [resolvable:$true] %s14
      %20 = dma.hbm_to_vmem [thread:$0]  %s0, 256, %s15, [#allocation4], 128, 128, 8
    $region5: #{digitcaps_forward.1} parent=1 // pred_fallthru
      _
    // Predicated region
    $region6: #{digitcaps_forward.1} parent=1 // pred_check
      _
    $region7: #{digitcaps_forward.1} parent=1 // pred_check_branch
      %22 = sbr.rel (0) target = $region9
    $region8: #{digitcaps_forward.1} parent=1 // pred_region
      %s24 = ssub.s32 16384, 16384
      %25 = vsyncadd [#allocation6], %s24
      %s26 = sshll.u32 [#allocation5], 4
      %s27 = int_to_ptr.vmem [resolvable:$true] %s26
      %32 = dma.hbm_to_vmem [thread:$0]  %s1, 16384, %s27, [#allocation6], 128, 128, 8
    $region9: #{digitcaps_forward.1} parent=1 // pred_fallthru
      _
    // Predicated region
    $region10: #{digitcaps_forward.1} parent=1 // pred_check
      _
    $region11: #{digitcaps_forward.1} parent=1 // pred_check_branch
      %34 = sbr.rel (0) target = $region13
    $region12: #{digitcaps_forward.1} parent=1 // pred_region
      %35 = dma.done [#allocation4], 256
    $region13: #{digitcaps_forward.1} parent=1 // pred_fallthru
      _
    // Predicated region
    $region14: #{digitcaps_forward.1} parent=1 // pred_check
      _
    $region15: #{digitcaps_forward.1} parent=1 // pred_check_branch
      %37 = sbr.rel (0) target = $region17
    $region16: #{digitcaps_forward.1} parent=1 // pred_region
      %38 = dma.done [#allocation6], 16384
    $region17: #{digitcaps_forward.1} parent=1 // pred_fallthru
      _
    %v39 = vld [vmem:[#allocation3] sm:$0xff]
    %v40 = vld [vmem:[#allocation3 + $0x8] sm:$0xff]
    %v41 = vld [vmem:[#allocation5] sm:$0xff]
    %v42 = vld [vmem:[#allocation5 + $0x8] sm:$0xff]
    %v43 = vld [vmem:[#allocation5 + $0x80] sm:$0xff]
    %v44 = vld [vmem:[#allocation5 + $0x88] sm:$0xff]
    %v45 = vld [vmem:[#allocation5 + $0x100] sm:$0xff]
    %v46 = vld [vmem:[#allocation5 + $0x108] sm:$0xff]
    %v47 = vld [vmem:[#allocation5 + $0x180] sm:$0xff]
    %v48 = vld [vmem:[#allocation5 + $0x188] sm:$0xff]
    %v49 = vld [vmem:[#allocation5 + $0x200] sm:$0xff]
    %v50 = vld [vmem:[#allocation5 + $0x208] sm:$0xff]
    %v51 = vld [vmem:[#allocation5 + $0x280] sm:$0xff]
    %v52 = vld [vmem:[#allocation5 + $0x288] sm:$0xff]
    %v53 = vld [vmem:[#allocation5 + $0x300] sm:$0xff]
    %v54 = vld [vmem:[#allocation5 + $0x308] sm:$0xff]
    %v55 = vld [vmem:[#allocation5 + $0x380] sm:$0xff]
    %v56 = vld [vmem:[#allocation5 + $0x388] sm:$0xff]
    %v57 = vlaneseq
    %v58 = vshrl.u32 %v57, 7
    %v59 = vsub.s32 0, %v58
    %v60 = vrot.slane %v39, %v59
    %v61 = vlaneseq
    %v62 = vshrl.u32 %v61, 7
    %v63 = vsub.s32 0, %v62
    %v64 = vrot.slane %v40, %v63
    %v65 = vmul.f32 %v41, %v60
    %v66 = vmul.f32 %v42, %v60
    %v67 = vmul.f32 %v43, %v60
    %v68 = vmul.f32 %v44, %v60
    %v69 = vmul.f32 %v45, %v60
    %v70 = vmul.f32 %v46, %v60
    %v71 = vmul.f32 %v47, %v60
    %v72 = vmul.f32 %v48, %v60
    %v73 = vmul.f32 %v49, %v60
    %v74 = vmul.f32 %v50, %v60
    %v75 = vmul.f32 %v51, %v60
    %v76 = vmul.f32 %v52, %v60
    %v77 = vmul.f32 %v53, %v60
    %v78 = vmul.f32 %v54, %v60
    %v79 = vmul.f32 %v55, %v60
    %v80 = vmul.f32 %v56, %v60
    %v81 = vmul.f32 %v41, %v64
    %v82 = vmul.f32 %v42, %v64
    %v83 = vmul.f32 %v43, %v64
    %v84 = vmul.f32 %v44, %v64
    %v85 = vmul.f32 %v45, %v64
    %v86 = vmul.f32 %v46, %v64
    %v87 = vmul.f32 %v47, %v64
    %v88 = vmul.f32 %v48, %v64
    %v89 = vmul.f32 %v49, %v64
    %v90 = vmul.f32 %v50, %v64
    %v91 = vmul.f32 %v51, %v64
    %v92 = vmul.f32 %v52, %v64
    %v93 = vmul.f32 %v53, %v64
    %v94 = vmul.f32 %v54, %v64
    %v95 = vmul.f32 %v55, %v64
    %v96 = vmul.f32 %v56, %v64
    %s97 = scalar_lea.vmem [#allocation5], 16
    %v98 = vld [vmem:[%s97] sm:$0xff]
    %v99 = vld [vmem:[%s97 + $0x8] sm:$0xff]
    %v100 = vld [vmem:[%s97 + $0x80] sm:$0xff]
    %v101 = vld [vmem:[%s97 + $0x88] sm:$0xff]
    %v102 = vld [vmem:[%s97 + $0x100] sm:$0xff]
    %v103 = vld [vmem:[%s97 + $0x108] sm:$0xff]
    %v104 = vld [vmem:[%s97 + $0x180] sm:$0xff]
    %v105 = vld [vmem:[%s97 + $0x188] sm:$0xff]
    %v106 = vld [vmem:[%s97 + $0x200] sm:$0xff]
    %v107 = vld [vmem:[%s97 + $0x208] sm:$0xff]
    %v108 = vld [vmem:[%s97 + $0x280] sm:$0xff]
    %v109 = vld [vmem:[%s97 + $0x288] sm:$0xff]
    %v110 = vld [vmem:[%s97 + $0x300] sm:$0xff]
    %v111 = vld [vmem:[%s97 + $0x308] sm:$0xff]
    %v112 = vld [vmem:[%s97 + $0x380] sm:$0xff]
    %v113 = vld [vmem:[%s97 + $0x388] sm:$0xff]
    %v114 = vlaneseq
    %v115 = vshrl.u32 %v114, 7
    %v116 = vsub.s32 1, %v115
    %v117 = vrot.slane %v39, %v116
    %v118 = vlaneseq
    %v119 = vshrl.u32 %v118, 7
    %v120 = vsub.s32 1, %v119
    %v121 = vrot.slane %v40, %v120
    %v122 = vmul.f32 %v98, %v117
    %v123 = vmul.f32 %v99, %v117
    %v124 = vmul.f32 %v100, %v117
    %v125 = vmul.f32 %v101, %v117
    %v126 = vmul.f32 %v102, %v117
    %v127 = vmul.f32 %v103, %v117
    %v128 = vmul.f32 %v104, %v117
    %v129 = vmul.f32 %v105, %v117
    %v130 = vmul.f32 %v106, %v117
    %v131 = vmul.f32 %v107, %v117
    %v132 = vmul.f32 %v108, %v117
    %v133 = vmul.f32 %v109, %v117
    %v134 = vmul.f32 %v110, %v117
    %v135 = vmul.f32 %v111, %v117
    %v136 = vmul.f32 %v112, %v117
    %v137 = vmul.f32 %v113, %v117
    %v138 = vmul.f32 %v98, %v121
    %v139 = vmul.f32 %v99, %v121
    %v140 = vmul.f32 %v100, %v121
    %v141 = vmul.f32 %v101, %v121
    %v142 = vmul.f32 %v102, %v121
    %v143 = vmul.f32 %v103, %v121
    %v144 = vmul.f32 %v104, %v121
    %v145 = vmul.f32 %v105, %v121
    %v146 = vmul.f32 %v106, %v121
    %v147 = vmul.f32 %v107, %v121
    %v148 = vmul.f32 %v108, %v121
    %v149 = vmul.f32 %v109, %v121
    %v150 = vmul.f32 %v110, %v121
    %v151 = vmul.f32 %v111, %v121
    %v152 = vmul.f32 %v112, %v121
    %v153 = vmul.f32 %v113, %v121
    %v154 = vadd.f32 %v65, %v122
    %v155 = vadd.f32 %v66, %v123
    %v156 = vadd.f32 %v67, %v124
    %v157 = vadd.f32 %v68, %v125
    %v158 = vadd.f32 %v69, %v126
    %v159 = vadd.f32 %v70, %v127
    %v160 = vadd.f32 %v71, %v128
    %v161 = vadd.f32 %v72, %v129
    %v162 = vadd.f32 %v73, %v130
    %v163 = vadd.f32 %v74, %v131
    %v164 = vadd.f32 %v75, %v132
    %v165 = vadd.f32 %v76, %v133
    %v166 = vadd.f32 %v77, %v134
    %v167 = vadd.f32 %v78, %v135
    %v168 = vadd.f32 %v79, %v136
    %v169 = vadd.f32 %v80, %v137
    %v170 = vadd.f32 %v81, %v138
    %v171 = vadd.f32 %v82, %v139
    %v172 = vadd.f32 %v83, %v140
    %v173 = vadd.f32 %v84, %v141
    %v174 = vadd.f32 %v85, %v142
    %v175 = vadd.f32 %v86, %v143
    %v176 = vadd.f32 %v87, %v144
    %v177 = vadd.f32 %v88, %v145
    %v178 = vadd.f32 %v89, %v146
    %v179 = vadd.f32 %v90, %v147
    %v180 = vadd.f32 %v91, %v148
    %v181 = vadd.f32 %v92, %v149
    %v182 = vadd.f32 %v93, %v150
    %v183 = vadd.f32 %v94, %v151
    %v184 = vadd.f32 %v95, %v152
    %v185 = vadd.f32 %v96, %v153
    %s186 = scalar_lea.vmem [#allocation5], 32
    %v187 = vld [vmem:[%s186] sm:$0xff]
    %v188 = vld [vmem:[%s186 + $0x8] sm:$0xff]
    %v189 = vld [vmem:[%s186 + $0x80] sm:$0xff]
    %v190 = vld [vmem:[%s186 + $0x88] sm:$0xff]
    %v191 = vld [vmem:[%s186 + $0x100] sm:$0xff]
    %v192 = vld [vmem:[%s186 + $0x108] sm:$0xff]
    %v193 = vld [vmem:[%s186 + $0x180] sm:$0xff]
    %v194 = vld [vmem:[%s186 + $0x188] sm:$0xff]
    %v195 = vld [vmem:[%s186 + $0x200] sm:$0xff]
    %v196 = vld [vmem:[%s186 + $0x208] sm:$0xff]
    %v197 = vld [vmem:[%s186 + $0x280] sm:$0xff]
    %v198 = vld [vmem:[%s186 + $0x288] sm:$0xff]
    %v199 = vld [vmem:[%s186 + $0x300] sm:$0xff]
    %v200 = vld [vmem:[%s186 + $0x308] sm:$0xff]
    %v201 = vld [vmem:[%s186 + $0x380] sm:$0xff]
    %v202 = vld [vmem:[%s186 + $0x388] sm:$0xff]
    %v203 = vlaneseq
    %v204 = vshrl.u32 %v203, 7
    %v205 = vsub.s32 2, %v204
    %v206 = vrot.slane %v39, %v205
    %v207 = vlaneseq
    %v208 = vshrl.u32 %v207, 7
    %v209 = vsub.s32 2, %v208
    %v210 = vrot.slane %v40, %v209
    %v211 = vmul.f32 %v187, %v206
    %v212 = vmul.f32 %v188, %v206
    %v213 = vmul.f32 %v189, %v206
    %v214 = vmul.f32 %v190, %v206
    %v215 = vmul.f32 %v191, %v206
    %v216 = vmul.f32 %v192, %v206
    %v217 = vmul.f32 %v193, %v206
    %v218 = vmul.f32 %v194, %v206
    %v219 = vmul.f32 %v195, %v206
    %v220 = vmul.f32 %v196, %v206
    %v221 = vmul.f32 %v197, %v206
    %v222 = vmul.f32 %v198, %v206
    %v223 = vmul.f32 %v199, %v206
    %v224 = vmul.f32 %v200, %v206
    %v225 = vmul.f32 %v201, %v206
    %v226 = vmul.f32 %v202, %v206
    %v227 = vmul.f32 %v187, %v210
    %v228 = vmul.f32 %v188, %v210
    %v229 = vmul.f32 %v189, %v210
    %v230 = vmul.f32 %v190, %v210
    %v231 = vmul.f32 %v191, %v210
    %v232 = vmul.f32 %v192, %v210
    %v233 = vmul.f32 %v193, %v210
    %v234 = vmul.f32 %v194, %v210
    %v235 = vmul.f32 %v195, %v210
    %v236 = vmul.f32 %v196, %v210
    %v237 = vmul.f32 %v197, %v210
    %v238 = vmul.f32 %v198, %v210
    %v239 = vmul.f32 %v199, %v210
    %v240 = vmul.f32 %v200, %v210
    %v241 = vmul.f32 %v201, %v210
    %v242 = vmul.f32 %v202, %v210
    %v243 = vadd.f32 %v154, %v211
    %v244 = vadd.f32 %v155, %v212
    %v245 = vadd.f32 %v156, %v213
    %v246 = vadd.f32 %v157, %v214
    %v247 = vadd.f32 %v158, %v215
    %v248 = vadd.f32 %v159, %v216
    %v249 = vadd.f32 %v160, %v217
    %v250 = vadd.f32 %v161, %v218
    %v251 = vadd.f32 %v162, %v219
    %v252 = vadd.f32 %v163, %v220
    %v253 = vadd.f32 %v164, %v221
    %v254 = vadd.f32 %v165, %v222
    %v255 = vadd.f32 %v166, %v223
    %v256 = vadd.f32 %v167, %v224
    %v257 = vadd.f32 %v168, %v225
    %v258 = vadd.f32 %v169, %v226
    %v259 = vadd.f32 %v170, %v227
    %v260 = vadd.f32 %v171, %v228
    %v261 = vadd.f32 %v172, %v229
    %v262 = vadd.f32 %v173, %v230
    %v263 = vadd.f32 %v174, %v231
    %v264 = vadd.f32 %v175, %v232
    %v265 = vadd.f32 %v176, %v233
    %v266 = vadd.f32 %v177, %v234
    %v267 = vadd.f32 %v178, %v235
    %v268 = vadd.f32 %v179, %v236
    %v269 = vadd.f32 %v180, %v237
    %v270 = vadd.f32 %v181, %v238
    %v271 = vadd.f32 %v182, %v239
    %v272 = vadd.f32 %v183, %v240
    %v273 = vadd.f32 %v184, %v241
    %v274 = vadd.f32 %v185, %v242
    %s275 = scalar_lea.vmem [#allocation5], 48
    %v276 = vld [vmem:[%s275] sm:$0xff]
    %v277 = vld [vmem:[%s275 + $0x8] sm:$0xff]
    %v278 = vld [vmem:[%s275 + $0x80] sm:$0xff]
    %v279 = vld [vmem:[%s275 + $0x88] sm:$0xff]
    %v280 = vld [vmem:[%s275 + $0x100] sm:$0xff]
    %v281 = vld [vmem:[%s275 + $0x108] sm:$0xff]
    %v282 = vld [vmem:[%s275 + $0x180] sm:$0xff]
    %v283 = vld [vmem:[%s275 + $0x188] sm:$0xff]
    %v284 = vld [vmem:[%s275 + $0x200] sm:$0xff]
    %v285 = vld [vmem:[%s275 + $0x208] sm:$0xff]
    %v286 = vld [vmem:[%s275 + $0x280] sm:$0xff]
    %v287 = vld [vmem:[%s275 + $0x288] sm:$0xff]
    %v288 = vld [vmem:[%s275 + $0x300] sm:$0xff]
    %v289 = vld [vmem:[%s275 + $0x308] sm:$0xff]
    %v290 = vld [vmem:[%s275 + $0x380] sm:$0xff]
    %v291 = vld [vmem:[%s275 + $0x388] sm:$0xff]
    %v292 = vlaneseq
    %v293 = vshrl.u32 %v292, 7
    %v294 = vsub.s32 3, %v293
    %v295 = vrot.slane %v39, %v294
    %v296 = vlaneseq
    %v297 = vshrl.u32 %v296, 7
    %v298 = vsub.s32 3, %v297
    %v299 = vrot.slane %v40, %v298
    %v300 = vmul.f32 %v276, %v295
    %v301 = vmul.f32 %v277, %v295
    %v302 = vmul.f32 %v278, %v295
    %v303 = vmul.f32 %v279, %v295
    %v304 = vmul.f32 %v280, %v295
    %v305 = vmul.f32 %v281, %v295
    %v306 = vmul.f32 %v282, %v295
    %v307 = vmul.f32 %v283, %v295
    %v308 = vmul.f32 %v284, %v295
    %v309 = vmul.f32 %v285, %v295
    %v310 = vmul.f32 %v286, %v295
    %v311 = vmul.f32 %v287, %v295
    %v312 = vmul.f32 %v288, %v295
    %v313 = vmul.f32 %v289, %v295
    %v314 = vmul.f32 %v290, %v295
    %v315 = vmul.f32 %v291, %v295
    %v316 = vmul.f32 %v276, %v299
    %v317 = vmul.f32 %v277, %v299
    %v318 = vmul.f32 %v278, %v299
    %v319 = vmul.f32 %v279, %v299
    %v320 = vmul.f32 %v280, %v299
    %v321 = vmul.f32 %v281, %v299
    %v322 = vmul.f32 %v282, %v299
    %v323 = vmul.f32 %v283, %v299
    %v324 = vmul.f32 %v284, %v299
    %v325 = vmul.f32 %v285, %v299
    %v326 = vmul.f32 %v286, %v299
    %v327 = vmul.f32 %v287, %v299
    %v328 = vmul.f32 %v288, %v299
    %v329 = vmul.f32 %v289, %v299
    %v330 = vmul.f32 %v290, %v299
    %v331 = vmul.f32 %v291, %v299
    %v332 = vadd.f32 %v243, %v300
    %v333 = vadd.f32 %v244, %v301
    %v334 = vadd.f32 %v245, %v302
    %v335 = vadd.f32 %v246, %v303
    %v336 = vadd.f32 %v247, %v304
    %v337 = vadd.f32 %v248, %v305
    %v338 = vadd.f32 %v249, %v306
    %v339 = vadd.f32 %v250, %v307
    %v340 = vadd.f32 %v251, %v308
    %v341 = vadd.f32 %v252, %v309
    %v342 = vadd.f32 %v253, %v310
    %v343 = vadd.f32 %v254, %v311
    %v344 = vadd.f32 %v255, %v312
    %v345 = vadd.f32 %v256, %v313
    %v346 = vadd.f32 %v257, %v314
    %v347 = vadd.f32 %v258, %v315
    %v348 = vadd.f32 %v259, %v316
    %v349 = vadd.f32 %v260, %v317
    %v350 = vadd.f32 %v261, %v318
    %v351 = vadd.f32 %v262, %v319
    %v352 = vadd.f32 %v263, %v320
    %v353 = vadd.f32 %v264, %v321
    %v354 = vadd.f32 %v265, %v322
    %v355 = vadd.f32 %v266, %v323
    %v356 = vadd.f32 %v267, %v324
    %v357 = vadd.f32 %v268, %v325
    %v358 = vadd.f32 %v269, %v326
    %v359 = vadd.f32 %v270, %v327
    %v360 = vadd.f32 %v271, %v328
    %v361 = vadd.f32 %v272, %v329
    %v362 = vadd.f32 %v273, %v330
    %v363 = vadd.f32 %v274, %v331
    %s364 = scalar_lea.vmem [#allocation5], 64
    %v365 = vld [vmem:[%s364] sm:$0xff]
    %v366 = vld [vmem:[%s364 + $0x8] sm:$0xff]
    %v367 = vld [vmem:[%s364 + $0x80] sm:$0xff]
    %v368 = vld [vmem:[%s364 + $0x88] sm:$0xff]
    %v369 = vld [vmem:[%s364 + $0x100] sm:$0xff]
    %v370 = vld [vmem:[%s364 + $0x108] sm:$0xff]
    %v371 = vld [vmem:[%s364 + $0x180] sm:$0xff]
    %v372 = vld [vmem:[%s364 + $0x188] sm:$0xff]
    %v373 = vld [vmem:[%s364 + $0x200] sm:$0xff]
    %v374 = vld [vmem:[%s364 + $0x208] sm:$0xff]
    %v375 = vld [vmem:[%s364 + $0x280] sm:$0xff]
    %v376 = vld [vmem:[%s364 + $0x288] sm:$0xff]
    %v377 = vld [vmem:[%s364 + $0x300] sm:$0xff]
    %v378 = vld [vmem:[%s364 + $0x308] sm:$0xff]
    %v379 = vld [vmem:[%s364 + $0x380] sm:$0xff]
    %v380 = vld [vmem:[%s364 + $0x388] sm:$0xff]
    %v381 = vlaneseq
    %v382 = vshrl.u32 %v381, 7
    %v383 = vsub.s32 4, %v382
    %v384 = vrot.slane %v39, %v383
    %v385 = vlaneseq
    %v386 = vshrl.u32 %v385, 7
    %v387 = vsub.s32 4, %v386
    %v388 = vrot.slane %v40, %v387
    %v389 = vmul.f32 %v365, %v384
    %v390 = vmul.f32 %v366, %v384
    %v391 = vmul.f32 %v367, %v384
    %v392 = vmul.f32 %v368, %v384
    %v393 = vmul.f32 %v369, %v384
    %v394 = vmul.f32 %v370, %v384
    %v395 = vmul.f32 %v371, %v384
    %v396 = vmul.f32 %v372, %v384
    %v397 = vmul.f32 %v373, %v384
    %v398 = vmul.f32 %v374, %v384
    %v399 = vmul.f32 %v375, %v384
    %v400 = vmul.f32 %v376, %v384
    %v401 = vmul.f32 %v377, %v384
    %v402 = vmul.f32 %v378, %v384
    %v403 = vmul.f32 %v379, %v384
    %v404 = vmul.f32 %v380, %v384
    %v405 = vmul.f32 %v365, %v388
    %v406 = vmul.f32 %v366, %v388
    %v407 = vmul.f32 %v367, %v388
    %v408 = vmul.f32 %v368, %v388
    %v409 = vmul.f32 %v369, %v388
    %v410 = vmul.f32 %v370, %v388
    %v411 = vmul.f32 %v371, %v388
    %v412 = vmul.f32 %v372, %v388
    %v413 = vmul.f32 %v373, %v388
    %v414 = vmul.f32 %v374, %v388
    %v415 = vmul.f32 %v375, %v388
    %v416 = vmul.f32 %v376, %v388
    %v417 = vmul.f32 %v377, %v388
    %v418 = vmul.f32 %v378, %v388
    %v419 = vmul.f32 %v379, %v388
    %v420 = vmul.f32 %v380, %v388
    %v421 = vadd.f32 %v332, %v389
    %v422 = vadd.f32 %v333, %v390
    %v423 = vadd.f32 %v334, %v391
    %v424 = vadd.f32 %v335, %v392
    %v425 = vadd.f32 %v336, %v393
    %v426 = vadd.f32 %v337, %v394
    %v427 = vadd.f32 %v338, %v395
    %v428 = vadd.f32 %v339, %v396
    %v429 = vadd.f32 %v340, %v397
    %v430 = vadd.f32 %v341, %v398
    %v431 = vadd.f32 %v342, %v399
    %v432 = vadd.f32 %v343, %v400
    %v433 = vadd.f32 %v344, %v401
    %v434 = vadd.f32 %v345, %v402
    %v435 = vadd.f32 %v346, %v403
    %v436 = vadd.f32 %v347, %v404
    %v437 = vadd.f32 %v348, %v405
    %v438 = vadd.f32 %v349, %v406
    %v439 = vadd.f32 %v350, %v407
    %v440 = vadd.f32 %v351, %v408
    %v441 = vadd.f32 %v352, %v409
    %v442 = vadd.f32 %v353, %v410
    %v443 = vadd.f32 %v354, %v411
    %v444 = vadd.f32 %v355, %v412
    %v445 = vadd.f32 %v356, %v413
    %v446 = vadd.f32 %v357, %v414
    %v447 = vadd.f32 %v358, %v415
    %v448 = vadd.f32 %v359, %v416
    %v449 = vadd.f32 %v360, %v417
    %v450 = vadd.f32 %v361, %v418
    %v451 = vadd.f32 %v362, %v419
    %v452 = vadd.f32 %v363, %v420
    %s453 = scalar_lea.vmem [#allocation5], 80
    %v454 = vld [vmem:[%s453] sm:$0xff]
    %v455 = vld [vmem:[%s453 + $0x8] sm:$0xff]
    %v456 = vld [vmem:[%s453 + $0x80] sm:$0xff]
    %v457 = vld [vmem:[%s453 + $0x88] sm:$0xff]
    %v458 = vld [vmem:[%s453 + $0x100] sm:$0xff]
    %v459 = vld [vmem:[%s453 + $0x108] sm:$0xff]
    %v460 = vld [vmem:[%s453 + $0x180] sm:$0xff]
    %v461 = vld [vmem:[%s453 + $0x188] sm:$0xff]
    %v462 = vld [vmem:[%s453 + $0x200] sm:$0xff]
    %v463 = vld [vmem:[%s453 + $0x208] sm:$0xff]
    %v464 = vld [vmem:[%s453 + $0x280] sm:$0xff]
    %v465 = vld [vmem:[%s453 + $0x288] sm:$0xff]
    %v466 = vld [vmem:[%s453 + $0x300] sm:$0xff]
    %v467 = vld [vmem:[%s453 + $0x308] sm:$0xff]
    %v468 = vld [vmem:[%s453 + $0x380] sm:$0xff]
    %v469 = vld [vmem:[%s453 + $0x388] sm:$0xff]
    %v470 = vlaneseq
    %v471 = vshrl.u32 %v470, 7
    %v472 = vsub.s32 5, %v471
    %v473 = vrot.slane %v39, %v472
    %v474 = vlaneseq
    %v475 = vshrl.u32 %v474, 7
    %v476 = vsub.s32 5, %v475
    %v477 = vrot.slane %v40, %v476
    %v478 = vmul.f32 %v454, %v473
    %v479 = vmul.f32 %v455, %v473
    %v480 = vmul.f32 %v456, %v473
    %v481 = vmul.f32 %v457, %v473
    %v482 = vmul.f32 %v458, %v473
    %v483 = vmul.f32 %v459, %v473
    %v484 = vmul.f32 %v460, %v473
    %v485 = vmul.f32 %v461, %v473
    %v486 = vmul.f32 %v462, %v473
    %v487 = vmul.f32 %v463, %v473
    %v488 = vmul.f32 %v464, %v473
    %v489 = vmul.f32 %v465, %v473
    %v490 = vmul.f32 %v466, %v473
    %v491 = vmul.f32 %v467, %v473
    %v492 = vmul.f32 %v468, %v473
    %v493 = vmul.f32 %v469, %v473
    %v494 = vmul.f32 %v454, %v477
    %v495 = vmul.f32 %v455, %v477
    %v496 = vmul.f32 %v456, %v477
    %v497 = vmul.f32 %v457, %v477
    %v498 = vmul.f32 %v458, %v477
    %v499 = vmul.f32 %v459, %v477
    %v500 = vmul.f32 %v460, %v477
    %v501 = vmul.f32 %v461, %v477
    %v502 = vmul.f32 %v462, %v477
    %v503 = vmul.f32 %v463, %v477
    %v504 = vmul.f32 %v464, %v477
    %v505 = vmul.f32 %v465, %v477
    %v506 = vmul.f32 %v466, %v477
    %v507 = vmul.f32 %v467, %v477
    %v508 = vmul.f32 %v468, %v477
    %v509 = vmul.f32 %v469, %v477
    %v510 = vadd.f32 %v421, %v478
    %v511 = vadd.f32 %v422, %v479
    %v512 = vadd.f32 %v423, %v480
    %v513 = vadd.f32 %v424, %v481
    %v514 = vadd.f32 %v425, %v482
    %v515 = vadd.f32 %v426, %v483
    %v516 = vadd.f32 %v427, %v484
    %v517 = vadd.f32 %v428, %v485
    %v518 = vadd.f32 %v429, %v486
    %v519 = vadd.f32 %v430, %v487
    %v520 = vadd.f32 %v431, %v488
    %v521 = vadd.f32 %v432, %v489
    %v522 = vadd.f32 %v433, %v490
    %v523 = vadd.f32 %v434, %v491
    %v524 = vadd.f32 %v435, %v492
    %v525 = vadd.f32 %v436, %v493
    %v526 = vadd.f32 %v437, %v494
    %v527 = vadd.f32 %v438, %v495
    %v528 = vadd.f32 %v439, %v496
    %v529 = vadd.f32 %v440, %v497
    %v530 = vadd.f32 %v441, %v498
    %v531 = vadd.f32 %v442, %v499
    %v532 = vadd.f32 %v443, %v500
    %v533 = vadd.f32 %v444, %v501
    %v534 = vadd.f32 %v445, %v502
    %v535 = vadd.f32 %v446, %v503
    %v536 = vadd.f32 %v447, %v504
    %v537 = vadd.f32 %v448, %v505
    %v538 = vadd.f32 %v449, %v506
    %v539 = vadd.f32 %v450, %v507
    %v540 = vadd.f32 %v451, %v508
    %v541 = vadd.f32 %v452, %v509
    %s542 = scalar_lea.vmem [#allocation5], 96
    %v543 = vld [vmem:[%s542] sm:$0xff]
    %v544 = vld [vmem:[%s542 + $0x8] sm:$0xff]
    %v545 = vld [vmem:[%s542 + $0x80] sm:$0xff]
    %v546 = vld [vmem:[%s542 + $0x88] sm:$0xff]
    %v547 = vld [vmem:[%s542 + $0x100] sm:$0xff]
    %v548 = vld [vmem:[%s542 + $0x108] sm:$0xff]
    %v549 = vld [vmem:[%s542 + $0x180] sm:$0xff]
    %v550 = vld [vmem:[%s542 + $0x188] sm:$0xff]
    %v551 = vld [vmem:[%s542 + $0x200] sm:$0xff]
    %v552 = vld [vmem:[%s542 + $0x208] sm:$0xff]
    %v553 = vld [vmem:[%s542 + $0x280] sm:$0xff]
    %v554 = vld [vmem:[%s542 + $0x288] sm:$0xff]
    %v555 = vld [vmem:[%s542 + $0x300] sm:$0xff]
    %v556 = vld [vmem:[%s542 + $0x308] sm:$0xff]
    %v557 = vld [vmem:[%s542 + $0x380] sm:$0xff]
    %v558 = vld [vmem:[%s542 + $0x388] sm:$0xff]
    %v559 = vlaneseq
    %v560 = vshrl.u32 %v559, 7
    %v561 = vsub.s32 6, %v560
    %v562 = vrot.slane %v39, %v561
    %v563 = vlaneseq
    %v564 = vshrl.u32 %v563, 7
    %v565 = vsub.s32 6, %v564
    %v566 = vrot.slane %v40, %v565
    %v567 = vmul.f32 %v543, %v562
    %v568 = vmul.f32 %v544, %v562
    %v569 = vmul.f32 %v545, %v562
    %v570 = vmul.f32 %v546, %v562
    %v571 = vmul.f32 %v547, %v562
    %v572 = vmul.f32 %v548, %v562
    %v573 = vmul.f32 %v549, %v562
    %v574 = vmul.f32 %v550, %v562
    %v575 = vmul.f32 %v551, %v562
    %v576 = vmul.f32 %v552, %v562
    %v577 = vmul.f32 %v553, %v562
    %v578 = vmul.f32 %v554, %v562
    %v579 = vmul.f32 %v555, %v562
    %v580 = vmul.f32 %v556, %v562
    %v581 = vmul.f32 %v557, %v562
    %v582 = vmul.f32 %v558, %v562
    %v583 = vmul.f32 %v543, %v566
    %v584 = vmul.f32 %v544, %v566
    %v585 = vmul.f32 %v545, %v566
    %v586 = vmul.f32 %v546, %v566
    %v587 = vmul.f32 %v547, %v566
    %v588 = vmul.f32 %v548, %v566
    %v589 = vmul.f32 %v549, %v566
    %v590 = vmul.f32 %v550, %v566
    %v591 = vmul.f32 %v551, %v566
    %v592 = vmul.f32 %v552, %v566
    %v593 = vmul.f32 %v553, %v566
    %v594 = vmul.f32 %v554, %v566
    %v595 = vmul.f32 %v555, %v566
    %v596 = vmul.f32 %v556, %v566
    %v597 = vmul.f32 %v557, %v566
    %v598 = vmul.f32 %v558, %v566
    %v599 = vadd.f32 %v510, %v567
    %v600 = vadd.f32 %v511, %v568
    %v601 = vadd.f32 %v512, %v569
    %v602 = vadd.f32 %v513, %v570
    %v603 = vadd.f32 %v514, %v571
    %v604 = vadd.f32 %v515, %v572
    %v605 = vadd.f32 %v516, %v573
    %v606 = vadd.f32 %v517, %v574
    %v607 = vadd.f32 %v518, %v575
    %v608 = vadd.f32 %v519, %v576
    %v609 = vadd.f32 %v520, %v577
    %v610 = vadd.f32 %v521, %v578
    %v611 = vadd.f32 %v522, %v579
    %v612 = vadd.f32 %v523, %v580
    %v613 = vadd.f32 %v524, %v581
    %v614 = vadd.f32 %v525, %v582
    %v615 = vadd.f32 %v526, %v583
    %v616 = vadd.f32 %v527, %v584
    %v617 = vadd.f32 %v528, %v585
    %v618 = vadd.f32 %v529, %v586
    %v619 = vadd.f32 %v530, %v587
    %v620 = vadd.f32 %v531, %v588
    %v621 = vadd.f32 %v532, %v589
    %v622 = vadd.f32 %v533, %v590
    %v623 = vadd.f32 %v534, %v591
    %v624 = vadd.f32 %v535, %v592
    %v625 = vadd.f32 %v536, %v593
    %v626 = vadd.f32 %v537, %v594
    %v627 = vadd.f32 %v538, %v595
    %v628 = vadd.f32 %v539, %v596
    %v629 = vadd.f32 %v540, %v597
    %v630 = vadd.f32 %v541, %v598
    %s631 = scalar_lea.vmem [#allocation5], 112
    %v632 = vld [vmem:[%s631] sm:$0xff]
    %v633 = vld [vmem:[%s631 + $0x8] sm:$0xff]
    %v634 = vld [vmem:[%s631 + $0x80] sm:$0xff]
    %v635 = vld [vmem:[%s631 + $0x88] sm:$0xff]
    %v636 = vld [vmem:[%s631 + $0x100] sm:$0xff]
    %v637 = vld [vmem:[%s631 + $0x108] sm:$0xff]
    %v638 = vld [vmem:[%s631 + $0x180] sm:$0xff]
    %v639 = vld [vmem:[%s631 + $0x188] sm:$0xff]
    %v640 = vld [vmem:[%s631 + $0x200] sm:$0xff]
    %v641 = vld [vmem:[%s631 + $0x208] sm:$0xff]
    %v642 = vld [vmem:[%s631 + $0x280] sm:$0xff]
    %v643 = vld [vmem:[%s631 + $0x288] sm:$0xff]
    %v644 = vld [vmem:[%s631 + $0x300] sm:$0xff]
    %v645 = vld [vmem:[%s631 + $0x308] sm:$0xff]
    %v646 = vld [vmem:[%s631 + $0x380] sm:$0xff]
    %v647 = vld [vmem:[%s631 + $0x388] sm:$0xff]
    %v648 = vlaneseq
    %v649 = vshrl.u32 %v648, 7
    %v650 = vsub.s32 7, %v649
    %v651 = vrot.slane %v39, %v650
    %v652 = vlaneseq
    %v653 = vshrl.u32 %v652, 7
    %v654 = vsub.s32 7, %v653
    %v655 = vrot.slane %v40, %v654
    %v656 = vmul.f32 %v632, %v651
    %v657 = vmul.f32 %v633, %v651
    %v658 = vmul.f32 %v634, %v651
    %v659 = vmul.f32 %v635, %v651
    %v660 = vmul.f32 %v636, %v651
    %v661 = vmul.f32 %v637, %v651
    %v662 = vmul.f32 %v638, %v651
    %v663 = vmul.f32 %v639, %v651
    %v664 = vmul.f32 %v640, %v651
    %v665 = vmul.f32 %v641, %v651
    %v666 = vmul.f32 %v642, %v651
    %v667 = vmul.f32 %v643, %v651
    %v668 = vmul.f32 %v644, %v651
    %v669 = vmul.f32 %v645, %v651
    %v670 = vmul.f32 %v646, %v651
    %v671 = vmul.f32 %v647, %v651
    %v672 = vmul.f32 %v632, %v655
    %v673 = vmul.f32 %v633, %v655
    %v674 = vmul.f32 %v634, %v655
    %v675 = vmul.f32 %v635, %v655
    %v676 = vmul.f32 %v636, %v655
    %v677 = vmul.f32 %v637, %v655
    %v678 = vmul.f32 %v638, %v655
    %v679 = vmul.f32 %v639, %v655
    %v680 = vmul.f32 %v640, %v655
    %v681 = vmul.f32 %v641, %v655
    %v682 = vmul.f32 %v642, %v655
    %v683 = vmul.f32 %v643, %v655
    %v684 = vmul.f32 %v644, %v655
    %v685 = vmul.f32 %v645, %v655
    %v686 = vmul.f32 %v646, %v655
    %v687 = vmul.f32 %v647, %v655
    %v688 = vadd.f32 %v599, %v656
    %v689 = vadd.f32 %v600, %v657
    %v690 = vadd.f32 %v601, %v658
    %v691 = vadd.f32 %v602, %v659
    %v692 = vadd.f32 %v603, %v660
    %v693 = vadd.f32 %v604, %v661
    %v694 = vadd.f32 %v605, %v662
    %v695 = vadd.f32 %v606, %v663
    %v696 = vadd.f32 %v607, %v664
    %v697 = vadd.f32 %v608, %v665
    %v698 = vadd.f32 %v609, %v666
    %v699 = vadd.f32 %v610, %v667
    %v700 = vadd.f32 %v611, %v668
    %v701 = vadd.f32 %v612, %v669
    %v702 = vadd.f32 %v613, %v670
    %v703 = vadd.f32 %v614, %v671
    %v704 = vadd.f32 %v615, %v672
    %v705 = vadd.f32 %v616, %v673
    %v706 = vadd.f32 %v617, %v674
    %v707 = vadd.f32 %v618, %v675
    %v708 = vadd.f32 %v619, %v676
    %v709 = vadd.f32 %v620, %v677
    %v710 = vadd.f32 %v621, %v678
    %v711 = vadd.f32 %v622, %v679
    %v712 = vadd.f32 %v623, %v680
    %v713 = vadd.f32 %v624, %v681
    %v714 = vadd.f32 %v625, %v682
    %v715 = vadd.f32 %v626, %v683
    %v716 = vadd.f32 %v627, %v684
    %v717 = vadd.f32 %v628, %v685
    %v718 = vadd.f32 %v629, %v686
    %v719 = vadd.f32 %v630, %v687
    %720 = vst [vmem:[#allocation2] sm:$0xff] %v688
    %721 = vst [vmem:[#allocation2 + $0x8] sm:$0xff] %v689
    %722 = vst [vmem:[#allocation2 + $0x10] sm:$0xff] %v690
    %723 = vst [vmem:[#allocation2 + $0x18] sm:$0xff] %v691
    %724 = vst [vmem:[#allocation2 + $0x20] sm:$0xff] %v692
    %725 = vst [vmem:[#allocation2 + $0x28] sm:$0xff] %v693
    %726 = vst [vmem:[#allocation2 + $0x30] sm:$0xff] %v694
    %727 = vst [vmem:[#allocation2 + $0x38] sm:$0xff] %v695
    %728 = vst [vmem:[#allocation2 + $0x40] sm:$0xff] %v696
    %729 = vst [vmem:[#allocation2 + $0x48] sm:$0xff] %v697
    %730 = vst [vmem:[#allocation2 + $0x50] sm:$0xff] %v698
    %731 = vst [vmem:[#allocation2 + $0x58] sm:$0xff] %v699
    %732 = vst [vmem:[#allocation2 + $0x60] sm:$0xff] %v700
    %733 = vst [vmem:[#allocation2 + $0x68] sm:$0xff] %v701
    %734 = vst [vmem:[#allocation2 + $0x70] sm:$0xff] %v702
    %735 = vst [vmem:[#allocation2 + $0x78] sm:$0xff] %v703
    %736 = vst [vmem:[#allocation2 + $0x80] sm:$0xff] %v704
    %737 = vst [vmem:[#allocation2 + $0x88] sm:$0xff] %v705
    %738 = vst [vmem:[#allocation2 + $0x90] sm:$0xff] %v706
    %739 = vst [vmem:[#allocation2 + $0x98] sm:$0xff] %v707
    %740 = vst [vmem:[#allocation2 + $0xa0] sm:$0xff] %v708
    %741 = vst [vmem:[#allocation2 + $0xa8] sm:$0xff] %v709
    %742 = vst [vmem:[#allocation2 + $0xb0] sm:$0xff] %v710
    %743 = vst [vmem:[#allocation2 + $0xb8] sm:$0xff] %v711
    %744 = vst [vmem:[#allocation2 + $0xc0] sm:$0xff] %v712
    %745 = vst [vmem:[#allocation2 + $0xc8] sm:$0xff] %v713
    %746 = vst [vmem:[#allocation2 + $0xd0] sm:$0xff] %v714
    %747 = vst [vmem:[#allocation2 + $0xd8] sm:$0xff] %v715
    %748 = vst [vmem:[#allocation2 + $0xe0] sm:$0xff] %v716
    %749 = vst [vmem:[#allocation2 + $0xe8] sm:$0xff] %v717
    %750 = vst [vmem:[#allocation2 + $0xf0] sm:$0xff] %v718
    %751 = vst [vmem:[#allocation2 + $0xf8] sm:$0xff] %v719
    %752 = vadd.xlane.f32.xlu0 %v688
    %v753 = vpop.xlane.xlu0 %752
    %754 = vadd.xlane.f32.xlu0 %v689
    %v755 = vpop.xlane.xlu0 %754
    %756 = vadd.xlane.f32.xlu0 %v690
    %v757 = vpop.xlane.xlu0 %756
    %758 = vadd.xlane.f32.xlu0 %v691
    %v759 = vpop.xlane.xlu0 %758
    %760 = vadd.xlane.f32.xlu0 %v692
    %v761 = vpop.xlane.xlu0 %760
    %762 = vadd.xlane.f32.xlu0 %v693
    %v763 = vpop.xlane.xlu0 %762
    %764 = vadd.xlane.f32.xlu0 %v694
    %v765 = vpop.xlane.xlu0 %764
    %766 = vadd.xlane.f32.xlu0 %v695
    %v767 = vpop.xlane.xlu0 %766
    %768 = vadd.xlane.f32.xlu0 %v696
    %v769 = vpop.xlane.xlu0 %768
    %770 = vadd.xlane.f32.xlu0 %v697
    %v771 = vpop.xlane.xlu0 %770
    %772 = vadd.xlane.f32.xlu0 %v698
    %v773 = vpop.xlane.xlu0 %772
    %774 = vadd.xlane.f32.xlu0 %v699
    %v775 = vpop.xlane.xlu0 %774
    %776 = vadd.xlane.f32.xlu0 %v700
    %v777 = vpop.xlane.xlu0 %776
    %778 = vadd.xlane.f32.xlu0 %v701
    %v779 = vpop.xlane.xlu0 %778
    %780 = vadd.xlane.f32.xlu0 %v702
    %v781 = vpop.xlane.xlu0 %780
    %782 = vadd.xlane.f32.xlu0 %v703
    %v783 = vpop.xlane.xlu0 %782
    %784 = vadd.xlane.f32.xlu0 %v704
    %v785 = vpop.xlane.xlu0 %784
    %786 = vadd.xlane.f32.xlu0 %v705
    %v787 = vpop.xlane.xlu0 %786
    %788 = vadd.xlane.f32.xlu0 %v706
    %v789 = vpop.xlane.xlu0 %788
    %790 = vadd.xlane.f32.xlu0 %v707
    %v791 = vpop.xlane.xlu0 %790
    %792 = vadd.xlane.f32.xlu0 %v708
    %v793 = vpop.xlane.xlu0 %792
    %794 = vadd.xlane.f32.xlu0 %v709
    %v795 = vpop.xlane.xlu0 %794
    %796 = vadd.xlane.f32.xlu0 %v710
    %v797 = vpop.xlane.xlu0 %796
    %798 = vadd.xlane.f32.xlu0 %v711
    %v799 = vpop.xlane.xlu0 %798
    %800 = vadd.xlane.f32.xlu0 %v712
    %v801 = vpop.xlane.xlu0 %800
    %802 = vadd.xlane.f32.xlu0 %v713
    %v803 = vpop.xlane.xlu0 %802
    %804 = vadd.xlane.f32.xlu0 %v714
    %v805 = vpop.xlane.xlu0 %804
    %806 = vadd.xlane.f32.xlu0 %v715
    %v807 = vpop.xlane.xlu0 %806
    %808 = vadd.xlane.f32.xlu0 %v716
    %v809 = vpop.xlane.xlu0 %808
    %810 = vadd.xlane.f32.xlu0 %v717
    %v811 = vpop.xlane.xlu0 %810
    %812 = vadd.xlane.f32.xlu0 %v718
    %v813 = vpop.xlane.xlu0 %812
    %814 = vadd.xlane.f32.xlu0 %v719
    %v815 = vpop.xlane.xlu0 %814
    %v816 = vmul.f32 %v753, 0.125
    %v817 = vmul.f32 %v755, 0.125
    %v818 = vmul.f32 %v757, 0.125
    %v819 = vmul.f32 %v759, 0.125
    %v820 = vmul.f32 %v761, 0.125
    %v821 = vmul.f32 %v763, 0.125
    %v822 = vmul.f32 %v765, 0.125
    %v823 = vmul.f32 %v767, 0.125
    %v824 = vmul.f32 %v769, 0.125
    %v825 = vmul.f32 %v771, 0.125
    %v826 = vmul.f32 %v773, 0.125
    %v827 = vmul.f32 %v775, 0.125
    %v828 = vmul.f32 %v777, 0.125
    %v829 = vmul.f32 %v779, 0.125
    %v830 = vmul.f32 %v781, 0.125
    %v831 = vmul.f32 %v783, 0.125
    %v832 = vmul.f32 %v785, 0.125
    %v833 = vmul.f32 %v787, 0.125
    %v834 = vmul.f32 %v789, 0.125
    %v835 = vmul.f32 %v791, 0.125
    %v836 = vmul.f32 %v793, 0.125
    %v837 = vmul.f32 %v795, 0.125
    %v838 = vmul.f32 %v797, 0.125
    %v839 = vmul.f32 %v799, 0.125
    %v840 = vmul.f32 %v801, 0.125
    %v841 = vmul.f32 %v803, 0.125
    %v842 = vmul.f32 %v805, 0.125
    %v843 = vmul.f32 %v807, 0.125
    %v844 = vmul.f32 %v809, 0.125
    %v845 = vmul.f32 %v811, 0.125
    %v846 = vmul.f32 %v813, 0.125
    %v847 = vmul.f32 %v815, 0.125
    %v848 = vmul.f32 %v816, %v816
    %v849 = vmul.f32 %v817, %v817
    %v850 = vmul.f32 %v818, %v818
    %v851 = vmul.f32 %v819, %v819
    %v852 = vmul.f32 %v820, %v820
    %v853 = vmul.f32 %v821, %v821
    %v854 = vmul.f32 %v822, %v822
    %v855 = vmul.f32 %v823, %v823
    %v856 = vmul.f32 %v824, %v824
    %v857 = vmul.f32 %v825, %v825
    %v858 = vmul.f32 %v826, %v826
    %v859 = vmul.f32 %v827, %v827
    %v860 = vmul.f32 %v828, %v828
    %v861 = vmul.f32 %v829, %v829
    %v862 = vmul.f32 %v830, %v830
    %v863 = vmul.f32 %v831, %v831
    %v864 = vmul.f32 %v832, %v832
    %v865 = vmul.f32 %v833, %v833
    %v866 = vmul.f32 %v834, %v834
    %v867 = vmul.f32 %v835, %v835
    %v868 = vmul.f32 %v836, %v836
    %v869 = vmul.f32 %v837, %v837
    %v870 = vmul.f32 %v838, %v838
    %v871 = vmul.f32 %v839, %v839
    %v872 = vmul.f32 %v840, %v840
    %v873 = vmul.f32 %v841, %v841
    %v874 = vmul.f32 %v842, %v842
    %v875 = vmul.f32 %v843, %v843
    %v876 = vmul.f32 %v844, %v844
    %v877 = vmul.f32 %v845, %v845
    %v878 = vmul.f32 %v846, %v846
    %v879 = vmul.f32 %v847, %v847
    %v912 = vlaneseq
    %v913 = vand.u32 %v912, 127
    %v914 = vlaneseq
    %v915 = vshrl.u32 %v914, 7
    %v916 = vsub.s32 %v913, %v915
    %v917 = vrot.slane %v848, %v916
    %v918 = vadd.s32 %v913, 4294967288
    %v919 = vlaneseq
    %v920 = vshrl.u32 %v919, 7
    %v921 = vsub.s32 %v918, %v920
    %v922 = vrot.slane %v849, %v921
    %vm923 = vcmask 130112
    %v924 = vsel %vm923, %v922, %v917
    %v925 = vlaneseq
    %v926 = vshrl.u32 %v925, 7
    %v927 = vsub.s32 %v913, %v926
    %v928 = vrot.slane %v850, %v927
    %v929 = vlaneseq
    %v930 = vshrl.u32 %v929, 7
    %v931 = vsub.s32 %v918, %v930
    %v932 = vrot.slane %v851, %v931
    %v933 = vsel %vm923, %v932, %v928
    %v934 = vlaneseq
    %v935 = vshrl.u32 %v934, 7
    %v936 = vsub.s32 %v913, %v935
    %v937 = vrot.slane %v852, %v936
    %v938 = vlaneseq
    %v939 = vshrl.u32 %v938, 7
    %v940 = vsub.s32 %v918, %v939
    %v941 = vrot.slane %v853, %v940
    %v942 = vsel %vm923, %v941, %v937
    %v943 = vlaneseq
    %v944 = vshrl.u32 %v943, 7
    %v945 = vsub.s32 %v913, %v944
    %v946 = vrot.slane %v854, %v945
    %v947 = vlaneseq
    %v948 = vshrl.u32 %v947, 7
    %v949 = vsub.s32 %v918, %v948
    %v950 = vrot.slane %v855, %v949
    %v951 = vsel %vm923, %v950, %v946
    %v952 = vlaneseq
    %v953 = vshrl.u32 %v952, 7
    %v954 = vsub.s32 %v913, %v953
    %v955 = vrot.slane %v856, %v954
    %v956 = vlaneseq
    %v957 = vshrl.u32 %v956, 7
    %v958 = vsub.s32 %v918, %v957
    %v959 = vrot.slane %v857, %v958
    %v960 = vsel %vm923, %v959, %v955
    %v961 = vlaneseq
    %v962 = vshrl.u32 %v961, 7
    %v963 = vsub.s32 %v913, %v962
    %v964 = vrot.slane %v858, %v963
    %v965 = vlaneseq
    %v966 = vshrl.u32 %v965, 7
    %v967 = vsub.s32 %v918, %v966
    %v968 = vrot.slane %v859, %v967
    %v969 = vsel %vm923, %v968, %v964
    %v970 = vlaneseq
    %v971 = vshrl.u32 %v970, 7
    %v972 = vsub.s32 %v913, %v971
    %v973 = vrot.slane %v860, %v972
    %v974 = vlaneseq
    %v975 = vshrl.u32 %v974, 7
    %v976 = vsub.s32 %v918, %v975
    %v977 = vrot.slane %v861, %v976
    %v978 = vsel %vm923, %v977, %v973
    %v979 = vlaneseq
    %v980 = vshrl.u32 %v979, 7
    %v981 = vsub.s32 %v913, %v980
    %v982 = vrot.slane %v862, %v981
    %v983 = vlaneseq
    %v984 = vshrl.u32 %v983, 7
    %v985 = vsub.s32 %v918, %v984
    %v986 = vrot.slane %v863, %v985
    %v987 = vsel %vm923, %v986, %v982
    %v988 = vlaneseq
    %v989 = vshrl.u32 %v988, 7
    %v990 = vsub.s32 %v913, %v989
    %v991 = vrot.slane %v864, %v990
    %v992 = vlaneseq
    %v993 = vshrl.u32 %v992, 7
    %v994 = vsub.s32 %v918, %v993
    %v995 = vrot.slane %v865, %v994
    %v996 = vsel %vm923, %v995, %v991
    %v997 = vlaneseq
    %v998 = vshrl.u32 %v997, 7
    %v999 = vsub.s32 %v913, %v998
    %v1000 = vrot.slane %v866, %v999
    %v1001 = vlaneseq
    %v1002 = vshrl.u32 %v1001, 7
    %v1003 = vsub.s32 %v918, %v1002
    %v1004 = vrot.slane %v867, %v1003
    %v1005 = vsel %vm923, %v1004, %v1000
    %v1006 = vlaneseq
    %v1007 = vshrl.u32 %v1006, 7
    %v1008 = vsub.s32 %v913, %v1007
    %v1009 = vrot.slane %v868, %v1008
    %v1010 = vlaneseq
    %v1011 = vshrl.u32 %v1010, 7
    %v1012 = vsub.s32 %v918, %v1011
    %v1013 = vrot.slane %v869, %v1012
    %v1014 = vsel %vm923, %v1013, %v1009
    %v1015 = vlaneseq
    %v1016 = vshrl.u32 %v1015, 7
    %v1017 = vsub.s32 %v913, %v1016
    %v1018 = vrot.slane %v870, %v1017
    %v1019 = vlaneseq
    %v1020 = vshrl.u32 %v1019, 7
    %v1021 = vsub.s32 %v918, %v1020
    %v1022 = vrot.slane %v871, %v1021
    %v1023 = vsel %vm923, %v1022, %v1018
    %v1024 = vlaneseq
    %v1025 = vshrl.u32 %v1024, 7
    %v1026 = vsub.s32 %v913, %v1025
    %v1027 = vrot.slane %v872, %v1026
    %v1028 = vlaneseq
    %v1029 = vshrl.u32 %v1028, 7
    %v1030 = vsub.s32 %v918, %v1029
    %v1031 = vrot.slane %v873, %v1030
    %v1032 = vsel %vm923, %v1031, %v1027
    %v1033 = vlaneseq
    %v1034 = vshrl.u32 %v1033, 7
    %v1035 = vsub.s32 %v913, %v1034
    %v1036 = vrot.slane %v874, %v1035
    %v1037 = vlaneseq
    %v1038 = vshrl.u32 %v1037, 7
    %v1039 = vsub.s32 %v918, %v1038
    %v1040 = vrot.slane %v875, %v1039
    %v1041 = vsel %vm923, %v1040, %v1036
    %v1042 = vlaneseq
    %v1043 = vshrl.u32 %v1042, 7
    %v1044 = vsub.s32 %v913, %v1043
    %v1045 = vrot.slane %v876, %v1044
    %v1046 = vlaneseq
    %v1047 = vshrl.u32 %v1046, 7
    %v1048 = vsub.s32 %v918, %v1047
    %v1049 = vrot.slane %v877, %v1048
    %v1050 = vsel %vm923, %v1049, %v1045
    %v1051 = vlaneseq
    %v1052 = vshrl.u32 %v1051, 7
    %v1053 = vsub.s32 %v913, %v1052
    %v1054 = vrot.slane %v878, %v1053
    %v1055 = vlaneseq
    %v1056 = vshrl.u32 %v1055, 7
    %v1057 = vsub.s32 %v918, %v1056
    %v1058 = vrot.slane %v879, %v1057
    %v1059 = vsel %vm923, %v1058, %v1054
    %vm1060 = vcmask 1041409
    %v1061 = vsel %vm1060, %v933, %v924
    %vm1062 = vcmask 1042434
    %v1063 = vsel %vm1062, %v942, %v1061
    %vm1064 = vcmask 1043459
    %v1065 = vsel %vm1064, %v951, %v1063
    %vm1066 = vcmask 1044484
    %v1067 = vsel %vm1066, %v960, %v1065
    %vm1068 = vcmask 1045509
    %v1069 = vsel %vm1068, %v969, %v1067
    %vm1070 = vcmask 1046534
    %v1071 = vsel %vm1070, %v978, %v1069
    %vm1072 = vcmask 1047559
    %v1073 = vsel %vm1072, %v987, %v1071
    %v1074 = vsel %vm1060, %v1005, %v996
    %v1075 = vsel %vm1062, %v1014, %v1074
    %v1076 = vsel %vm1064, %v1023, %v1075
    %v1077 = vsel %vm1066, %v1032, %v1076
    %v1078 = vsel %vm1068, %v1041, %v1077
    %v1079 = vsel %vm1070, %v1050, %v1078
    %v1080 = vsel %vm1072, %v1059, %v1079
    %vm1083 = vcmask 130048
    %v1084 = vsel %vm1083, %v1073, 0.0
    %1085 = vadd.xlane.f32.xlu0 %v1084
    %v1086 = vpop.xlane.xlu0 %1085
    %v1087 = vsel %vm1083, %v1080, 0.0
    %1088 = vadd.xlane.f32.xlu0 %v1087
    %v1089 = vpop.xlane.xlu0 %1088
    %v1090 = vadd.f32 %v1086, 1.0
    %v1091 = vadd.f32 %v1089, 1.0
    %v1092 = vrsqrt.pop %v1086
    %v1093 = vmul.f32 %v1086, %v1092
    %vm1094 = vcmp.eq.f32.partialorder %v1086, inf
    %v1095 = vsel %vm1094, %v1086, %v1093
    %vm1096 = vcmp.eq.f32.partialorder %v1086, 0.0
    %v1097 = vand.u32 %v1086, 2147483648
    %v1098 = vsel %vm1096, %v1097, %v1095
    %v1099 = vrsqrt.pop %v1089
    %v1100 = vmul.f32 %v1089, %v1099
    %vm1101 = vcmp.eq.f32.partialorder %v1089, inf
    %v1102 = vsel %vm1101, %v1089, %v1100
    %vm1103 = vcmp.eq.f32.partialorder %v1089, 0.0
    %v1104 = vand.u32 %v1089, 2147483648
    %v1105 = vsel %vm1103, %v1104, %v1102
    %v1106 = vadd.f32 %v1098, 1e-08
    %v1107 = vadd.f32 %v1105, 1e-08
    %v1108 = vmul.f32 %v1090, %v1106
    %v1109 = vmul.f32 %v1091, %v1107
    %v1110 = vrcp.pop %v1108
    %v1111 = vmul.f32 %v1086, %v1110
    %v1112 = vrcp.pop %v1109
    %v1113 = vmul.f32 %v1089, %v1112
    %v1116 = vlaneseq
    %v1117 = vshrl.u32 %v1116, 7
    %v1118 = vsub.s32 0, %v1117
    %v1119 = vrot.slane %v1111, %v1118
    %v1120 = vlaneseq
    %v1121 = vshrl.u32 %v1120, 7
    %v1122 = vsub.s32 1, %v1121
    %v1123 = vrot.slane %v1111, %v1122
    %v1124 = vlaneseq
    %v1125 = vshrl.u32 %v1124, 7
    %v1126 = vsub.s32 2, %v1125
    %v1127 = vrot.slane %v1111, %v1126
    %v1128 = vlaneseq
    %v1129 = vshrl.u32 %v1128, 7
    %v1130 = vsub.s32 3, %v1129
    %v1131 = vrot.slane %v1111, %v1130
    %v1132 = vlaneseq
    %v1133 = vshrl.u32 %v1132, 7
    %v1134 = vsub.s32 4, %v1133
    %v1135 = vrot.slane %v1111, %v1134
    %v1136 = vlaneseq
    %v1137 = vshrl.u32 %v1136, 7
    %v1138 = vsub.s32 5, %v1137
    %v1139 = vrot.slane %v1111, %v1138
    %v1140 = vlaneseq
    %v1141 = vshrl.u32 %v1140, 7
    %v1142 = vsub.s32 6, %v1141
    %v1143 = vrot.slane %v1111, %v1142
    %v1144 = vlaneseq
    %v1145 = vshrl.u32 %v1144, 7
    %v1146 = vsub.s32 7, %v1145
    %v1147 = vrot.slane %v1111, %v1146
    %v1148 = vlaneseq
    %v1149 = vshrl.u32 %v1148, 7
    %v1150 = vsub.s32 0, %v1149
    %v1151 = vrot.slane %v1113, %v1150
    %v1152 = vlaneseq
    %v1153 = vshrl.u32 %v1152, 7
    %v1154 = vsub.s32 1, %v1153
    %v1155 = vrot.slane %v1113, %v1154
    %v1156 = vlaneseq
    %v1157 = vshrl.u32 %v1156, 7
    %v1158 = vsub.s32 2, %v1157
    %v1159 = vrot.slane %v1113, %v1158
    %v1160 = vlaneseq
    %v1161 = vshrl.u32 %v1160, 7
    %v1162 = vsub.s32 3, %v1161
    %v1163 = vrot.slane %v1113, %v1162
    %v1164 = vlaneseq
    %v1165 = vshrl.u32 %v1164, 7
    %v1166 = vsub.s32 4, %v1165
    %v1167 = vrot.slane %v1113, %v1166
    %v1168 = vlaneseq
    %v1169 = vshrl.u32 %v1168, 7
    %v1170 = vsub.s32 5, %v1169
    %v1171 = vrot.slane %v1113, %v1170
    %v1172 = vlaneseq
    %v1173 = vshrl.u32 %v1172, 7
    %v1174 = vsub.s32 6, %v1173
    %v1175 = vrot.slane %v1113, %v1174
    %v1176 = vlaneseq
    %v1177 = vshrl.u32 %v1176, 7
    %v1178 = vsub.s32 7, %v1177
    %v1179 = vrot.slane %v1113, %v1178
    %v1196 = vmul.f32 %v816, %v1119
    %v1197 = vmul.f32 %v817, %v1119
    %v1198 = vmul.f32 %v818, %v1123
    %v1199 = vmul.f32 %v819, %v1123
    %v1200 = vmul.f32 %v820, %v1127
    %v1201 = vmul.f32 %v821, %v1127
    %v1202 = vmul.f32 %v822, %v1131
    %v1203 = vmul.f32 %v823, %v1131
    %v1204 = vmul.f32 %v824, %v1135
    %v1205 = vmul.f32 %v825, %v1135
    %v1206 = vmul.f32 %v826, %v1139
    %v1207 = vmul.f32 %v827, %v1139
    %v1208 = vmul.f32 %v828, %v1143
    %v1209 = vmul.f32 %v829, %v1143
    %v1210 = vmul.f32 %v830, %v1147
    %v1211 = vmul.f32 %v831, %v1147
    %v1212 = vmul.f32 %v832, %v1151
    %v1213 = vmul.f32 %v833, %v1151
    %v1214 = vmul.f32 %v834, %v1155
    %v1215 = vmul.f32 %v835, %v1155
    %v1216 = vmul.f32 %v836, %v1159
    %v1217 = vmul.f32 %v837, %v1159
    %v1218 = vmul.f32 %v838, %v1163
    %v1219 = vmul.f32 %v839, %v1163
    %v1220 = vmul.f32 %v840, %v1167
    %v1221 = vmul.f32 %v841, %v1167
    %v1222 = vmul.f32 %v842, %v1171
    %v1223 = vmul.f32 %v843, %v1171
    %v1224 = vmul.f32 %v844, %v1175
    %v1225 = vmul.f32 %v845, %v1175
    %v1226 = vmul.f32 %v846, %v1179
    %v1227 = vmul.f32 %v847, %v1179
    %1229 = vset.pattern.permute.xlu0 0
    %1230 = vperm.xlu0 %1229, %v1196
    %v1231 = vpop.permute.xlu0 %1230
    %1234 = vset.pattern.permute.xlu0 0
    %1235 = vperm.xlu0 %1234, %v1197
    %v1236 = vpop.permute.xlu0 %1235
    %1239 = vset.pattern.permute.xlu0 0
    %1240 = vperm.xlu0 %1239, %v1198
    %v1241 = vpop.permute.xlu0 %1240
    %1244 = vset.pattern.permute.xlu0 0
    %1245 = vperm.xlu0 %1244, %v1199
    %v1246 = vpop.permute.xlu0 %1245
    %1249 = vset.pattern.permute.xlu0 0
    %1250 = vperm.xlu0 %1249, %v1200
    %v1251 = vpop.permute.xlu0 %1250
    %1254 = vset.pattern.permute.xlu0 0
    %1255 = vperm.xlu0 %1254, %v1201
    %v1256 = vpop.permute.xlu0 %1255
    %1259 = vset.pattern.permute.xlu0 0
    %1260 = vperm.xlu0 %1259, %v1202
    %v1261 = vpop.permute.xlu0 %1260
    %1264 = vset.pattern.permute.xlu0 0
    %1265 = vperm.xlu0 %1264, %v1203
    %v1266 = vpop.permute.xlu0 %1265
    %1269 = vset.pattern.permute.xlu0 0
    %1270 = vperm.xlu0 %1269, %v1204
    %v1271 = vpop.permute.xlu0 %1270
    %1274 = vset.pattern.permute.xlu0 0
    %1275 = vperm.xlu0 %1274, %v1205
    %v1276 = vpop.permute.xlu0 %1275
    %1279 = vset.pattern.permute.xlu0 0
    %1280 = vperm.xlu0 %1279, %v1206
    %v1281 = vpop.permute.xlu0 %1280
    %1284 = vset.pattern.permute.xlu0 0
    %1285 = vperm.xlu0 %1284, %v1207
    %v1286 = vpop.permute.xlu0 %1285
    %1289 = vset.pattern.permute.xlu0 0
    %1290 = vperm.xlu0 %1289, %v1208
    %v1291 = vpop.permute.xlu0 %1290
    %1294 = vset.pattern.permute.xlu0 0
    %1295 = vperm.xlu0 %1294, %v1209
    %v1296 = vpop.permute.xlu0 %1295
    %1299 = vset.pattern.permute.xlu0 0
    %1300 = vperm.xlu0 %1299, %v1210
    %v1301 = vpop.permute.xlu0 %1300
    %1304 = vset.pattern.permute.xlu0 0
    %1305 = vperm.xlu0 %1304, %v1211
    %v1306 = vpop.permute.xlu0 %1305
    %1309 = vset.pattern.permute.xlu0 0
    %1310 = vperm.xlu0 %1309, %v1212
    %v1311 = vpop.permute.xlu0 %1310
    %1314 = vset.pattern.permute.xlu0 0
    %1315 = vperm.xlu0 %1314, %v1213
    %v1316 = vpop.permute.xlu0 %1315
    %1319 = vset.pattern.permute.xlu0 0
    %1320 = vperm.xlu0 %1319, %v1214
    %v1321 = vpop.permute.xlu0 %1320
    %1324 = vset.pattern.permute.xlu0 0
    %1325 = vperm.xlu0 %1324, %v1215
    %v1326 = vpop.permute.xlu0 %1325
    %1329 = vset.pattern.permute.xlu0 0
    %1330 = vperm.xlu0 %1329, %v1216
    %v1331 = vpop.permute.xlu0 %1330
    %1334 = vset.pattern.permute.xlu0 0
    %1335 = vperm.xlu0 %1334, %v1217
    %v1336 = vpop.permute.xlu0 %1335
    %1339 = vset.pattern.permute.xlu0 0
    %1340 = vperm.xlu0 %1339, %v1218
    %v1341 = vpop.permute.xlu0 %1340
    %1344 = vset.pattern.permute.xlu0 0
    %1345 = vperm.xlu0 %1344, %v1219
    %v1346 = vpop.permute.xlu0 %1345
    %1349 = vset.pattern.permute.xlu0 0
    %1350 = vperm.xlu0 %1349, %v1220
    %v1351 = vpop.permute.xlu0 %1350
    %1354 = vset.pattern.permute.xlu0 0
    %1355 = vperm.xlu0 %1354, %v1221
    %v1356 = vpop.permute.xlu0 %1355
    %1359 = vset.pattern.permute.xlu0 0
    %1360 = vperm.xlu0 %1359, %v1222
    %v1361 = vpop.permute.xlu0 %1360
    %1364 = vset.pattern.permute.xlu0 0
    %1365 = vperm.xlu0 %1364, %v1223
    %v1366 = vpop.permute.xlu0 %1365
    %1369 = vset.pattern.permute.xlu0 0
    %1370 = vperm.xlu0 %1369, %v1224
    %v1371 = vpop.permute.xlu0 %1370
    %1374 = vset.pattern.permute.xlu0 0
    %1375 = vperm.xlu0 %1374, %v1225
    %v1376 = vpop.permute.xlu0 %1375
    %1379 = vset.pattern.permute.xlu0 0
    %1380 = vperm.xlu0 %1379, %v1226
    %v1381 = vpop.permute.xlu0 %1380
    %1384 = vset.pattern.permute.xlu0 0
    %1385 = vperm.xlu0 %1384, %v1227
    %v1386 = vpop.permute.xlu0 %1385
    %v1388 = vmul.f32 %v688, %v1231
    %v1389 = vmul.f32 %v689, %v1236
    %v1390 = vmul.f32 %v690, %v1241
    %v1391 = vmul.f32 %v691, %v1246
    %v1392 = vmul.f32 %v692, %v1251
    %v1393 = vmul.f32 %v693, %v1256
    %v1394 = vmul.f32 %v694, %v1261
    %v1395 = vmul.f32 %v695, %v1266
    %v1396 = vmul.f32 %v696, %v1271
    %v1397 = vmul.f32 %v697, %v1276
    %v1398 = vmul.f32 %v698, %v1281
    %v1399 = vmul.f32 %v699, %v1286
    %v1400 = vmul.f32 %v700, %v1291
    %v1401 = vmul.f32 %v701, %v1296
    %v1402 = vmul.f32 %v702, %v1301
    %v1403 = vmul.f32 %v703, %v1306
    %v1404 = vmul.f32 %v704, %v1311
    %v1405 = vmul.f32 %v705, %v1316
    %v1406 = vmul.f32 %v706, %v1321
    %v1407 = vmul.f32 %v707, %v1326
    %v1408 = vmul.f32 %v708, %v1331
    %v1409 = vmul.f32 %v709, %v1336
    %v1410 = vmul.f32 %v710, %v1341
    %v1411 = vmul.f32 %v711, %v1346
    %v1412 = vmul.f32 %v712, %v1351
    %v1413 = vmul.f32 %v713, %v1356
    %v1414 = vmul.f32 %v714, %v1361
    %v1415 = vmul.f32 %v715, %v1366
    %v1416 = vmul.f32 %v716, %v1371
    %v1417 = vmul.f32 %v717, %v1376
    %v1418 = vmul.f32 %v718, %v1381
    %v1419 = vmul.f32 %v719, %v1386
    %v1420 = vadd.f32 %v1388, %v1389
    %v1421 = vrot.slane %v1420, 4
    %v1422 = vadd.f32 %v1420, %v1421
    %v1423 = vrot.slane %v1422, 2
    %v1424 = vadd.f32 %v1422, %v1423
    %v1425 = vrot.slane %v1424, 1
    %v1426 = vadd.f32 %v1424, %v1425
    %v1427 = vadd.f32 %v1390, %v1391
    %v1428 = vrot.slane %v1427, 4
    %v1429 = vadd.f32 %v1427, %v1428
    %v1430 = vrot.slane %v1429, 2
    %v1431 = vadd.f32 %v1429, %v1430
    %v1432 = vrot.slane %v1431, 1
    %v1433 = vadd.f32 %v1431, %v1432
    %v1434 = vadd.f32 %v1392, %v1393
    %v1435 = vrot.slane %v1434, 4
    %v1436 = vadd.f32 %v1434, %v1435
    %v1437 = vrot.slane %v1436, 2
    %v1438 = vadd.f32 %v1436, %v1437
    %v1439 = vrot.slane %v1438, 1
    %v1440 = vadd.f32 %v1438, %v1439
    %v1441 = vadd.f32 %v1394, %v1395
    %v1442 = vrot.slane %v1441, 4
    %v1443 = vadd.f32 %v1441, %v1442
    %v1444 = vrot.slane %v1443, 2
    %v1445 = vadd.f32 %v1443, %v1444
    %v1446 = vrot.slane %v1445, 1
    %v1447 = vadd.f32 %v1445, %v1446
    %v1448 = vadd.f32 %v1396, %v1397
    %v1449 = vrot.slane %v1448, 4
    %v1450 = vadd.f32 %v1448, %v1449
    %v1451 = vrot.slane %v1450, 2
    %v1452 = vadd.f32 %v1450, %v1451
    %v1453 = vrot.slane %v1452, 1
    %v1454 = vadd.f32 %v1452, %v1453
    %v1455 = vadd.f32 %v1398, %v1399
    %v1456 = vrot.slane %v1455, 4
    %v1457 = vadd.f32 %v1455, %v1456
    %v1458 = vrot.slane %v1457, 2
    %v1459 = vadd.f32 %v1457, %v1458
    %v1460 = vrot.slane %v1459, 1
    %v1461 = vadd.f32 %v1459, %v1460
    %v1462 = vadd.f32 %v1400, %v1401
    %v1463 = vrot.slane %v1462, 4
    %v1464 = vadd.f32 %v1462, %v1463
    %v1465 = vrot.slane %v1464, 2
    %v1466 = vadd.f32 %v1464, %v1465
    %v1467 = vrot.slane %v1466, 1
    %v1468 = vadd.f32 %v1466, %v1467
    %v1469 = vadd.f32 %v1402, %v1403
    %v1470 = vrot.slane %v1469, 4
    %v1471 = vadd.f32 %v1469, %v1470
    %v1472 = vrot.slane %v1471, 2
    %v1473 = vadd.f32 %v1471, %v1472
    %v1474 = vrot.slane %v1473, 1
    %v1475 = vadd.f32 %v1473, %v1474
    %v1476 = vadd.f32 %v1404, %v1405
    %v1477 = vrot.slane %v1476, 4
    %v1478 = vadd.f32 %v1476, %v1477
    %v1479 = vrot.slane %v1478, 2
    %v1480 = vadd.f32 %v1478, %v1479
    %v1481 = vrot.slane %v1480, 1
    %v1482 = vadd.f32 %v1480, %v1481
    %v1483 = vadd.f32 %v1406, %v1407
    %v1484 = vrot.slane %v1483, 4
    %v1485 = vadd.f32 %v1483, %v1484
    %v1486 = vrot.slane %v1485, 2
    %v1487 = vadd.f32 %v1485, %v1486
    %v1488 = vrot.slane %v1487, 1
    %v1489 = vadd.f32 %v1487, %v1488
    %v1490 = vadd.f32 %v1408, %v1409
    %v1491 = vrot.slane %v1490, 4
    %v1492 = vadd.f32 %v1490, %v1491
    %v1493 = vrot.slane %v1492, 2
    %v1494 = vadd.f32 %v1492, %v1493
    %v1495 = vrot.slane %v1494, 1
    %v1496 = vadd.f32 %v1494, %v1495
    %v1497 = vadd.f32 %v1410, %v1411
    %v1498 = vrot.slane %v1497, 4
    %v1499 = vadd.f32 %v1497, %v1498
    %v1500 = vrot.slane %v1499, 2
    %v1501 = vadd.f32 %v1499, %v1500
    %v1502 = vrot.slane %v1501, 1
    %v1503 = vadd.f32 %v1501, %v1502
    %v1504 = vadd.f32 %v1412, %v1413
    %v1505 = vrot.slane %v1504, 4
    %v1506 = vadd.f32 %v1504, %v1505
    %v1507 = vrot.slane %v1506, 2
    %v1508 = vadd.f32 %v1506, %v1507
    %v1509 = vrot.slane %v1508, 1
    %v1510 = vadd.f32 %v1508, %v1509
    %v1511 = vadd.f32 %v1414, %v1415
    %v1512 = vrot.slane %v1511, 4
    %v1513 = vadd.f32 %v1511, %v1512
    %v1514 = vrot.slane %v1513, 2
    %v1515 = vadd.f32 %v1513, %v1514
    %v1516 = vrot.slane %v1515, 1
    %v1517 = vadd.f32 %v1515, %v1516
    %v1518 = vadd.f32 %v1416, %v1417
    %v1519 = vrot.slane %v1518, 4
    %v1520 = vadd.f32 %v1518, %v1519
    %v1521 = vrot.slane %v1520, 2
    %v1522 = vadd.f32 %v1520, %v1521
    %v1523 = vrot.slane %v1522, 1
    %v1524 = vadd.f32 %v1522, %v1523
    %v1525 = vadd.f32 %v1418, %v1419
    %v1526 = vrot.slane %v1525, 4
    %v1527 = vadd.f32 %v1525, %v1526
    %v1528 = vrot.slane %v1527, 2
    %v1529 = vadd.f32 %v1527, %v1528
    %v1530 = vrot.slane %v1529, 1
    %v1531 = vadd.f32 %v1529, %v1530
    %v1532 = vld [vmem:[#allocation2] sm:$0xff]
    %v1533 = vld [vmem:[#allocation2 + $0x8] sm:$0xff]
    %v1534 = vld [vmem:[#allocation2 + $0x10] sm:$0xff]
    %v1535 = vld [vmem:[#allocation2 + $0x18] sm:$0xff]
    %v1536 = vld [vmem:[#allocation2 + $0x20] sm:$0xff]
    %v1537 = vld [vmem:[#allocation2 + $0x28] sm:$0xff]
    %v1538 = vld [vmem:[#allocation2 + $0x30] sm:$0xff]
    %v1539 = vld [vmem:[#allocation2 + $0x38] sm:$0xff]
    %v1540 = vld [vmem:[#allocation2 + $0x40] sm:$0xff]
    %v1541 = vld [vmem:[#allocation2 + $0x48] sm:$0xff]
    %v1542 = vld [vmem:[#allocation2 + $0x50] sm:$0xff]
    %v1543 = vld [vmem:[#allocation2 + $0x58] sm:$0xff]
    %v1544 = vld [vmem:[#allocation2 + $0x60] sm:$0xff]
    %v1545 = vld [vmem:[#allocation2 + $0x68] sm:$0xff]
    %v1546 = vld [vmem:[#allocation2 + $0x70] sm:$0xff]
    %v1547 = vld [vmem:[#allocation2 + $0x78] sm:$0xff]
    %v1548 = vld [vmem:[#allocation2 + $0x80] sm:$0xff]
    %v1549 = vld [vmem:[#allocation2 + $0x88] sm:$0xff]
    %v1550 = vld [vmem:[#allocation2 + $0x90] sm:$0xff]
    %v1551 = vld [vmem:[#allocation2 + $0x98] sm:$0xff]
    %v1552 = vld [vmem:[#allocation2 + $0xa0] sm:$0xff]
    %v1553 = vld [vmem:[#allocation2 + $0xa8] sm:$0xff]
    %v1554 = vld [vmem:[#allocation2 + $0xb0] sm:$0xff]
    %v1555 = vld [vmem:[#allocation2 + $0xb8] sm:$0xff]
    %v1556 = vld [vmem:[#allocation2 + $0xc0] sm:$0xff]
    %v1557 = vld [vmem:[#allocation2 + $0xc8] sm:$0xff]
    %v1558 = vld [vmem:[#allocation2 + $0xd0] sm:$0xff]
    %v1559 = vld [vmem:[#allocation2 + $0xd8] sm:$0xff]
    %v1560 = vld [vmem:[#allocation2 + $0xe0] sm:$0xff]
    %v1561 = vld [vmem:[#allocation2 + $0xe8] sm:$0xff]
    %v1562 = vld [vmem:[#allocation2 + $0xf0] sm:$0xff]
    %v1563 = vld [vmem:[#allocation2 + $0xf8] sm:$0xff]
    %v1564 = vmax.f32 %v1426, %v1440
    %v1565 = vmax.f32 %v1433, %v1447
    %v1566 = vmax.f32 %v1564, %v1454
    %v1567 = vmax.f32 %v1565, %v1461
    %v1568 = vmax.f32 %v1566, %v1468
    %v1569 = vmax.f32 %v1567, %v1475
    %v1570 = vmax.f32 %v1568, %v1569
    %v1571 = vmax.f32 %v1482, %v1496
    %v1572 = vmax.f32 %v1489, %v1503
    %v1573 = vmax.f32 %v1571, %v1510
    %v1574 = vmax.f32 %v1572, %v1517
    %v1575 = vmax.f32 %v1573, %v1524
    %v1576 = vmax.f32 %v1574, %v1531
    %v1577 = vmax.f32 %v1575, %v1576
    %v1578 = vsub.f32 %v1426, %v1570
    %v1579 = vsub.f32 %v1433, %v1570
    %v1580 = vsub.f32 %v1440, %v1570
    %v1581 = vsub.f32 %v1447, %v1570
    %v1582 = vsub.f32 %v1454, %v1570
    %v1583 = vsub.f32 %v1461, %v1570
    %v1584 = vsub.f32 %v1468, %v1570
    %v1585 = vsub.f32 %v1475, %v1570
    %v1586 = vsub.f32 %v1482, %v1577
    %v1587 = vsub.f32 %v1489, %v1577
    %v1588 = vsub.f32 %v1496, %v1577
    %v1589 = vsub.f32 %v1503, %v1577
    %v1590 = vsub.f32 %v1510, %v1577
    %v1591 = vsub.f32 %v1517, %v1577
    %v1592 = vsub.f32 %v1524, %v1577
    %v1593 = vsub.f32 %v1531, %v1577
    %v1594 = vmul.f32 %v1578, 1.442695
    %v1595 = vpow.pop %v1594
    %v1596 = vmul.f32 %v1579, 1.442695
    %v1597 = vpow.pop %v1596
    %v1598 = vmul.f32 %v1580, 1.442695
    %v1599 = vpow.pop %v1598
    %v1600 = vmul.f32 %v1581, 1.442695
    %v1601 = vpow.pop %v1600
    %v1602 = vmul.f32 %v1582, 1.442695
    %v1603 = vpow.pop %v1602
    %v1604 = vmul.f32 %v1583, 1.442695
    %v1605 = vpow.pop %v1604
    %v1606 = vmul.f32 %v1584, 1.442695
    %v1607 = vpow.pop %v1606
    %v1608 = vmul.f32 %v1585, 1.442695
    %v1609 = vpow.pop %v1608
    %v1610 = vmul.f32 %v1586, 1.442695
    %v1611 = vpow.pop %v1610
    %v1612 = vmul.f32 %v1587, 1.442695
    %v1613 = vpow.pop %v1612
    %v1614 = vmul.f32 %v1588, 1.442695
    %v1615 = vpow.pop %v1614
    %v1616 = vmul.f32 %v1589, 1.442695
    %v1617 = vpow.pop %v1616
    %v1618 = vmul.f32 %v1590, 1.442695
    %v1619 = vpow.pop %v1618
    %v1620 = vmul.f32 %v1591, 1.442695
    %v1621 = vpow.pop %v1620
    %v1622 = vmul.f32 %v1592, 1.442695
    %v1623 = vpow.pop %v1622
    %v1624 = vmul.f32 %v1593, 1.442695
    %v1625 = vpow.pop %v1624
    %v1642 = vrot.slane %v1597, 7
    %v1643 = vsel %vm1060, %v1642, %v1595
    %v1644 = vrot.slane %v1599, 6
    %v1645 = vsel %vm1062, %v1644, %v1643
    %v1646 = vrot.slane %v1601, 5
    %v1647 = vsel %vm1064, %v1646, %v1645
    %v1648 = vrot.slane %v1603, 4
    %v1649 = vsel %vm1066, %v1648, %v1647
    %v1650 = vrot.slane %v1605, 3
    %v1651 = vsel %vm1068, %v1650, %v1649
    %v1652 = vrot.slane %v1607, 2
    %v1653 = vsel %vm1070, %v1652, %v1651
    %v1654 = vrot.slane %v1609, 1
    %v1655 = vsel %vm1072, %v1654, %v1653
    %v1656 = vrot.slane %v1613, 7
    %v1657 = vsel %vm1060, %v1656, %v1611
    %v1658 = vrot.slane %v1615, 6
    %v1659 = vsel %vm1062, %v1658, %v1657
    %v1660 = vrot.slane %v1617, 5
    %v1661 = vsel %vm1064, %v1660, %v1659
    %v1662 = vrot.slane %v1619, 4
    %v1663 = vsel %vm1066, %v1662, %v1661
    %v1664 = vrot.slane %v1621, 3
    %v1665 = vsel %vm1068, %v1664, %v1663
    %v1666 = vrot.slane %v1623, 2
    %v1667 = vsel %vm1070, %v1666, %v1665
    %v1668 = vrot.slane %v1625, 1
    %v1669 = vsel %vm1072, %v1668, %v1667
    %v1672 = vrot.slane %v1655, 4
    %v1673 = vadd.f32 %v1655, %v1672
    %v1674 = vrot.slane %v1673, 2
    %v1675 = vadd.f32 %v1673, %v1674
    %v1676 = vrot.slane %v1675, 1
    %v1677 = vadd.f32 %v1675, %v1676
    %v1678 = vrot.slane %v1669, 4
    %v1679 = vadd.f32 %v1669, %v1678
    %v1680 = vrot.slane %v1679, 2
    %v1681 = vadd.f32 %v1679, %v1680
    %v1682 = vrot.slane %v1681, 1
    %v1683 = vadd.f32 %v1681, %v1682
    %v1684 = vlaneseq
    %v1685 = vshrl.u32 %v1684, 7
    %v1686 = vsub.s32 0, %v1685
    %v1687 = vrot.slane %v1677, %v1686
    %v1688 = vlaneseq
    %v1689 = vshrl.u32 %v1688, 7
    %v1690 = vsub.s32 0, %v1689
    %v1691 = vrot.slane %v1683, %v1690
    %v1692 = vrcp.pop %v1687
    %v1693 = vmul.f32 %v1595, %v1692
    %v1694 = vmul.f32 %v1597, %v1692
    %v1695 = vmul.f32 %v1599, %v1692
    %v1696 = vmul.f32 %v1601, %v1692
    %v1697 = vmul.f32 %v1603, %v1692
    %v1698 = vmul.f32 %v1605, %v1692
    %v1699 = vmul.f32 %v1607, %v1692
    %v1700 = vmul.f32 %v1609, %v1692
    %v1701 = vrcp.pop %v1691
    %v1702 = vmul.f32 %v1611, %v1701
    %v1703 = vmul.f32 %v1613, %v1701
    %v1704 = vmul.f32 %v1615, %v1701
    %v1705 = vmul.f32 %v1617, %v1701
    %v1706 = vmul.f32 %v1619, %v1701
    %v1707 = vmul.f32 %v1621, %v1701
    %v1708 = vmul.f32 %v1623, %v1701
    %v1709 = vmul.f32 %v1625, %v1701
    %v1710 = vlaneseq
    %v1711 = vshrl.u32 %v1710, 7
    %v1712 = vsub.s32 0, %v1711
    %v1713 = vrot.slane %v1693, %v1712
    %v1714 = vlaneseq
    %v1715 = vshrl.u32 %v1714, 7
    %v1716 = vsub.s32 0, %v1715
    %v1717 = vrot.slane %v1694, %v1716
    %v1718 = vlaneseq
    %v1719 = vshrl.u32 %v1718, 7
    %v1720 = vsub.s32 0, %v1719
    %v1721 = vrot.slane %v1695, %v1720
    %v1722 = vlaneseq
    %v1723 = vshrl.u32 %v1722, 7
    %v1724 = vsub.s32 0, %v1723
    %v1725 = vrot.slane %v1696, %v1724
    %v1726 = vlaneseq
    %v1727 = vshrl.u32 %v1726, 7
    %v1728 = vsub.s32 0, %v1727
    %v1729 = vrot.slane %v1697, %v1728
    %v1730 = vlaneseq
    %v1731 = vshrl.u32 %v1730, 7
    %v1732 = vsub.s32 0, %v1731
    %v1733 = vrot.slane %v1698, %v1732
    %v1734 = vlaneseq
    %v1735 = vshrl.u32 %v1734, 7
    %v1736 = vsub.s32 0, %v1735
    %v1737 = vrot.slane %v1699, %v1736
    %v1738 = vlaneseq
    %v1739 = vshrl.u32 %v1738, 7
    %v1740 = vsub.s32 0, %v1739
    %v1741 = vrot.slane %v1700, %v1740
    %v1742 = vlaneseq
    %v1743 = vshrl.u32 %v1742, 7
    %v1744 = vsub.s32 0, %v1743
    %v1745 = vrot.slane %v1702, %v1744
    %v1746 = vlaneseq
    %v1747 = vshrl.u32 %v1746, 7
    %v1748 = vsub.s32 0, %v1747
    %v1749 = vrot.slane %v1703, %v1748
    %v1750 = vlaneseq
    %v1751 = vshrl.u32 %v1750, 7
    %v1752 = vsub.s32 0, %v1751
    %v1753 = vrot.slane %v1704, %v1752
    %v1754 = vlaneseq
    %v1755 = vshrl.u32 %v1754, 7
    %v1756 = vsub.s32 0, %v1755
    %v1757 = vrot.slane %v1705, %v1756
    %v1758 = vlaneseq
    %v1759 = vshrl.u32 %v1758, 7
    %v1760 = vsub.s32 0, %v1759
    %v1761 = vrot.slane %v1706, %v1760
    %v1762 = vlaneseq
    %v1763 = vshrl.u32 %v1762, 7
    %v1764 = vsub.s32 0, %v1763
    %v1765 = vrot.slane %v1707, %v1764
    %v1766 = vlaneseq
    %v1767 = vshrl.u32 %v1766, 7
    %v1768 = vsub.s32 0, %v1767
    %v1769 = vrot.slane %v1708, %v1768
    %v1770 = vlaneseq
    %v1771 = vshrl.u32 %v1770, 7
    %v1772 = vsub.s32 0, %v1771
    %v1773 = vrot.slane %v1709, %v1772
    %v1774 = vmul.f32 %v1713, %v1532
    %v1775 = vmul.f32 %v1713, %v1533
    %v1776 = vmul.f32 %v1717, %v1534
    %v1777 = vmul.f32 %v1717, %v1535
    %v1778 = vmul.f32 %v1721, %v1536
    %v1779 = vmul.f32 %v1721, %v1537
    %v1780 = vmul.f32 %v1725, %v1538
    %v1781 = vmul.f32 %v1725, %v1539
    %v1782 = vmul.f32 %v1729, %v1540
    %v1783 = vmul.f32 %v1729, %v1541
    %v1784 = vmul.f32 %v1733, %v1542
    %v1785 = vmul.f32 %v1733, %v1543
    %v1786 = vmul.f32 %v1737, %v1544
    %v1787 = vmul.f32 %v1737, %v1545
    %v1788 = vmul.f32 %v1741, %v1546
    %v1789 = vmul.f32 %v1741, %v1547
    %v1790 = vmul.f32 %v1745, %v1548
    %v1791 = vmul.f32 %v1745, %v1549
    %v1792 = vmul.f32 %v1749, %v1550
    %v1793 = vmul.f32 %v1749, %v1551
    %v1794 = vmul.f32 %v1753, %v1552
    %v1795 = vmul.f32 %v1753, %v1553
    %v1796 = vmul.f32 %v1757, %v1554
    %v1797 = vmul.f32 %v1757, %v1555
    %v1798 = vmul.f32 %v1761, %v1556
    %v1799 = vmul.f32 %v1761, %v1557
    %v1800 = vmul.f32 %v1765, %v1558
    %v1801 = vmul.f32 %v1765, %v1559
    %v1802 = vmul.f32 %v1769, %v1560
    %v1803 = vmul.f32 %v1769, %v1561
    %v1804 = vmul.f32 %v1773, %v1562
    %v1805 = vmul.f32 %v1773, %v1563
    %1806 = vadd.xlane.f32.xlu0 %v1774
    %v1807 = vpop.xlane.xlu0 %1806
    %1808 = vadd.xlane.f32.xlu0 %v1775
    %v1809 = vpop.xlane.xlu0 %1808
    %1810 = vadd.xlane.f32.xlu0 %v1776
    %v1811 = vpop.xlane.xlu0 %1810
    %1812 = vadd.xlane.f32.xlu0 %v1777
    %v1813 = vpop.xlane.xlu0 %1812
    %1814 = vadd.xlane.f32.xlu0 %v1778
    %v1815 = vpop.xlane.xlu0 %1814
    %1816 = vadd.xlane.f32.xlu0 %v1779
    %v1817 = vpop.xlane.xlu0 %1816
    %1818 = vadd.xlane.f32.xlu0 %v1780
    %v1819 = vpop.xlane.xlu0 %1818
    %1820 = vadd.xlane.f32.xlu0 %v1781
    %v1821 = vpop.xlane.xlu0 %1820
    %1822 = vadd.xlane.f32.xlu0 %v1782
    %v1823 = vpop.xlane.xlu0 %1822
    %1824 = vadd.xlane.f32.xlu0 %v1783
    %v1825 = vpop.xlane.xlu0 %1824
    %1826 = vadd.xlane.f32.xlu0 %v1784
    %v1827 = vpop.xlane.xlu0 %1826
    %1828 = vadd.xlane.f32.xlu0 %v1785
    %v1829 = vpop.xlane.xlu0 %1828
    %1830 = vadd.xlane.f32.xlu0 %v1786
    %v1831 = vpop.xlane.xlu0 %1830
    %1832 = vadd.xlane.f32.xlu0 %v1787
    %v1833 = vpop.xlane.xlu0 %1832
    %1834 = vadd.xlane.f32.xlu0 %v1788
    %v1835 = vpop.xlane.xlu0 %1834
    %1836 = vadd.xlane.f32.xlu0 %v1789
    %v1837 = vpop.xlane.xlu0 %1836
    %1838 = vadd.xlane.f32.xlu0 %v1790
    %v1839 = vpop.xlane.xlu0 %1838
    %1840 = vadd.xlane.f32.xlu0 %v1791
    %v1841 = vpop.xlane.xlu0 %1840
    %1842 = vadd.xlane.f32.xlu0 %v1792
    %v1843 = vpop.xlane.xlu0 %1842
    %1844 = vadd.xlane.f32.xlu0 %v1793
    %v1845 = vpop.xlane.xlu0 %1844
    %1846 = vadd.xlane.f32.xlu0 %v1794
    %v1847 = vpop.xlane.xlu0 %1846
    %1848 = vadd.xlane.f32.xlu0 %v1795
    %v1849 = vpop.xlane.xlu0 %1848
    %1850 = vadd.xlane.f32.xlu0 %v1796
    %v1851 = vpop.xlane.xlu0 %1850
    %1852 = vadd.xlane.f32.xlu0 %v1797
    %v1853 = vpop.xlane.xlu0 %1852
    %1854 = vadd.xlane.f32.xlu0 %v1798
    %v1855 = vpop.xlane.xlu0 %1854
    %1856 = vadd.xlane.f32.xlu0 %v1799
    %v1857 = vpop.xlane.xlu0 %1856
    %1858 = vadd.xlane.f32.xlu0 %v1800
    %v1859 = vpop.xlane.xlu0 %1858
    %1860 = vadd.xlane.f32.xlu0 %v1801
    %v1861 = vpop.xlane.xlu0 %1860
    %1862 = vadd.xlane.f32.xlu0 %v1802
    %v1863 = vpop.xlane.xlu0 %1862
    %1864 = vadd.xlane.f32.xlu0 %v1803
    %v1865 = vpop.xlane.xlu0 %1864
    %1866 = vadd.xlane.f32.xlu0 %v1804
    %v1867 = vpop.xlane.xlu0 %1866
    %1868 = vadd.xlane.f32.xlu0 %v1805
    %v1869 = vpop.xlane.xlu0 %1868
    %v1870 = vmul.f32 %v1807, %v1807
    %v1871 = vmul.f32 %v1809, %v1809
    %v1872 = vmul.f32 %v1811, %v1811
    %v1873 = vmul.f32 %v1813, %v1813
    %v1874 = vmul.f32 %v1815, %v1815
    %v1875 = vmul.f32 %v1817, %v1817
    %v1876 = vmul.f32 %v1819, %v1819
    %v1877 = vmul.f32 %v1821, %v1821
    %v1878 = vmul.f32 %v1823, %v1823
    %v1879 = vmul.f32 %v1825, %v1825
    %v1880 = vmul.f32 %v1827, %v1827
    %v1881 = vmul.f32 %v1829, %v1829
    %v1882 = vmul.f32 %v1831, %v1831
    %v1883 = vmul.f32 %v1833, %v1833
    %v1884 = vmul.f32 %v1835, %v1835
    %v1885 = vmul.f32 %v1837, %v1837
    %v1886 = vmul.f32 %v1839, %v1839
    %v1887 = vmul.f32 %v1841, %v1841
    %v1888 = vmul.f32 %v1843, %v1843
    %v1889 = vmul.f32 %v1845, %v1845
    %v1890 = vmul.f32 %v1847, %v1847
    %v1891 = vmul.f32 %v1849, %v1849
    %v1892 = vmul.f32 %v1851, %v1851
    %v1893 = vmul.f32 %v1853, %v1853
    %v1894 = vmul.f32 %v1855, %v1855
    %v1895 = vmul.f32 %v1857, %v1857
    %v1896 = vmul.f32 %v1859, %v1859
    %v1897 = vmul.f32 %v1861, %v1861
    %v1898 = vmul.f32 %v1863, %v1863
    %v1899 = vmul.f32 %v1865, %v1865
    %v1900 = vmul.f32 %v1867, %v1867
    %v1901 = vmul.f32 %v1869, %v1869
    %v1934 = vlaneseq
    %v1935 = vshrl.u32 %v1934, 7
    %v1936 = vsub.s32 %v913, %v1935
    %v1937 = vrot.slane %v1870, %v1936
    %v1938 = vlaneseq
    %v1939 = vshrl.u32 %v1938, 7
    %v1940 = vsub.s32 %v918, %v1939
    %v1941 = vrot.slane %v1871, %v1940
    %v1942 = vsel %vm923, %v1941, %v1937
    %v1943 = vlaneseq
    %v1944 = vshrl.u32 %v1943, 7
    %v1945 = vsub.s32 %v913, %v1944
    %v1946 = vrot.slane %v1872, %v1945
    %v1947 = vlaneseq
    %v1948 = vshrl.u32 %v1947, 7
    %v1949 = vsub.s32 %v918, %v1948
    %v1950 = vrot.slane %v1873, %v1949
    %v1951 = vsel %vm923, %v1950, %v1946
    %v1952 = vlaneseq
    %v1953 = vshrl.u32 %v1952, 7
    %v1954 = vsub.s32 %v913, %v1953
    %v1955 = vrot.slane %v1874, %v1954
    %v1956 = vlaneseq
    %v1957 = vshrl.u32 %v1956, 7
    %v1958 = vsub.s32 %v918, %v1957
    %v1959 = vrot.slane %v1875, %v1958
    %v1960 = vsel %vm923, %v1959, %v1955
    %v1961 = vlaneseq
    %v1962 = vshrl.u32 %v1961, 7
    %v1963 = vsub.s32 %v913, %v1962
    %v1964 = vrot.slane %v1876, %v1963
    %v1965 = vlaneseq
    %v1966 = vshrl.u32 %v1965, 7
    %v1967 = vsub.s32 %v918, %v1966
    %v1968 = vrot.slane %v1877, %v1967
    %v1969 = vsel %vm923, %v1968, %v1964
    %v1970 = vlaneseq
    %v1971 = vshrl.u32 %v1970, 7
    %v1972 = vsub.s32 %v913, %v1971
    %v1973 = vrot.slane %v1878, %v1972
    %v1974 = vlaneseq
    %v1975 = vshrl.u32 %v1974, 7
    %v1976 = vsub.s32 %v918, %v1975
    %v1977 = vrot.slane %v1879, %v1976
    %v1978 = vsel %vm923, %v1977, %v1973
    %v1979 = vlaneseq
    %v1980 = vshrl.u32 %v1979, 7
    %v1981 = vsub.s32 %v913, %v1980
    %v1982 = vrot.slane %v1880, %v1981
    %v1983 = vlaneseq
    %v1984 = vshrl.u32 %v1983, 7
    %v1985 = vsub.s32 %v918, %v1984
    %v1986 = vrot.slane %v1881, %v1985
    %v1987 = vsel %vm923, %v1986, %v1982
    %v1988 = vlaneseq
    %v1989 = vshrl.u32 %v1988, 7
    %v1990 = vsub.s32 %v913, %v1989
    %v1991 = vrot.slane %v1882, %v1990
    %v1992 = vlaneseq
    %v1993 = vshrl.u32 %v1992, 7
    %v1994 = vsub.s32 %v918, %v1993
    %v1995 = vrot.slane %v1883, %v1994
    %v1996 = vsel %vm923, %v1995, %v1991
    %v1997 = vlaneseq
    %v1998 = vshrl.u32 %v1997, 7
    %v1999 = vsub.s32 %v913, %v1998
    %v2000 = vrot.slane %v1884, %v1999
    %v2001 = vlaneseq
    %v2002 = vshrl.u32 %v2001, 7
    %v2003 = vsub.s32 %v918, %v2002
    %v2004 = vrot.slane %v1885, %v2003
    %v2005 = vsel %vm923, %v2004, %v2000
    %v2006 = vlaneseq
    %v2007 = vshrl.u32 %v2006, 7
    %v2008 = vsub.s32 %v913, %v2007
    %v2009 = vrot.slane %v1886, %v2008
    %v2010 = vlaneseq
    %v2011 = vshrl.u32 %v2010, 7
    %v2012 = vsub.s32 %v918, %v2011
    %v2013 = vrot.slane %v1887, %v2012
    %v2014 = vsel %vm923, %v2013, %v2009
    %v2015 = vlaneseq
    %v2016 = vshrl.u32 %v2015, 7
    %v2017 = vsub.s32 %v913, %v2016
    %v2018 = vrot.slane %v1888, %v2017
    %v2019 = vlaneseq
    %v2020 = vshrl.u32 %v2019, 7
    %v2021 = vsub.s32 %v918, %v2020
    %v2022 = vrot.slane %v1889, %v2021
    %v2023 = vsel %vm923, %v2022, %v2018
    %v2024 = vlaneseq
    %v2025 = vshrl.u32 %v2024, 7
    %v2026 = vsub.s32 %v913, %v2025
    %v2027 = vrot.slane %v1890, %v2026
    %v2028 = vlaneseq
    %v2029 = vshrl.u32 %v2028, 7
    %v2030 = vsub.s32 %v918, %v2029
    %v2031 = vrot.slane %v1891, %v2030
    %v2032 = vsel %vm923, %v2031, %v2027
    %v2033 = vlaneseq
    %v2034 = vshrl.u32 %v2033, 7
    %v2035 = vsub.s32 %v913, %v2034
    %v2036 = vrot.slane %v1892, %v2035
    %v2037 = vlaneseq
    %v2038 = vshrl.u32 %v2037, 7
    %v2039 = vsub.s32 %v918, %v2038
    %v2040 = vrot.slane %v1893, %v2039
    %v2041 = vsel %vm923, %v2040, %v2036
    %v2042 = vlaneseq
    %v2043 = vshrl.u32 %v2042, 7
    %v2044 = vsub.s32 %v913, %v2043
    %v2045 = vrot.slane %v1894, %v2044
    %v2046 = vlaneseq
    %v2047 = vshrl.u32 %v2046, 7
    %v2048 = vsub.s32 %v918, %v2047
    %v2049 = vrot.slane %v1895, %v2048
    %v2050 = vsel %vm923, %v2049, %v2045
    %v2051 = vlaneseq
    %v2052 = vshrl.u32 %v2051, 7
    %v2053 = vsub.s32 %v913, %v2052
    %v2054 = vrot.slane %v1896, %v2053
    %v2055 = vlaneseq
    %v2056 = vshrl.u32 %v2055, 7
    %v2057 = vsub.s32 %v918, %v2056
    %v2058 = vrot.slane %v1897, %v2057
    %v2059 = vsel %vm923, %v2058, %v2054
    %v2060 = vlaneseq
    %v2061 = vshrl.u32 %v2060, 7
    %v2062 = vsub.s32 %v913, %v2061
    %v2063 = vrot.slane %v1898, %v2062
    %v2064 = vlaneseq
    %v2065 = vshrl.u32 %v2064, 7
    %v2066 = vsub.s32 %v918, %v2065
    %v2067 = vrot.slane %v1899, %v2066
    %v2068 = vsel %vm923, %v2067, %v2063
    %v2069 = vlaneseq
    %v2070 = vshrl.u32 %v2069, 7
    %v2071 = vsub.s32 %v913, %v2070
    %v2072 = vrot.slane %v1900, %v2071
    %v2073 = vlaneseq
    %v2074 = vshrl.u32 %v2073, 7
    %v2075 = vsub.s32 %v918, %v2074
    %v2076 = vrot.slane %v1901, %v2075
    %v2077 = vsel %vm923, %v2076, %v2072
    %v2078 = vsel %vm1060, %v1951, %v1942
    %v2079 = vsel %vm1062, %v1960, %v2078
    %v2080 = vsel %vm1064, %v1969, %v2079
    %v2081 = vsel %vm1066, %v1978, %v2080
    %v2082 = vsel %vm1068, %v1987, %v2081
    %v2083 = vsel %vm1070, %v1996, %v2082
    %v2084 = vsel %vm1072, %v2005, %v2083
    %v2085 = vsel %vm1060, %v2023, %v2014
    %v2086 = vsel %vm1062, %v2032, %v2085
    %v2087 = vsel %vm1064, %v2041, %v2086
    %v2088 = vsel %vm1066, %v2050, %v2087
    %v2089 = vsel %vm1068, %v2059, %v2088
    %v2090 = vsel %vm1070, %v2068, %v2089
    %v2091 = vsel %vm1072, %v2077, %v2090
    %v2094 = vsel %vm1083, %v2084, 0.0
    %2095 = vadd.xlane.f32.xlu0 %v2094
    %v2096 = vpop.xlane.xlu0 %2095
    %v2097 = vsel %vm1083, %v2091, 0.0
    %2098 = vadd.xlane.f32.xlu0 %v2097
    %v2099 = vpop.xlane.xlu0 %2098
    %v2100 = vadd.f32 %v2096, 1.0
    %v2101 = vadd.f32 %v2099, 1.0
    %v2102 = vrsqrt.pop %v2096
    %v2103 = vmul.f32 %v2096, %v2102
    %vm2104 = vcmp.eq.f32.partialorder %v2096, inf
    %v2105 = vsel %vm2104, %v2096, %v2103
    %vm2106 = vcmp.eq.f32.partialorder %v2096, 0.0
    %v2107 = vand.u32 %v2096, 2147483648
    %v2108 = vsel %vm2106, %v2107, %v2105
    %v2109 = vrsqrt.pop %v2099
    %v2110 = vmul.f32 %v2099, %v2109
    %vm2111 = vcmp.eq.f32.partialorder %v2099, inf
    %v2112 = vsel %vm2111, %v2099, %v2110
    %vm2113 = vcmp.eq.f32.partialorder %v2099, 0.0
    %v2114 = vand.u32 %v2099, 2147483648
    %v2115 = vsel %vm2113, %v2114, %v2112
    %v2116 = vadd.f32 %v2108, 1e-08
    %v2117 = vadd.f32 %v2115, 1e-08
    %v2118 = vmul.f32 %v2100, %v2116
    %v2119 = vmul.f32 %v2101, %v2117
    %v2120 = vrcp.pop %v2118
    %v2121 = vmul.f32 %v2096, %v2120
    %v2122 = vrcp.pop %v2119
    %v2123 = vmul.f32 %v2099, %v2122
    %v2126 = vlaneseq
    %v2127 = vshrl.u32 %v2126, 7
    %v2128 = vsub.s32 0, %v2127
    %v2129 = vrot.slane %v2121, %v2128
    %v2130 = vlaneseq
    %v2131 = vshrl.u32 %v2130, 7
    %v2132 = vsub.s32 1, %v2131
    %v2133 = vrot.slane %v2121, %v2132
    %v2134 = vlaneseq
    %v2135 = vshrl.u32 %v2134, 7
    %v2136 = vsub.s32 2, %v2135
    %v2137 = vrot.slane %v2121, %v2136
    %v2138 = vlaneseq
    %v2139 = vshrl.u32 %v2138, 7
    %v2140 = vsub.s32 3, %v2139
    %v2141 = vrot.slane %v2121, %v2140
    %v2142 = vlaneseq
    %v2143 = vshrl.u32 %v2142, 7
    %v2144 = vsub.s32 4, %v2143
    %v2145 = vrot.slane %v2121, %v2144
    %v2146 = vlaneseq
    %v2147 = vshrl.u32 %v2146, 7
    %v2148 = vsub.s32 5, %v2147
    %v2149 = vrot.slane %v2121, %v2148
    %v2150 = vlaneseq
    %v2151 = vshrl.u32 %v2150, 7
    %v2152 = vsub.s32 6, %v2151
    %v2153 = vrot.slane %v2121, %v2152
    %v2154 = vlaneseq
    %v2155 = vshrl.u32 %v2154, 7
    %v2156 = vsub.s32 7, %v2155
    %v2157 = vrot.slane %v2121, %v2156
    %v2158 = vlaneseq
    %v2159 = vshrl.u32 %v2158, 7
    %v2160 = vsub.s32 0, %v2159
    %v2161 = vrot.slane %v2123, %v2160
    %v2162 = vlaneseq
    %v2163 = vshrl.u32 %v2162, 7
    %v2164 = vsub.s32 1, %v2163
    %v2165 = vrot.slane %v2123, %v2164
    %v2166 = vlaneseq
    %v2167 = vshrl.u32 %v2166, 7
    %v2168 = vsub.s32 2, %v2167
    %v2169 = vrot.slane %v2123, %v2168
    %v2170 = vlaneseq
    %v2171 = vshrl.u32 %v2170, 7
    %v2172 = vsub.s32 3, %v2171
    %v2173 = vrot.slane %v2123, %v2172
    %v2174 = vlaneseq
    %v2175 = vshrl.u32 %v2174, 7
    %v2176 = vsub.s32 4, %v2175
    %v2177 = vrot.slane %v2123, %v2176
    %v2178 = vlaneseq
    %v2179 = vshrl.u32 %v2178, 7
    %v2180 = vsub.s32 5, %v2179
    %v2181 = vrot.slane %v2123, %v2180
    %v2182 = vlaneseq
    %v2183 = vshrl.u32 %v2182, 7
    %v2184 = vsub.s32 6, %v2183
    %v2185 = vrot.slane %v2123, %v2184
    %v2186 = vlaneseq
    %v2187 = vshrl.u32 %v2186, 7
    %v2188 = vsub.s32 7, %v2187
    %v2189 = vrot.slane %v2123, %v2188
    %v2206 = vmul.f32 %v1807, %v2129
    %v2207 = vmul.f32 %v1809, %v2129
    %v2208 = vmul.f32 %v1811, %v2133
    %v2209 = vmul.f32 %v1813, %v2133
    %v2210 = vmul.f32 %v1815, %v2137
    %v2211 = vmul.f32 %v1817, %v2137
    %v2212 = vmul.f32 %v1819, %v2141
    %v2213 = vmul.f32 %v1821, %v2141
    %v2214 = vmul.f32 %v1823, %v2145
    %v2215 = vmul.f32 %v1825, %v2145
    %v2216 = vmul.f32 %v1827, %v2149
    %v2217 = vmul.f32 %v1829, %v2149
    %v2218 = vmul.f32 %v1831, %v2153
    %v2219 = vmul.f32 %v1833, %v2153
    %v2220 = vmul.f32 %v1835, %v2157
    %v2221 = vmul.f32 %v1837, %v2157
    %v2222 = vmul.f32 %v1839, %v2161
    %v2223 = vmul.f32 %v1841, %v2161
    %v2224 = vmul.f32 %v1843, %v2165
    %v2225 = vmul.f32 %v1845, %v2165
    %v2226 = vmul.f32 %v1847, %v2169
    %v2227 = vmul.f32 %v1849, %v2169
    %v2228 = vmul.f32 %v1851, %v2173
    %v2229 = vmul.f32 %v1853, %v2173
    %v2230 = vmul.f32 %v1855, %v2177
    %v2231 = vmul.f32 %v1857, %v2177
    %v2232 = vmul.f32 %v1859, %v2181
    %v2233 = vmul.f32 %v1861, %v2181
    %v2234 = vmul.f32 %v1863, %v2185
    %v2235 = vmul.f32 %v1865, %v2185
    %v2236 = vmul.f32 %v1867, %v2189
    %v2237 = vmul.f32 %v1869, %v2189
    %2239 = vset.pattern.permute.xlu0 0
    %2240 = vperm.xlu0 %2239, %v2206
    %v2241 = vpop.permute.xlu0 %2240
    %2244 = vset.pattern.permute.xlu0 0
    %2245 = vperm.xlu0 %2244, %v2207
    %v2246 = vpop.permute.xlu0 %2245
    %2249 = vset.pattern.permute.xlu0 0
    %2250 = vperm.xlu0 %2249, %v2208
    %v2251 = vpop.permute.xlu0 %2250
    %2254 = vset.pattern.permute.xlu0 0
    %2255 = vperm.xlu0 %2254, %v2209
    %v2256 = vpop.permute.xlu0 %2255
    %2259 = vset.pattern.permute.xlu0 0
    %2260 = vperm.xlu0 %2259, %v2210
    %v2261 = vpop.permute.xlu0 %2260
    %2264 = vset.pattern.permute.xlu0 0
    %2265 = vperm.xlu0 %2264, %v2211
    %v2266 = vpop.permute.xlu0 %2265
    %2269 = vset.pattern.permute.xlu0 0
    %2270 = vperm.xlu0 %2269, %v2212
    %v2271 = vpop.permute.xlu0 %2270
    %2274 = vset.pattern.permute.xlu0 0
    %2275 = vperm.xlu0 %2274, %v2213
    %v2276 = vpop.permute.xlu0 %2275
    %2279 = vset.pattern.permute.xlu0 0
    %2280 = vperm.xlu0 %2279, %v2214
    %v2281 = vpop.permute.xlu0 %2280
    %2284 = vset.pattern.permute.xlu0 0
    %2285 = vperm.xlu0 %2284, %v2215
    %v2286 = vpop.permute.xlu0 %2285
    %2289 = vset.pattern.permute.xlu0 0
    %2290 = vperm.xlu0 %2289, %v2216
    %v2291 = vpop.permute.xlu0 %2290
    %2294 = vset.pattern.permute.xlu0 0
    %2295 = vperm.xlu0 %2294, %v2217
    %v2296 = vpop.permute.xlu0 %2295
    %2299 = vset.pattern.permute.xlu0 0
    %2300 = vperm.xlu0 %2299, %v2218
    %v2301 = vpop.permute.xlu0 %2300
    %2304 = vset.pattern.permute.xlu0 0
    %2305 = vperm.xlu0 %2304, %v2219
    %v2306 = vpop.permute.xlu0 %2305
    %2309 = vset.pattern.permute.xlu0 0
    %2310 = vperm.xlu0 %2309, %v2220
    %v2311 = vpop.permute.xlu0 %2310
    %2314 = vset.pattern.permute.xlu0 0
    %2315 = vperm.xlu0 %2314, %v2221
    %v2316 = vpop.permute.xlu0 %2315
    %2319 = vset.pattern.permute.xlu0 0
    %2320 = vperm.xlu0 %2319, %v2222
    %v2321 = vpop.permute.xlu0 %2320
    %2324 = vset.pattern.permute.xlu0 0
    %2325 = vperm.xlu0 %2324, %v2223
    %v2326 = vpop.permute.xlu0 %2325
    %2329 = vset.pattern.permute.xlu0 0
    %2330 = vperm.xlu0 %2329, %v2224
    %v2331 = vpop.permute.xlu0 %2330
    %2334 = vset.pattern.permute.xlu0 0
    %2335 = vperm.xlu0 %2334, %v2225
    %v2336 = vpop.permute.xlu0 %2335
    %2339 = vset.pattern.permute.xlu0 0
    %2340 = vperm.xlu0 %2339, %v2226
    %v2341 = vpop.permute.xlu0 %2340
    %2344 = vset.pattern.permute.xlu0 0
    %2345 = vperm.xlu0 %2344, %v2227
    %v2346 = vpop.permute.xlu0 %2345
    %2349 = vset.pattern.permute.xlu0 0
    %2350 = vperm.xlu0 %2349, %v2228
    %v2351 = vpop.permute.xlu0 %2350
    %2354 = vset.pattern.permute.xlu0 0
    %2355 = vperm.xlu0 %2354, %v2229
    %v2356 = vpop.permute.xlu0 %2355
    %2359 = vset.pattern.permute.xlu0 0
    %2360 = vperm.xlu0 %2359, %v2230
    %v2361 = vpop.permute.xlu0 %2360
    %2364 = vset.pattern.permute.xlu0 0
    %2365 = vperm.xlu0 %2364, %v2231
    %v2366 = vpop.permute.xlu0 %2365
    %2369 = vset.pattern.permute.xlu0 0
    %2370 = vperm.xlu0 %2369, %v2232
    %v2371 = vpop.permute.xlu0 %2370
    %2374 = vset.pattern.permute.xlu0 0
    %2375 = vperm.xlu0 %2374, %v2233
    %v2376 = vpop.permute.xlu0 %2375
    %2379 = vset.pattern.permute.xlu0 0
    %2380 = vperm.xlu0 %2379, %v2234
    %v2381 = vpop.permute.xlu0 %2380
    %2384 = vset.pattern.permute.xlu0 0
    %2385 = vperm.xlu0 %2384, %v2235
    %v2386 = vpop.permute.xlu0 %2385
    %2389 = vset.pattern.permute.xlu0 0
    %2390 = vperm.xlu0 %2389, %v2236
    %v2391 = vpop.permute.xlu0 %2390
    %2394 = vset.pattern.permute.xlu0 0
    %2395 = vperm.xlu0 %2394, %v2237
    %v2396 = vpop.permute.xlu0 %2395
    %v2398 = vmul.f32 %v1532, %v2241
    %v2399 = vmul.f32 %v1533, %v2246
    %v2400 = vmul.f32 %v1534, %v2251
    %v2401 = vmul.f32 %v1535, %v2256
    %v2402 = vmul.f32 %v1536, %v2261
    %v2403 = vmul.f32 %v1537, %v2266
    %v2404 = vmul.f32 %v1538, %v2271
    %v2405 = vmul.f32 %v1539, %v2276
    %v2406 = vmul.f32 %v1540, %v2281
    %v2407 = vmul.f32 %v1541, %v2286
    %v2408 = vmul.f32 %v1542, %v2291
    %v2409 = vmul.f32 %v1543, %v2296
    %v2410 = vmul.f32 %v1544, %v2301
    %v2411 = vmul.f32 %v1545, %v2306
    %v2412 = vmul.f32 %v1546, %v2311
    %v2413 = vmul.f32 %v1547, %v2316
    %v2414 = vmul.f32 %v1548, %v2321
    %v2415 = vmul.f32 %v1549, %v2326
    %v2416 = vmul.f32 %v1550, %v2331
    %v2417 = vmul.f32 %v1551, %v2336
    %v2418 = vmul.f32 %v1552, %v2341
    %v2419 = vmul.f32 %v1553, %v2346
    %v2420 = vmul.f32 %v1554, %v2351
    %v2421 = vmul.f32 %v1555, %v2356
    %v2422 = vmul.f32 %v1556, %v2361
    %v2423 = vmul.f32 %v1557, %v2366
    %v2424 = vmul.f32 %v1558, %v2371
    %v2425 = vmul.f32 %v1559, %v2376
    %v2426 = vmul.f32 %v1560, %v2381
    %v2427 = vmul.f32 %v1561, %v2386
    %v2428 = vmul.f32 %v1562, %v2391
    %v2429 = vmul.f32 %v1563, %v2396
    %v2430 = vadd.f32 %v2398, %v2399
    %v2431 = vrot.slane %v2430, 4
    %v2432 = vadd.f32 %v2430, %v2431
    %v2433 = vrot.slane %v2432, 2
    %v2434 = vadd.f32 %v2432, %v2433
    %v2435 = vrot.slane %v2434, 1
    %v2436 = vadd.f32 %v2434, %v2435
    %v2437 = vadd.f32 %v2400, %v2401
    %v2438 = vrot.slane %v2437, 4
    %v2439 = vadd.f32 %v2437, %v2438
    %v2440 = vrot.slane %v2439, 2
    %v2441 = vadd.f32 %v2439, %v2440
    %v2442 = vrot.slane %v2441, 1
    %v2443 = vadd.f32 %v2441, %v2442
    %v2444 = vadd.f32 %v2402, %v2403
    %v2445 = vrot.slane %v2444, 4
    %v2446 = vadd.f32 %v2444, %v2445
    %v2447 = vrot.slane %v2446, 2
    %v2448 = vadd.f32 %v2446, %v2447
    %v2449 = vrot.slane %v2448, 1
    %v2450 = vadd.f32 %v2448, %v2449
    %v2451 = vadd.f32 %v2404, %v2405
    %v2452 = vrot.slane %v2451, 4
    %v2453 = vadd.f32 %v2451, %v2452
    %v2454 = vrot.slane %v2453, 2
    %v2455 = vadd.f32 %v2453, %v2454
    %v2456 = vrot.slane %v2455, 1
    %v2457 = vadd.f32 %v2455, %v2456
    %v2458 = vadd.f32 %v2406, %v2407
    %v2459 = vrot.slane %v2458, 4
    %v2460 = vadd.f32 %v2458, %v2459
    %v2461 = vrot.slane %v2460, 2
    %v2462 = vadd.f32 %v2460, %v2461
    %v2463 = vrot.slane %v2462, 1
    %v2464 = vadd.f32 %v2462, %v2463
    %v2465 = vadd.f32 %v2408, %v2409
    %v2466 = vrot.slane %v2465, 4
    %v2467 = vadd.f32 %v2465, %v2466
    %v2468 = vrot.slane %v2467, 2
    %v2469 = vadd.f32 %v2467, %v2468
    %v2470 = vrot.slane %v2469, 1
    %v2471 = vadd.f32 %v2469, %v2470
    %v2472 = vadd.f32 %v2410, %v2411
    %v2473 = vrot.slane %v2472, 4
    %v2474 = vadd.f32 %v2472, %v2473
    %v2475 = vrot.slane %v2474, 2
    %v2476 = vadd.f32 %v2474, %v2475
    %v2477 = vrot.slane %v2476, 1
    %v2478 = vadd.f32 %v2476, %v2477
    %v2479 = vadd.f32 %v2412, %v2413
    %v2480 = vrot.slane %v2479, 4
    %v2481 = vadd.f32 %v2479, %v2480
    %v2482 = vrot.slane %v2481, 2
    %v2483 = vadd.f32 %v2481, %v2482
    %v2484 = vrot.slane %v2483, 1
    %v2485 = vadd.f32 %v2483, %v2484
    %v2486 = vadd.f32 %v2414, %v2415
    %v2487 = vrot.slane %v2486, 4
    %v2488 = vadd.f32 %v2486, %v2487
    %v2489 = vrot.slane %v2488, 2
    %v2490 = vadd.f32 %v2488, %v2489
    %v2491 = vrot.slane %v2490, 1
    %v2492 = vadd.f32 %v2490, %v2491
    %v2493 = vadd.f32 %v2416, %v2417
    %v2494 = vrot.slane %v2493, 4
    %v2495 = vadd.f32 %v2493, %v2494
    %v2496 = vrot.slane %v2495, 2
    %v2497 = vadd.f32 %v2495, %v2496
    %v2498 = vrot.slane %v2497, 1
    %v2499 = vadd.f32 %v2497, %v2498
    %v2500 = vadd.f32 %v2418, %v2419
    %v2501 = vrot.slane %v2500, 4
    %v2502 = vadd.f32 %v2500, %v2501
    %v2503 = vrot.slane %v2502, 2
    %v2504 = vadd.f32 %v2502, %v2503
    %v2505 = vrot.slane %v2504, 1
    %v2506 = vadd.f32 %v2504, %v2505
    %v2507 = vadd.f32 %v2420, %v2421
    %v2508 = vrot.slane %v2507, 4
    %v2509 = vadd.f32 %v2507, %v2508
    %v2510 = vrot.slane %v2509, 2
    %v2511 = vadd.f32 %v2509, %v2510
    %v2512 = vrot.slane %v2511, 1
    %v2513 = vadd.f32 %v2511, %v2512
    %v2514 = vadd.f32 %v2422, %v2423
    %v2515 = vrot.slane %v2514, 4
    %v2516 = vadd.f32 %v2514, %v2515
    %v2517 = vrot.slane %v2516, 2
    %v2518 = vadd.f32 %v2516, %v2517
    %v2519 = vrot.slane %v2518, 1
    %v2520 = vadd.f32 %v2518, %v2519
    %v2521 = vadd.f32 %v2424, %v2425
    %v2522 = vrot.slane %v2521, 4
    %v2523 = vadd.f32 %v2521, %v2522
    %v2524 = vrot.slane %v2523, 2
    %v2525 = vadd.f32 %v2523, %v2524
    %v2526 = vrot.slane %v2525, 1
    %v2527 = vadd.f32 %v2525, %v2526
    %v2528 = vadd.f32 %v2426, %v2427
    %v2529 = vrot.slane %v2528, 4
    %v2530 = vadd.f32 %v2528, %v2529
    %v2531 = vrot.slane %v2530, 2
    %v2532 = vadd.f32 %v2530, %v2531
    %v2533 = vrot.slane %v2532, 1
    %v2534 = vadd.f32 %v2532, %v2533
    %v2535 = vadd.f32 %v2428, %v2429
    %v2536 = vrot.slane %v2535, 4
    %v2537 = vadd.f32 %v2535, %v2536
    %v2538 = vrot.slane %v2537, 2
    %v2539 = vadd.f32 %v2537, %v2538
    %v2540 = vrot.slane %v2539, 1
    %v2541 = vadd.f32 %v2539, %v2540
    %v2542 = vadd.f32 %v1426, %v2436
    %v2543 = vadd.f32 %v1433, %v2443
    %v2544 = vadd.f32 %v1440, %v2450
    %v2545 = vadd.f32 %v1447, %v2457
    %v2546 = vadd.f32 %v1454, %v2464
    %v2547 = vadd.f32 %v1461, %v2471
    %v2548 = vadd.f32 %v1468, %v2478
    %v2549 = vadd.f32 %v1475, %v2485
    %v2550 = vadd.f32 %v1482, %v2492
    %v2551 = vadd.f32 %v1489, %v2499
    %v2552 = vadd.f32 %v1496, %v2506
    %v2553 = vadd.f32 %v1503, %v2513
    %v2554 = vadd.f32 %v1510, %v2520
    %v2555 = vadd.f32 %v1517, %v2527
    %v2556 = vadd.f32 %v1524, %v2534
    %v2557 = vadd.f32 %v1531, %v2541
    %v2558 = vmax.f32 %v2542, %v2544
    %v2559 = vmax.f32 %v2543, %v2545
    %v2560 = vmax.f32 %v2558, %v2546
    %v2561 = vmax.f32 %v2559, %v2547
    %v2562 = vmax.f32 %v2560, %v2548
    %v2563 = vmax.f32 %v2561, %v2549
    %v2564 = vmax.f32 %v2562, %v2563
    %v2565 = vmax.f32 %v2550, %v2552
    %v2566 = vmax.f32 %v2551, %v2553
    %v2567 = vmax.f32 %v2565, %v2554
    %v2568 = vmax.f32 %v2566, %v2555
    %v2569 = vmax.f32 %v2567, %v2556
    %v2570 = vmax.f32 %v2568, %v2557
    %v2571 = vmax.f32 %v2569, %v2570
    %v2572 = vsub.f32 %v2542, %v2564
    %v2573 = vsub.f32 %v2543, %v2564
    %v2574 = vsub.f32 %v2544, %v2564
    %v2575 = vsub.f32 %v2545, %v2564
    %v2576 = vsub.f32 %v2546, %v2564
    %v2577 = vsub.f32 %v2547, %v2564
    %v2578 = vsub.f32 %v2548, %v2564
    %v2579 = vsub.f32 %v2549, %v2564
    %v2580 = vsub.f32 %v2550, %v2571
    %v2581 = vsub.f32 %v2551, %v2571
    %v2582 = vsub.f32 %v2552, %v2571
    %v2583 = vsub.f32 %v2553, %v2571
    %v2584 = vsub.f32 %v2554, %v2571
    %v2585 = vsub.f32 %v2555, %v2571
    %v2586 = vsub.f32 %v2556, %v2571
    %v2587 = vsub.f32 %v2557, %v2571
    %v2588 = vmul.f32 %v2572, 1.442695
    %v2589 = vpow.pop %v2588
    %v2590 = vmul.f32 %v2573, 1.442695
    %v2591 = vpow.pop %v2590
    %v2592 = vmul.f32 %v2574, 1.442695
    %v2593 = vpow.pop %v2592
    %v2594 = vmul.f32 %v2575, 1.442695
    %v2595 = vpow.pop %v2594
    %v2596 = vmul.f32 %v2576, 1.442695
    %v2597 = vpow.pop %v2596
    %v2598 = vmul.f32 %v2577, 1.442695
    %v2599 = vpow.pop %v2598
    %v2600 = vmul.f32 %v2578, 1.442695
    %v2601 = vpow.pop %v2600
    %v2602 = vmul.f32 %v2579, 1.442695
    %v2603 = vpow.pop %v2602
    %v2604 = vmul.f32 %v2580, 1.442695
    %v2605 = vpow.pop %v2604
    %v2606 = vmul.f32 %v2581, 1.442695
    %v2607 = vpow.pop %v2606
    %v2608 = vmul.f32 %v2582, 1.442695
    %v2609 = vpow.pop %v2608
    %v2610 = vmul.f32 %v2583, 1.442695
    %v2611 = vpow.pop %v2610
    %v2612 = vmul.f32 %v2584, 1.442695
    %v2613 = vpow.pop %v2612
    %v2614 = vmul.f32 %v2585, 1.442695
    %v2615 = vpow.pop %v2614
    %v2616 = vmul.f32 %v2586, 1.442695
    %v2617 = vpow.pop %v2616
    %v2618 = vmul.f32 %v2587, 1.442695
    %v2619 = vpow.pop %v2618
    %v2636 = vrot.slane %v2591, 7
    %v2637 = vsel %vm1060, %v2636, %v2589
    %v2638 = vrot.slane %v2593, 6
    %v2639 = vsel %vm1062, %v2638, %v2637
    %v2640 = vrot.slane %v2595, 5
    %v2641 = vsel %vm1064, %v2640, %v2639
    %v2642 = vrot.slane %v2597, 4
    %v2643 = vsel %vm1066, %v2642, %v2641
    %v2644 = vrot.slane %v2599, 3
    %v2645 = vsel %vm1068, %v2644, %v2643
    %v2646 = vrot.slane %v2601, 2
    %v2647 = vsel %vm1070, %v2646, %v2645
    %v2648 = vrot.slane %v2603, 1
    %v2649 = vsel %vm1072, %v2648, %v2647
    %v2650 = vrot.slane %v2607, 7
    %v2651 = vsel %vm1060, %v2650, %v2605
    %v2652 = vrot.slane %v2609, 6
    %v2653 = vsel %vm1062, %v2652, %v2651
    %v2654 = vrot.slane %v2611, 5
    %v2655 = vsel %vm1064, %v2654, %v2653
    %v2656 = vrot.slane %v2613, 4
    %v2657 = vsel %vm1066, %v2656, %v2655
    %v2658 = vrot.slane %v2615, 3
    %v2659 = vsel %vm1068, %v2658, %v2657
    %v2660 = vrot.slane %v2617, 2
    %v2661 = vsel %vm1070, %v2660, %v2659
    %v2662 = vrot.slane %v2619, 1
    %v2663 = vsel %vm1072, %v2662, %v2661
    %v2666 = vrot.slane %v2649, 4
    %v2667 = vadd.f32 %v2649, %v2666
    %v2668 = vrot.slane %v2667, 2
    %v2669 = vadd.f32 %v2667, %v2668
    %v2670 = vrot.slane %v2669, 1
    %v2671 = vadd.f32 %v2669, %v2670
    %v2672 = vrot.slane %v2663, 4
    %v2673 = vadd.f32 %v2663, %v2672
    %v2674 = vrot.slane %v2673, 2
    %v2675 = vadd.f32 %v2673, %v2674
    %v2676 = vrot.slane %v2675, 1
    %v2677 = vadd.f32 %v2675, %v2676
    %v2678 = vlaneseq
    %v2679 = vshrl.u32 %v2678, 7
    %v2680 = vsub.s32 0, %v2679
    %v2681 = vrot.slane %v2671, %v2680
    %v2682 = vlaneseq
    %v2683 = vshrl.u32 %v2682, 7
    %v2684 = vsub.s32 0, %v2683
    %v2685 = vrot.slane %v2677, %v2684
    %v2686 = vrcp.pop %v2681
    %v2687 = vmul.f32 %v2589, %v2686
    %v2688 = vmul.f32 %v2591, %v2686
    %v2689 = vmul.f32 %v2593, %v2686
    %v2690 = vmul.f32 %v2595, %v2686
    %v2691 = vmul.f32 %v2597, %v2686
    %v2692 = vmul.f32 %v2599, %v2686
    %v2693 = vmul.f32 %v2601, %v2686
    %v2694 = vmul.f32 %v2603, %v2686
    %v2695 = vrcp.pop %v2685
    %v2696 = vmul.f32 %v2605, %v2695
    %v2697 = vmul.f32 %v2607, %v2695
    %v2698 = vmul.f32 %v2609, %v2695
    %v2699 = vmul.f32 %v2611, %v2695
    %v2700 = vmul.f32 %v2613, %v2695
    %v2701 = vmul.f32 %v2615, %v2695
    %v2702 = vmul.f32 %v2617, %v2695
    %v2703 = vmul.f32 %v2619, %v2695
    %v2704 = vlaneseq
    %v2705 = vshrl.u32 %v2704, 7
    %v2706 = vsub.s32 0, %v2705
    %v2707 = vrot.slane %v2687, %v2706
    %v2708 = vlaneseq
    %v2709 = vshrl.u32 %v2708, 7
    %v2710 = vsub.s32 0, %v2709
    %v2711 = vrot.slane %v2688, %v2710
    %v2712 = vlaneseq
    %v2713 = vshrl.u32 %v2712, 7
    %v2714 = vsub.s32 0, %v2713
    %v2715 = vrot.slane %v2689, %v2714
    %v2716 = vlaneseq
    %v2717 = vshrl.u32 %v2716, 7
    %v2718 = vsub.s32 0, %v2717
    %v2719 = vrot.slane %v2690, %v2718
    %v2720 = vlaneseq
    %v2721 = vshrl.u32 %v2720, 7
    %v2722 = vsub.s32 0, %v2721
    %v2723 = vrot.slane %v2691, %v2722
    %v2724 = vlaneseq
    %v2725 = vshrl.u32 %v2724, 7
    %v2726 = vsub.s32 0, %v2725
    %v2727 = vrot.slane %v2692, %v2726
    %v2728 = vlaneseq
    %v2729 = vshrl.u32 %v2728, 7
    %v2730 = vsub.s32 0, %v2729
    %v2731 = vrot.slane %v2693, %v2730
    %v2732 = vlaneseq
    %v2733 = vshrl.u32 %v2732, 7
    %v2734 = vsub.s32 0, %v2733
    %v2735 = vrot.slane %v2694, %v2734
    %v2736 = vlaneseq
    %v2737 = vshrl.u32 %v2736, 7
    %v2738 = vsub.s32 0, %v2737
    %v2739 = vrot.slane %v2696, %v2738
    %v2740 = vlaneseq
    %v2741 = vshrl.u32 %v2740, 7
    %v2742 = vsub.s32 0, %v2741
    %v2743 = vrot.slane %v2697, %v2742
    %v2744 = vlaneseq
    %v2745 = vshrl.u32 %v2744, 7
    %v2746 = vsub.s32 0, %v2745
    %v2747 = vrot.slane %v2698, %v2746
    %v2748 = vlaneseq
    %v2749 = vshrl.u32 %v2748, 7
    %v2750 = vsub.s32 0, %v2749
    %v2751 = vrot.slane %v2699, %v2750
    %v2752 = vlaneseq
    %v2753 = vshrl.u32 %v2752, 7
    %v2754 = vsub.s32 0, %v2753
    %v2755 = vrot.slane %v2700, %v2754
    %v2756 = vlaneseq
    %v2757 = vshrl.u32 %v2756, 7
    %v2758 = vsub.s32 0, %v2757
    %v2759 = vrot.slane %v2701, %v2758
    %v2760 = vlaneseq
    %v2761 = vshrl.u32 %v2760, 7
    %v2762 = vsub.s32 0, %v2761
    %v2763 = vrot.slane %v2702, %v2762
    %v2764 = vlaneseq
    %v2765 = vshrl.u32 %v2764, 7
    %v2766 = vsub.s32 0, %v2765
    %v2767 = vrot.slane %v2703, %v2766
    %v2768 = vmul.f32 %v2707, %v1532
    %v2769 = vmul.f32 %v2707, %v1533
    %v2770 = vmul.f32 %v2711, %v1534
    %v2771 = vmul.f32 %v2711, %v1535
    %v2772 = vmul.f32 %v2715, %v1536
    %v2773 = vmul.f32 %v2715, %v1537
    %v2774 = vmul.f32 %v2719, %v1538
    %v2775 = vmul.f32 %v2719, %v1539
    %v2776 = vmul.f32 %v2723, %v1540
    %v2777 = vmul.f32 %v2723, %v1541
    %v2778 = vmul.f32 %v2727, %v1542
    %v2779 = vmul.f32 %v2727, %v1543
    %v2780 = vmul.f32 %v2731, %v1544
    %v2781 = vmul.f32 %v2731, %v1545
    %v2782 = vmul.f32 %v2735, %v1546
    %v2783 = vmul.f32 %v2735, %v1547
    %v2784 = vmul.f32 %v2739, %v1548
    %v2785 = vmul.f32 %v2739, %v1549
    %v2786 = vmul.f32 %v2743, %v1550
    %v2787 = vmul.f32 %v2743, %v1551
    %v2788 = vmul.f32 %v2747, %v1552
    %v2789 = vmul.f32 %v2747, %v1553
    %v2790 = vmul.f32 %v2751, %v1554
    %v2791 = vmul.f32 %v2751, %v1555
    %v2792 = vmul.f32 %v2755, %v1556
    %v2793 = vmul.f32 %v2755, %v1557
    %v2794 = vmul.f32 %v2759, %v1558
    %v2795 = vmul.f32 %v2759, %v1559
    %v2796 = vmul.f32 %v2763, %v1560
    %v2797 = vmul.f32 %v2763, %v1561
    %v2798 = vmul.f32 %v2767, %v1562
    %v2799 = vmul.f32 %v2767, %v1563
    %2800 = vadd.xlane.f32.xlu0 %v2768
    %v2801 = vpop.xlane.xlu0 %2800
    %2802 = vadd.xlane.f32.xlu0 %v2769
    %v2803 = vpop.xlane.xlu0 %2802
    %2804 = vadd.xlane.f32.xlu0 %v2770
    %v2805 = vpop.xlane.xlu0 %2804
    %2806 = vadd.xlane.f32.xlu0 %v2771
    %v2807 = vpop.xlane.xlu0 %2806
    %2808 = vadd.xlane.f32.xlu0 %v2772
    %v2809 = vpop.xlane.xlu0 %2808
    %2810 = vadd.xlane.f32.xlu0 %v2773
    %v2811 = vpop.xlane.xlu0 %2810
    %2812 = vadd.xlane.f32.xlu0 %v2774
    %v2813 = vpop.xlane.xlu0 %2812
    %2814 = vadd.xlane.f32.xlu0 %v2775
    %v2815 = vpop.xlane.xlu0 %2814
    %2816 = vadd.xlane.f32.xlu0 %v2776
    %v2817 = vpop.xlane.xlu0 %2816
    %2818 = vadd.xlane.f32.xlu0 %v2777
    %v2819 = vpop.xlane.xlu0 %2818
    %2820 = vadd.xlane.f32.xlu0 %v2778
    %v2821 = vpop.xlane.xlu0 %2820
    %2822 = vadd.xlane.f32.xlu0 %v2779
    %v2823 = vpop.xlane.xlu0 %2822
    %2824 = vadd.xlane.f32.xlu0 %v2780
    %v2825 = vpop.xlane.xlu0 %2824
    %2826 = vadd.xlane.f32.xlu0 %v2781
    %v2827 = vpop.xlane.xlu0 %2826
    %2828 = vadd.xlane.f32.xlu0 %v2782
    %v2829 = vpop.xlane.xlu0 %2828
    %2830 = vadd.xlane.f32.xlu0 %v2783
    %v2831 = vpop.xlane.xlu0 %2830
    %2832 = vadd.xlane.f32.xlu0 %v2784
    %v2833 = vpop.xlane.xlu0 %2832
    %2834 = vadd.xlane.f32.xlu0 %v2785
    %v2835 = vpop.xlane.xlu0 %2834
    %2836 = vadd.xlane.f32.xlu0 %v2786
    %v2837 = vpop.xlane.xlu0 %2836
    %2838 = vadd.xlane.f32.xlu0 %v2787
    %v2839 = vpop.xlane.xlu0 %2838
    %2840 = vadd.xlane.f32.xlu0 %v2788
    %v2841 = vpop.xlane.xlu0 %2840
    %2842 = vadd.xlane.f32.xlu0 %v2789
    %v2843 = vpop.xlane.xlu0 %2842
    %2844 = vadd.xlane.f32.xlu0 %v2790
    %v2845 = vpop.xlane.xlu0 %2844
    %2846 = vadd.xlane.f32.xlu0 %v2791
    %v2847 = vpop.xlane.xlu0 %2846
    %2848 = vadd.xlane.f32.xlu0 %v2792
    %v2849 = vpop.xlane.xlu0 %2848
    %2850 = vadd.xlane.f32.xlu0 %v2793
    %v2851 = vpop.xlane.xlu0 %2850
    %2852 = vadd.xlane.f32.xlu0 %v2794
    %v2853 = vpop.xlane.xlu0 %2852
    %2854 = vadd.xlane.f32.xlu0 %v2795
    %v2855 = vpop.xlane.xlu0 %2854
    %2856 = vadd.xlane.f32.xlu0 %v2796
    %v2857 = vpop.xlane.xlu0 %2856
    %2858 = vadd.xlane.f32.xlu0 %v2797
    %v2859 = vpop.xlane.xlu0 %2858
    %2860 = vadd.xlane.f32.xlu0 %v2798
    %v2861 = vpop.xlane.xlu0 %2860
    %2862 = vadd.xlane.f32.xlu0 %v2799
    %v2863 = vpop.xlane.xlu0 %2862
    %v2864 = vmul.f32 %v2801, %v2801
    %v2865 = vmul.f32 %v2803, %v2803
    %v2866 = vmul.f32 %v2805, %v2805
    %v2867 = vmul.f32 %v2807, %v2807
    %v2868 = vmul.f32 %v2809, %v2809
    %v2869 = vmul.f32 %v2811, %v2811
    %v2870 = vmul.f32 %v2813, %v2813
    %v2871 = vmul.f32 %v2815, %v2815
    %v2872 = vmul.f32 %v2817, %v2817
    %v2873 = vmul.f32 %v2819, %v2819
    %v2874 = vmul.f32 %v2821, %v2821
    %v2875 = vmul.f32 %v2823, %v2823
    %v2876 = vmul.f32 %v2825, %v2825
    %v2877 = vmul.f32 %v2827, %v2827
    %v2878 = vmul.f32 %v2829, %v2829
    %v2879 = vmul.f32 %v2831, %v2831
    %v2880 = vmul.f32 %v2833, %v2833
    %v2881 = vmul.f32 %v2835, %v2835
    %v2882 = vmul.f32 %v2837, %v2837
    %v2883 = vmul.f32 %v2839, %v2839
    %v2884 = vmul.f32 %v2841, %v2841
    %v2885 = vmul.f32 %v2843, %v2843
    %v2886 = vmul.f32 %v2845, %v2845
    %v2887 = vmul.f32 %v2847, %v2847
    %v2888 = vmul.f32 %v2849, %v2849
    %v2889 = vmul.f32 %v2851, %v2851
    %v2890 = vmul.f32 %v2853, %v2853
    %v2891 = vmul.f32 %v2855, %v2855
    %v2892 = vmul.f32 %v2857, %v2857
    %v2893 = vmul.f32 %v2859, %v2859
    %v2894 = vmul.f32 %v2861, %v2861
    %v2895 = vmul.f32 %v2863, %v2863
    %v2928 = vlaneseq
    %v2929 = vshrl.u32 %v2928, 7
    %v2930 = vsub.s32 %v913, %v2929
    %v2931 = vrot.slane %v2864, %v2930
    %v2932 = vlaneseq
    %v2933 = vshrl.u32 %v2932, 7
    %v2934 = vsub.s32 %v918, %v2933
    %v2935 = vrot.slane %v2865, %v2934
    %v2936 = vsel %vm923, %v2935, %v2931
    %v2937 = vlaneseq
    %v2938 = vshrl.u32 %v2937, 7
    %v2939 = vsub.s32 %v913, %v2938
    %v2940 = vrot.slane %v2866, %v2939
    %v2941 = vlaneseq
    %v2942 = vshrl.u32 %v2941, 7
    %v2943 = vsub.s32 %v918, %v2942
    %v2944 = vrot.slane %v2867, %v2943
    %v2945 = vsel %vm923, %v2944, %v2940
    %v2946 = vlaneseq
    %v2947 = vshrl.u32 %v2946, 7
    %v2948 = vsub.s32 %v913, %v2947
    %v2949 = vrot.slane %v2868, %v2948
    %v2950 = vlaneseq
    %v2951 = vshrl.u32 %v2950, 7
    %v2952 = vsub.s32 %v918, %v2951
    %v2953 = vrot.slane %v2869, %v2952
    %v2954 = vsel %vm923, %v2953, %v2949
    %v2955 = vlaneseq
    %v2956 = vshrl.u32 %v2955, 7
    %v2957 = vsub.s32 %v913, %v2956
    %v2958 = vrot.slane %v2870, %v2957
    %v2959 = vlaneseq
    %v2960 = vshrl.u32 %v2959, 7
    %v2961 = vsub.s32 %v918, %v2960
    %v2962 = vrot.slane %v2871, %v2961
    %v2963 = vsel %vm923, %v2962, %v2958
    %v2964 = vlaneseq
    %v2965 = vshrl.u32 %v2964, 7
    %v2966 = vsub.s32 %v913, %v2965
    %v2967 = vrot.slane %v2872, %v2966
    %v2968 = vlaneseq
    %v2969 = vshrl.u32 %v2968, 7
    %v2970 = vsub.s32 %v918, %v2969
    %v2971 = vrot.slane %v2873, %v2970
    %v2972 = vsel %vm923, %v2971, %v2967
    %v2973 = vlaneseq
    %v2974 = vshrl.u32 %v2973, 7
    %v2975 = vsub.s32 %v913, %v2974
    %v2976 = vrot.slane %v2874, %v2975
    %v2977 = vlaneseq
    %v2978 = vshrl.u32 %v2977, 7
    %v2979 = vsub.s32 %v918, %v2978
    %v2980 = vrot.slane %v2875, %v2979
    %v2981 = vsel %vm923, %v2980, %v2976
    %v2982 = vlaneseq
    %v2983 = vshrl.u32 %v2982, 7
    %v2984 = vsub.s32 %v913, %v2983
    %v2985 = vrot.slane %v2876, %v2984
    %v2986 = vlaneseq
    %v2987 = vshrl.u32 %v2986, 7
    %v2988 = vsub.s32 %v918, %v2987
    %v2989 = vrot.slane %v2877, %v2988
    %v2990 = vsel %vm923, %v2989, %v2985
    %v2991 = vlaneseq
    %v2992 = vshrl.u32 %v2991, 7
    %v2993 = vsub.s32 %v913, %v2992
    %v2994 = vrot.slane %v2878, %v2993
    %v2995 = vlaneseq
    %v2996 = vshrl.u32 %v2995, 7
    %v2997 = vsub.s32 %v918, %v2996
    %v2998 = vrot.slane %v2879, %v2997
    %v2999 = vsel %vm923, %v2998, %v2994
    %v3000 = vlaneseq
    %v3001 = vshrl.u32 %v3000, 7
    %v3002 = vsub.s32 %v913, %v3001
    %v3003 = vrot.slane %v2880, %v3002
    %v3004 = vlaneseq
    %v3005 = vshrl.u32 %v3004, 7
    %v3006 = vsub.s32 %v918, %v3005
    %v3007 = vrot.slane %v2881, %v3006
    %v3008 = vsel %vm923, %v3007, %v3003
    %v3009 = vlaneseq
    %v3010 = vshrl.u32 %v3009, 7
    %v3011 = vsub.s32 %v913, %v3010
    %v3012 = vrot.slane %v2882, %v3011
    %v3013 = vlaneseq
    %v3014 = vshrl.u32 %v3013, 7
    %v3015 = vsub.s32 %v918, %v3014
    %v3016 = vrot.slane %v2883, %v3015
    %v3017 = vsel %vm923, %v3016, %v3012
    %v3018 = vlaneseq
    %v3019 = vshrl.u32 %v3018, 7
    %v3020 = vsub.s32 %v913, %v3019
    %v3021 = vrot.slane %v2884, %v3020
    %v3022 = vlaneseq
    %v3023 = vshrl.u32 %v3022, 7
    %v3024 = vsub.s32 %v918, %v3023
    %v3025 = vrot.slane %v2885, %v3024
    %v3026 = vsel %vm923, %v3025, %v3021
    %v3027 = vlaneseq
    %v3028 = vshrl.u32 %v3027, 7
    %v3029 = vsub.s32 %v913, %v3028
    %v3030 = vrot.slane %v2886, %v3029
    %v3031 = vlaneseq
    %v3032 = vshrl.u32 %v3031, 7
    %v3033 = vsub.s32 %v918, %v3032
    %v3034 = vrot.slane %v2887, %v3033
    %v3035 = vsel %vm923, %v3034, %v3030
    %v3036 = vlaneseq
    %v3037 = vshrl.u32 %v3036, 7
    %v3038 = vsub.s32 %v913, %v3037
    %v3039 = vrot.slane %v2888, %v3038
    %v3040 = vlaneseq
    %v3041 = vshrl.u32 %v3040, 7
    %v3042 = vsub.s32 %v918, %v3041
    %v3043 = vrot.slane %v2889, %v3042
    %v3044 = vsel %vm923, %v3043, %v3039
    %v3045 = vlaneseq
    %v3046 = vshrl.u32 %v3045, 7
    %v3047 = vsub.s32 %v913, %v3046
    %v3048 = vrot.slane %v2890, %v3047
    %v3049 = vlaneseq
    %v3050 = vshrl.u32 %v3049, 7
    %v3051 = vsub.s32 %v918, %v3050
    %v3052 = vrot.slane %v2891, %v3051
    %v3053 = vsel %vm923, %v3052, %v3048
    %v3054 = vlaneseq
    %v3055 = vshrl.u32 %v3054, 7
    %v3056 = vsub.s32 %v913, %v3055
    %v3057 = vrot.slane %v2892, %v3056
    %v3058 = vlaneseq
    %v3059 = vshrl.u32 %v3058, 7
    %v3060 = vsub.s32 %v918, %v3059
    %v3061 = vrot.slane %v2893, %v3060
    %v3062 = vsel %vm923, %v3061, %v3057
    %v3063 = vlaneseq
    %v3064 = vshrl.u32 %v3063, 7
    %v3065 = vsub.s32 %v913, %v3064
    %v3066 = vrot.slane %v2894, %v3065
    %v3067 = vlaneseq
    %v3068 = vshrl.u32 %v3067, 7
    %v3069 = vsub.s32 %v918, %v3068
    %v3070 = vrot.slane %v2895, %v3069
    %v3071 = vsel %vm923, %v3070, %v3066
    %v3072 = vsel %vm1060, %v2945, %v2936
    %v3073 = vsel %vm1062, %v2954, %v3072
    %v3074 = vsel %vm1064, %v2963, %v3073
    %v3075 = vsel %vm1066, %v2972, %v3074
    %v3076 = vsel %vm1068, %v2981, %v3075
    %v3077 = vsel %vm1070, %v2990, %v3076
    %v3078 = vsel %vm1072, %v2999, %v3077
    %v3079 = vsel %vm1060, %v3017, %v3008
    %v3080 = vsel %vm1062, %v3026, %v3079
    %v3081 = vsel %vm1064, %v3035, %v3080
    %v3082 = vsel %vm1066, %v3044, %v3081
    %v3083 = vsel %vm1068, %v3053, %v3082
    %v3084 = vsel %vm1070, %v3062, %v3083
    %v3085 = vsel %vm1072, %v3071, %v3084
    %v3088 = vsel %vm1083, %v3078, 0.0
    %3089 = vadd.xlane.f32.xlu0 %v3088
    %v3090 = vpop.xlane.xlu0 %3089
    %v3091 = vsel %vm1083, %v3085, 0.0
    %3092 = vadd.xlane.f32.xlu0 %v3091
    %v3093 = vpop.xlane.xlu0 %3092
    %v3094 = vadd.f32 %v3090, 1.0
    %v3095 = vadd.f32 %v3093, 1.0
    %v3096 = vrsqrt.pop %v3090
    %v3097 = vmul.f32 %v3090, %v3096
    %vm3098 = vcmp.eq.f32.partialorder %v3090, inf
    %v3099 = vsel %vm3098, %v3090, %v3097
    %vm3100 = vcmp.eq.f32.partialorder %v3090, 0.0
    %v3101 = vand.u32 %v3090, 2147483648
    %v3102 = vsel %vm3100, %v3101, %v3099
    %v3103 = vrsqrt.pop %v3093
    %v3104 = vmul.f32 %v3093, %v3103
    %vm3105 = vcmp.eq.f32.partialorder %v3093, inf
    %v3106 = vsel %vm3105, %v3093, %v3104
    %vm3107 = vcmp.eq.f32.partialorder %v3093, 0.0
    %v3108 = vand.u32 %v3093, 2147483648
    %v3109 = vsel %vm3107, %v3108, %v3106
    %v3110 = vadd.f32 %v3102, 1e-08
    %v3111 = vadd.f32 %v3109, 1e-08
    %v3112 = vmul.f32 %v3094, %v3110
    %v3113 = vmul.f32 %v3095, %v3111
    %v3114 = vrcp.pop %v3112
    %v3115 = vmul.f32 %v3090, %v3114
    %v3116 = vrcp.pop %v3113
    %v3117 = vmul.f32 %v3093, %v3116
    %v3120 = vlaneseq
    %v3121 = vshrl.u32 %v3120, 7
    %v3122 = vsub.s32 0, %v3121
    %v3123 = vrot.slane %v3115, %v3122
    %v3124 = vlaneseq
    %v3125 = vshrl.u32 %v3124, 7
    %v3126 = vsub.s32 1, %v3125
    %v3127 = vrot.slane %v3115, %v3126
    %v3128 = vlaneseq
    %v3129 = vshrl.u32 %v3128, 7
    %v3130 = vsub.s32 2, %v3129
    %v3131 = vrot.slane %v3115, %v3130
    %v3132 = vlaneseq
    %v3133 = vshrl.u32 %v3132, 7
    %v3134 = vsub.s32 3, %v3133
    %v3135 = vrot.slane %v3115, %v3134
    %v3136 = vlaneseq
    %v3137 = vshrl.u32 %v3136, 7
    %v3138 = vsub.s32 4, %v3137
    %v3139 = vrot.slane %v3115, %v3138
    %v3140 = vlaneseq
    %v3141 = vshrl.u32 %v3140, 7
    %v3142 = vsub.s32 5, %v3141
    %v3143 = vrot.slane %v3115, %v3142
    %v3144 = vlaneseq
    %v3145 = vshrl.u32 %v3144, 7
    %v3146 = vsub.s32 6, %v3145
    %v3147 = vrot.slane %v3115, %v3146
    %v3148 = vlaneseq
    %v3149 = vshrl.u32 %v3148, 7
    %v3150 = vsub.s32 7, %v3149
    %v3151 = vrot.slane %v3115, %v3150
    %v3152 = vlaneseq
    %v3153 = vshrl.u32 %v3152, 7
    %v3154 = vsub.s32 0, %v3153
    %v3155 = vrot.slane %v3117, %v3154
    %v3156 = vlaneseq
    %v3157 = vshrl.u32 %v3156, 7
    %v3158 = vsub.s32 1, %v3157
    %v3159 = vrot.slane %v3117, %v3158
    %v3160 = vlaneseq
    %v3161 = vshrl.u32 %v3160, 7
    %v3162 = vsub.s32 2, %v3161
    %v3163 = vrot.slane %v3117, %v3162
    %v3164 = vlaneseq
    %v3165 = vshrl.u32 %v3164, 7
    %v3166 = vsub.s32 3, %v3165
    %v3167 = vrot.slane %v3117, %v3166
    %v3168 = vlaneseq
    %v3169 = vshrl.u32 %v3168, 7
    %v3170 = vsub.s32 4, %v3169
    %v3171 = vrot.slane %v3117, %v3170
    %v3172 = vlaneseq
    %v3173 = vshrl.u32 %v3172, 7
    %v3174 = vsub.s32 5, %v3173
    %v3175 = vrot.slane %v3117, %v3174
    %v3176 = vlaneseq
    %v3177 = vshrl.u32 %v3176, 7
    %v3178 = vsub.s32 6, %v3177
    %v3179 = vrot.slane %v3117, %v3178
    %v3180 = vlaneseq
    %v3181 = vshrl.u32 %v3180, 7
    %v3182 = vsub.s32 7, %v3181
    %v3183 = vrot.slane %v3117, %v3182
    %v3200 = vmul.f32 %v2801, %v3123
    %v3201 = vmul.f32 %v2803, %v3123
    %v3202 = vmul.f32 %v2805, %v3127
    %v3203 = vmul.f32 %v2807, %v3127
    %v3204 = vmul.f32 %v2809, %v3131
    %v3205 = vmul.f32 %v2811, %v3131
    %v3206 = vmul.f32 %v2813, %v3135
    %v3207 = vmul.f32 %v2815, %v3135
    %v3208 = vmul.f32 %v2817, %v3139
    %v3209 = vmul.f32 %v2819, %v3139
    %v3210 = vmul.f32 %v2821, %v3143
    %v3211 = vmul.f32 %v2823, %v3143
    %v3212 = vmul.f32 %v2825, %v3147
    %v3213 = vmul.f32 %v2827, %v3147
    %v3214 = vmul.f32 %v2829, %v3151
    %v3215 = vmul.f32 %v2831, %v3151
    %v3216 = vmul.f32 %v2833, %v3155
    %v3217 = vmul.f32 %v2835, %v3155
    %v3218 = vmul.f32 %v2837, %v3159
    %v3219 = vmul.f32 %v2839, %v3159
    %v3220 = vmul.f32 %v2841, %v3163
    %v3221 = vmul.f32 %v2843, %v3163
    %v3222 = vmul.f32 %v2845, %v3167
    %v3223 = vmul.f32 %v2847, %v3167
    %v3224 = vmul.f32 %v2849, %v3171
    %v3225 = vmul.f32 %v2851, %v3171
    %v3226 = vmul.f32 %v2853, %v3175
    %v3227 = vmul.f32 %v2855, %v3175
    %v3228 = vmul.f32 %v2857, %v3179
    %v3229 = vmul.f32 %v2859, %v3179
    %v3230 = vmul.f32 %v2861, %v3183
    %v3231 = vmul.f32 %v2863, %v3183
    %3236 = vset.pattern.permute.xlu0 0
    %3237 = vperm.xlu0 %3236, %v3200
    %v3238 = vpop.permute.xlu0 %3237
    %3239 = vset.pattern.permute.xlu0 0
    %3240 = vperm.xlu0 %3239, %v3201
    %v3241 = vpop.permute.xlu0 %3240
    %3242 = vset.pattern.permute.xlu0 0
    %3243 = vperm.xlu0 %3242, %v3216
    %v3244 = vpop.permute.xlu0 %3243
    %3245 = vset.pattern.permute.xlu0 0
    %3246 = vperm.xlu0 %3245, %v3217
    %v3247 = vpop.permute.xlu0 %3246
    %v3248 = vlaneseq
    %v3249 = vshrl.u32 %v3248, 7
    %v3250 = vsub.s32 %v913, %v3249
    %v3251 = vrot.slane %v3238, %v3250
    %v3252 = vlaneseq
    %v3253 = vshrl.u32 %v3252, 7
    %v3254 = vsub.s32 %v918, %v3253
    %v3255 = vrot.slane %v3241, %v3254
    %v3256 = vsel %vm923, %v3255, %v3251
    %v3257 = vlaneseq
    %v3258 = vshrl.u32 %v3257, 7
    %v3259 = vsub.s32 %v913, %v3258
    %v3260 = vrot.slane %v3244, %v3259
    %v3261 = vlaneseq
    %v3262 = vshrl.u32 %v3261, 7
    %v3263 = vsub.s32 %v918, %v3262
    %v3264 = vrot.slane %v3247, %v3263
    %v3265 = vsel %vm923, %v3264, %v3260
    %v3266 = vsel %vm1060, %v3265, %v3256
    %vm3268 = vcmask 123904
    %3269 = vst.msk [vmem:[%s2] sm:$0x3] %vm3268, %v3266
    %3274 = vset.pattern.permute.xlu0 0
    %3275 = vperm.xlu0 %3274, %v3202
    %v3276 = vpop.permute.xlu0 %3275
    %3277 = vset.pattern.permute.xlu0 0
    %3278 = vperm.xlu0 %3277, %v3203
    %v3279 = vpop.permute.xlu0 %3278
    %3280 = vset.pattern.permute.xlu0 0
    %3281 = vperm.xlu0 %3280, %v3218
    %v3282 = vpop.permute.xlu0 %3281
    %3283 = vset.pattern.permute.xlu0 0
    %3284 = vperm.xlu0 %3283, %v3219
    %v3285 = vpop.permute.xlu0 %3284
    %v3286 = vadd.s32 %v913, 4294967280
    %v3287 = vlaneseq
    %v3288 = vshrl.u32 %v3287, 7
    %v3289 = vsub.s32 %v3286, %v3288
    %v3290 = vrot.slane %v3276, %v3289
    %v3291 = vadd.s32 %v913, 4294967272
    %v3292 = vlaneseq
    %v3293 = vshrl.u32 %v3292, 7
    %v3294 = vsub.s32 %v3291, %v3293
    %v3295 = vrot.slane %v3279, %v3294
    %vm3296 = vcmask 261312
    %v3297 = vsel %vm3296, %v3295, %v3290
    %v3298 = vlaneseq
    %v3299 = vshrl.u32 %v3298, 7
    %v3300 = vsub.s32 %v3286, %v3299
    %v3301 = vrot.slane %v3282, %v3300
    %v3302 = vlaneseq
    %v3303 = vshrl.u32 %v3302, 7
    %v3304 = vsub.s32 %v3291, %v3303
    %v3305 = vrot.slane %v3285, %v3304
    %v3306 = vsel %vm3296, %v3305, %v3301
    %v3307 = vsel %vm1060, %v3306, %v3297
    %vm3309 = vcmask 255104
    %3310 = vst.msk [vmem:[%s2] sm:$0x3] %vm3309, %v3307
    %3315 = vset.pattern.permute.xlu0 0
    %3316 = vperm.xlu0 %3315, %v3204
    %v3317 = vpop.permute.xlu0 %3316
    %3318 = vset.pattern.permute.xlu0 0
    %3319 = vperm.xlu0 %3318, %v3205
    %v3320 = vpop.permute.xlu0 %3319
    %3321 = vset.pattern.permute.xlu0 0
    %3322 = vperm.xlu0 %3321, %v3220
    %v3323 = vpop.permute.xlu0 %3322
    %3324 = vset.pattern.permute.xlu0 0
    %3325 = vperm.xlu0 %3324, %v3221
    %v3326 = vpop.permute.xlu0 %3325
    %v3327 = vadd.s32 %v913, 4294967264
    %v3328 = vlaneseq
    %v3329 = vshrl.u32 %v3328, 7
    %v3330 = vsub.s32 %v3327, %v3329
    %v3331 = vrot.slane %v3317, %v3330
    %v3332 = vadd.s32 %v913, 4294967256
    %v3333 = vlaneseq
    %v3334 = vshrl.u32 %v3333, 7
    %v3335 = vsub.s32 %v3332, %v3334
    %v3336 = vrot.slane %v3320, %v3335
    %vm3337 = vcmask 392512
    %v3338 = vsel %vm3337, %v3336, %v3331
    %v3339 = vlaneseq
    %v3340 = vshrl.u32 %v3339, 7
    %v3341 = vsub.s32 %v3327, %v3340
    %v3342 = vrot.slane %v3323, %v3341
    %v3343 = vlaneseq
    %v3344 = vshrl.u32 %v3343, 7
    %v3345 = vsub.s32 %v3332, %v3344
    %v3346 = vrot.slane %v3326, %v3345
    %v3347 = vsel %vm3337, %v3346, %v3342
    %v3348 = vsel %vm1060, %v3347, %v3338
    %vm3350 = vcmask 386304
    %3351 = vst.msk [vmem:[%s2] sm:$0x3] %vm3350, %v3348
    %3356 = vset.pattern.permute.xlu0 0
    %3357 = vperm.xlu0 %3356, %v3206
    %v3358 = vpop.permute.xlu0 %3357
    %3359 = vset.pattern.permute.xlu0 0
    %3360 = vperm.xlu0 %3359, %v3207
    %v3361 = vpop.permute.xlu0 %3360
    %3362 = vset.pattern.permute.xlu0 0
    %3363 = vperm.xlu0 %3362, %v3222
    %v3364 = vpop.permute.xlu0 %3363
    %3365 = vset.pattern.permute.xlu0 0
    %3366 = vperm.xlu0 %3365, %v3223
    %v3367 = vpop.permute.xlu0 %3366
    %v3368 = vadd.s32 %v913, 4294967248
    %v3369 = vlaneseq
    %v3370 = vshrl.u32 %v3369, 7
    %v3371 = vsub.s32 %v3368, %v3370
    %v3372 = vrot.slane %v3358, %v3371
    %v3373 = vadd.s32 %v913, 4294967240
    %v3374 = vlaneseq
    %v3375 = vshrl.u32 %v3374, 7
    %v3376 = vsub.s32 %v3373, %v3375
    %v3377 = vrot.slane %v3361, %v3376
    %vm3378 = vcmask 523712
    %v3379 = vsel %vm3378, %v3377, %v3372
    %v3380 = vlaneseq
    %v3381 = vshrl.u32 %v3380, 7
    %v3382 = vsub.s32 %v3368, %v3381
    %v3383 = vrot.slane %v3364, %v3382
    %v3384 = vlaneseq
    %v3385 = vshrl.u32 %v3384, 7
    %v3386 = vsub.s32 %v3373, %v3385
    %v3387 = vrot.slane %v3367, %v3386
    %v3388 = vsel %vm3378, %v3387, %v3383
    %v3389 = vsel %vm1060, %v3388, %v3379
    %vm3391 = vcmask 517504
    %3392 = vst.msk [vmem:[%s2] sm:$0x3] %vm3391, %v3389
    %3397 = vset.pattern.permute.xlu0 0
    %3398 = vperm.xlu0 %3397, %v3208
    %v3399 = vpop.permute.xlu0 %3398
    %3400 = vset.pattern.permute.xlu0 0
    %3401 = vperm.xlu0 %3400, %v3209
    %v3402 = vpop.permute.xlu0 %3401
    %3403 = vset.pattern.permute.xlu0 0
    %3404 = vperm.xlu0 %3403, %v3224
    %v3405 = vpop.permute.xlu0 %3404
    %3406 = vset.pattern.permute.xlu0 0
    %3407 = vperm.xlu0 %3406, %v3225
    %v3408 = vpop.permute.xlu0 %3407
    %v3409 = vadd.s32 %v913, 4294967232
    %v3410 = vlaneseq
    %v3411 = vshrl.u32 %v3410, 7
    %v3412 = vsub.s32 %v3409, %v3411
    %v3413 = vrot.slane %v3399, %v3412
    %v3414 = vadd.s32 %v913, 4294967224
    %v3415 = vlaneseq
    %v3416 = vshrl.u32 %v3415, 7
    %v3417 = vsub.s32 %v3414, %v3416
    %v3418 = vrot.slane %v3402, %v3417
    %vm3419 = vcmask 654912
    %v3420 = vsel %vm3419, %v3418, %v3413
    %v3421 = vlaneseq
    %v3422 = vshrl.u32 %v3421, 7
    %v3423 = vsub.s32 %v3409, %v3422
    %v3424 = vrot.slane %v3405, %v3423
    %v3425 = vlaneseq
    %v3426 = vshrl.u32 %v3425, 7
    %v3427 = vsub.s32 %v3414, %v3426
    %v3428 = vrot.slane %v3408, %v3427
    %v3429 = vsel %vm3419, %v3428, %v3424
    %v3430 = vsel %vm1060, %v3429, %v3420
    %vm3432 = vcmask 648704
    %3433 = vst.msk [vmem:[%s2] sm:$0x3] %vm3432, %v3430
    %3438 = vset.pattern.permute.xlu0 0
    %3439 = vperm.xlu0 %3438, %v3210
    %v3440 = vpop.permute.xlu0 %3439
    %3441 = vset.pattern.permute.xlu0 0
    %3442 = vperm.xlu0 %3441, %v3211
    %v3443 = vpop.permute.xlu0 %3442
    %3444 = vset.pattern.permute.xlu0 0
    %3445 = vperm.xlu0 %3444, %v3226
    %v3446 = vpop.permute.xlu0 %3445
    %3447 = vset.pattern.permute.xlu0 0
    %3448 = vperm.xlu0 %3447, %v3227
    %v3449 = vpop.permute.xlu0 %3448
    %v3450 = vadd.s32 %v913, 4294967216
    %v3451 = vlaneseq
    %v3452 = vshrl.u32 %v3451, 7
    %v3453 = vsub.s32 %v3450, %v3452
    %v3454 = vrot.slane %v3440, %v3453
    %v3455 = vadd.s32 %v913, 4294967208
    %v3456 = vlaneseq
    %v3457 = vshrl.u32 %v3456, 7
    %v3458 = vsub.s32 %v3455, %v3457
    %v3459 = vrot.slane %v3443, %v3458
    %vm3460 = vcmask 786112
    %v3461 = vsel %vm3460, %v3459, %v3454
    %v3462 = vlaneseq
    %v3463 = vshrl.u32 %v3462, 7
    %v3464 = vsub.s32 %v3450, %v3463
    %v3465 = vrot.slane %v3446, %v3464
    %v3466 = vlaneseq
    %v3467 = vshrl.u32 %v3466, 7
    %v3468 = vsub.s32 %v3455, %v3467
    %v3469 = vrot.slane %v3449, %v3468
    %v3470 = vsel %vm3460, %v3469, %v3465
    %v3471 = vsel %vm1060, %v3470, %v3461
    %vm3473 = vcmask 779904
    %3474 = vst.msk [vmem:[%s2] sm:$0x3] %vm3473, %v3471
    %3479 = vset.pattern.permute.xlu0 0
    %3480 = vperm.xlu0 %3479, %v3212
    %v3481 = vpop.permute.xlu0 %3480
    %3482 = vset.pattern.permute.xlu0 0
    %3483 = vperm.xlu0 %3482, %v3213
    %v3484 = vpop.permute.xlu0 %3483
    %3485 = vset.pattern.permute.xlu0 0
    %3486 = vperm.xlu0 %3485, %v3228
    %v3487 = vpop.permute.xlu0 %3486
    %3488 = vset.pattern.permute.xlu0 0
    %3489 = vperm.xlu0 %3488, %v3229
    %v3490 = vpop.permute.xlu0 %3489
    %v3491 = vadd.s32 %v913, 4294967200
    %v3492 = vlaneseq
    %v3493 = vshrl.u32 %v3492, 7
    %v3494 = vsub.s32 %v3491, %v3493
    %v3495 = vrot.slane %v3481, %v3494
    %v3496 = vadd.s32 %v913, 4294967192
    %v3497 = vlaneseq
    %v3498 = vshrl.u32 %v3497, 7
    %v3499 = vsub.s32 %v3496, %v3498
    %v3500 = vrot.slane %v3484, %v3499
    %vm3501 = vcmask 917312
    %v3502 = vsel %vm3501, %v3500, %v3495
    %v3503 = vlaneseq
    %v3504 = vshrl.u32 %v3503, 7
    %v3505 = vsub.s32 %v3491, %v3504
    %v3506 = vrot.slane %v3487, %v3505
    %v3507 = vlaneseq
    %v3508 = vshrl.u32 %v3507, 7
    %v3509 = vsub.s32 %v3496, %v3508
    %v3510 = vrot.slane %v3490, %v3509
    %v3511 = vsel %vm3501, %v3510, %v3506
    %v3512 = vsel %vm1060, %v3511, %v3502
    %vm3514 = vcmask 911104
    %3515 = vst.msk [vmem:[%s2] sm:$0x3] %vm3514, %v3512
    %3520 = vset.pattern.permute.xlu0 0
    %3521 = vperm.xlu0 %3520, %v3214
    %v3522 = vpop.permute.xlu0 %3521
    %3523 = vset.pattern.permute.xlu0 0
    %3524 = vperm.xlu0 %3523, %v3215
    %v3525 = vpop.permute.xlu0 %3524
    %3526 = vset.pattern.permute.xlu0 0
    %3527 = vperm.xlu0 %3526, %v3230
    %v3528 = vpop.permute.xlu0 %3527
    %3529 = vset.pattern.permute.xlu0 0
    %3530 = vperm.xlu0 %3529, %v3231
    %v3531 = vpop.permute.xlu0 %3530
    %v3532 = vadd.s32 %v913, 4294967184
    %v3533 = vlaneseq
    %v3534 = vshrl.u32 %v3533, 7
    %v3535 = vsub.s32 %v3532, %v3534
    %v3536 = vrot.slane %v3522, %v3535
    %v3537 = vadd.s32 %v913, 4294967176
    %v3538 = vlaneseq
    %v3539 = vshrl.u32 %v3538, 7
    %v3540 = vsub.s32 %v3537, %v3539
    %v3541 = vrot.slane %v3525, %v3540
    %vm3542 = vcmask 1048512
    %v3543 = vsel %vm3542, %v3541, %v3536
    %v3544 = vlaneseq
    %v3545 = vshrl.u32 %v3544, 7
    %v3546 = vsub.s32 %v3532, %v3545
    %v3547 = vrot.slane %v3528, %v3546
    %v3548 = vlaneseq
    %v3549 = vshrl.u32 %v3548, 7
    %v3550 = vsub.s32 %v3537, %v3549
    %v3551 = vrot.slane %v3531, %v3550
    %v3552 = vsel %vm3542, %v3551, %v3547
    %v3553 = vsel %vm1060, %v3552, %v3543
    %vm3555 = vcmask 1042304
    %3556 = vst.msk [vmem:[%s2] sm:$0x3] %vm3555, %v3553
    // Predicated region
    $region18: #{digitcaps_forward.1} parent=1 // pred_check
      _
    $region19: #{digitcaps_forward.1} parent=1 // pred_check_branch
      %3558 = sbr.rel (0) target = $region21
    $region20: #{digitcaps_forward.1} parent=1 // pred_region
      _
    $region21: #{digitcaps_forward.1} parent=1 // pred_fallthru
      _
    // Predicated region
    $region22: #{digitcaps_forward.1} parent=1 // pred_check
      _
    $region23: #{digitcaps_forward.1} parent=1 // pred_check_branch
      %3560 = sbr.rel (0) target = $region25
    $region24: #{digitcaps_forward.1} parent=1 // pred_region
      _
    $region25: #{digitcaps_forward.1} parent=1 // pred_fallthru
      _
    %3561 = vsyncpa [#allocation4], 1
    %3562 = vsyncpa [#allocation6], 1

</llo_original>
